<compile_context>
chip_gen: v7x
topology: tpu7x:2x2x1
jax: 0.10.0
libtpu: 0.0.40
codegen_flags: <defaults>
</compile_context>

<pallas_src>
import numpy as np
import jax
import jax.numpy as jnp
from jax.experimental import pallas as pl
from jax.experimental.pallas import tpu as pltpu


# Conv configs fixed by the module: (KH, KW, IC, OC)
_CONV1 = (5, 5, 1, 4)
_CONV2 = (3, 3, 4, 8)
_CONV3 = (4, 4, 8, 10)


# ----------------------------------------------------------------------------
# Trace-time weight preprocessing (tiny one-off XLA ops)
# ----------------------------------------------------------------------------
def _banded_slab(w, in_blocks, col_stride, out_cols, *, fold_out_sum=False):
    """Per-KH-row block-banded weight slab for the row-flattened layout.

    The conv input is laid out as (rows, in_blocks * IC) where valid input
    column `k` of this conv lives at lane block `col_stride * k`
    (col_stride == 2 when the preceding 2x2 pool is kept un-compacted).
    slab[i] maps one full input row to one full output row for vertical tap
    i, folding all KW horizontal taps (and optionally the sum over output
    columns) into the weight, so the conv is just KH shifted matmuls.
    """
    oc, ic, kh, kw = w.shape
    ind = np.zeros((in_blocks, out_cols, kw), np.float32)
    for wo in range(out_cols):
        for j in range(kw):
            blk = col_stride * (wo + j)
            if blk < in_blocks:
                ind[blk, wo, j] = 1.0
    wf = w.astype(jnp.float32)
    if fold_out_sum:
        slab = jnp.einsum("bj,ocij->ibco", jnp.asarray(ind.sum(axis=1)), wf)
        return slab.reshape(kh, in_blocks * ic, oc)
    slab = jnp.einsum("bqj,ocij->ibcqo", jnp.asarray(ind), wf)
    return slab.reshape(kh, in_blocks * ic, out_cols * oc)


def _full_spec(shape):
    nd = len(shape)
    return pl.BlockSpec(shape, lambda bb, _nd=nd: (0,) * _nd)


# ----------------------------------------------------------------------------
# Forward pass (equivalent to MinimalCNN.forward in eval mode)
# ----------------------------------------------------------------------------
def minimal_cnn_forward(x_nchw, params, tb=8):
    w1, b1, w2, b2, w3, b3 = params
    bsz, c, h, wdim = x_nchw.shape
    assert c == 1, "MinimalCNN expects a single input channel"

    kh1, kw1, _, oc1 = _CONV1
    kh2, kw2, _, oc2 = _CONV2
    kh3, kw3, _, oc3 = _CONV3
    oh1, ow1 = h - kh1 + 1, wdim - kw1 + 1
    assert oh1 % 2 == 0 and ow1 % 2 == 0, "MaxPool2d would floor an odd dim"
    ph1, pw1 = oh1 // 2, ow1 // 2
    oh2, ow2 = ph1 - kh2 + 1, pw1 - kw2 + 1
    assert oh2 % 2 == 0 and ow2 % 2 == 0, "MaxPool2d would floor an odd dim"
    ph2, pw2 = oh2 // 2, ow2 // 2
    oh3, ow3 = ph2 - kh3 + 1, pw2 - kw3 + 1
    assert oh3 >= 1 and ow3 >= 1, "input too small for conv3"

    # Batch tiling: TB images stacked along the sublane axis per grid step.
    # TB capped at 16 to keep the f32 accumulators inside the 64-vreg budget.
    tb = max(1, min(tb, 16))
    bpad = pl.cdiv(bsz, tb) * tb
    x = x_nchw.reshape(bsz, h, wdim).astype(jnp.float32)
    if bpad != bsz:
        x = jnp.concatenate([x, jnp.zeros((bpad - bsz, h, wdim), x.dtype)], 0)
    xs = x.reshape(bpad * h, wdim)                 # row-flattened image stack

    hs = tb * h                                    # stacked rows per grid step
    # Row counts on the stacked, un-compacted ("skip") row grid.
    r1 = hs - (kh1 - 1)                            # conv1 rows
    r2 = (r1 - 1) - 2 * (kh2 - 1)                  # conv2 rows (row stride 2)
    r3 = (r2 - 2) - 4 * (kh3 - 1)                  # conv3 rows (row stride 4)

    # Block-banded bf16 weight slabs + f32 lane-tiled biases.
    bd1 = _banded_slab(w1, wdim, 1, ow1).astype(jnp.bfloat16)
    bd2 = _banded_slab(w2, ow1 - 1, 2, ow2).astype(jnp.bfloat16)
    bd3 = _banded_slab(w3, ow2 - 1, 2, ow3, fold_out_sum=True).astype(jnp.bfloat16)
    b1t = jnp.tile(b1.astype(jnp.float32), ow1).reshape(1, ow1 * oc1)
    b2t = jnp.tile(b2.astype(jnp.float32), ow2).reshape(1, ow2 * oc2)
    b3t = (float(oh3 * ow3) * b3.astype(jnp.float32)).reshape(1, oc3)

    # Per-image row selection + spatial row-sum as one constant 0/1 matmul.
    sel_np = np.zeros((tb, r3), np.float32)
    for bi in range(tb):
        for r in range(oh3):
            sel_np[bi, bi * h + 4 * r] = 1.0
    sel = jnp.asarray(sel_np)

    def kernel(x_ref, w1_ref, b1_ref, w2_ref, b2_ref, w3_ref, b3_ref,
               sel_ref, o_ref):
        xv = x_ref[...]                                          # (TB*H, W) f32
        # conv1: KH1 shifted full-row matmuls (kw taps folded into the slab).
        acc = jnp.zeros((r1, ow1 * oc1), jnp.float32)
        for i in range(kh1):
            acc = acc + jnp.dot(xv[i:i + r1, :].astype(jnp.bfloat16), w1_ref[i],
                                preferred_element_type=jnp.float32)
        y = jnp.maximum(acc + b1_ref[...], 0.0)
        # pool1 (2x2/2): shifted pair-max; the stride-2 selection stays folded
        # into the next conv's slab (columns) and row slicing (rows).
        y = jnp.maximum(y[:r1 - 1, :], y[1:, :])
        y = jnp.maximum(y[:, :-oc1], y[:, oc1:])
        # conv2
        acc = jnp.zeros((r2, ow2 * oc2), jnp.float32)
        for i in range(kh2):
            acc = acc + jnp.dot(y[2 * i:2 * i + r2, :].astype(jnp.bfloat16),
                                w2_ref[i], preferred_element_type=jnp.float32)
        y = jnp.maximum(acc + b2_ref[...], 0.0)
        # pool2
        y = jnp.maximum(y[:r2 - 2, :], y[2:, :])
        y = jnp.maximum(y[:, :-oc2], y[:, oc2:])
        # conv3 (output-column sum folded into the slab).
        acc = jnp.zeros((r3, oc3), jnp.float32)
        for i in range(kh3):
            acc = acc + jnp.dot(y[4 * i:4 * i + r3, :].astype(jnp.bfloat16),
                                w3_ref[i], preferred_element_type=jnp.float32)
        # TODO(synk): Dropout(0.2) is eval-mode identity (no RNG mask / 1/(1-p) scale).
        # Per-image row pick + spatial row-sum via one small matmul, then bias;
        # one dense (TB, 10) store per grid step.
        out = jnp.dot(sel_ref[...], acc, preferred_element_type=jnp.float32)
        o_ref[...] = out + b3_ref[...]

    out = pl.pallas_call(
        kernel,
        out_shape=jax.ShapeDtypeStruct((bpad, oc3), jnp.float32),
        grid=(bpad // tb,),
        in_specs=[
            pl.BlockSpec((hs, wdim), lambda bb: (bb, 0)),
            _full_spec(bd1.shape), _full_spec(b1t.shape),
            _full_spec(bd2.shape), _full_spec(b2t.shape),
            _full_spec(bd3.shape), _full_spec(b3t.shape),
            _full_spec(sel.shape),
        ],
        out_specs=pl.BlockSpec((tb, oc3), lambda bb: (bb, 0)),
        compiler_params=pltpu.CompilerParams(
            dimension_semantics=("parallel",)),
    )(xs, bd1, b1t, bd2, b2t, bd3, b3t, sel)
    return out[:bsz]                               # (B, 10)


# ----------------------------------------------------------------------------
# Deterministic parameter init (PyTorch Conv2d shapes, kaiming-uniform-like)
# ----------------------------------------------------------------------------
def init_params(key):
    keys = jax.random.split(key, 6)

    def conv_init(kw_, kb_, shape):
        fan_in = shape[1] * shape[2] * shape[3]
        bound = 1.0 / jnp.sqrt(jnp.float32(fan_in))
        w_ = jax.random.uniform(kw_, shape, jnp.float32, -bound, bound)
        b_ = jax.random.uniform(kb_, (shape[0],), jnp.float32, -bound, bound)
        return w_, b_

    w1, b1 = conv_init(keys[0], keys[1], (4, 1, 5, 5))
    w2, b2 = conv_init(keys[2], keys[3], (8, 4, 3, 3))
    w3, b3 = conv_init(keys[4], keys[5], (10, 8, 4, 4))
    return (w1, b1, w2, b2, w3, b3)


# ----------------------------------------------------------------------------
# Pure-JAX reference for a sanity check
# ----------------------------------------------------------------------------
def reference_forward(x_nchw, params):
    w1, b1, w2, b2, w3, b3 = params

    def conv(x, w, b):
        y = jax.lax.conv_general_dilated(
            x, w, (1, 1), "VALID", dimension_numbers=("NCHW", "OIHW", "NCHW"))
        return y + b[None, :, None, None]

    def pool(x):
        return jax.lax.reduce_window(
            x, -jnp.inf, jax.lax.max, (1, 1, 2, 2), (1, 1, 2, 2), "VALID")

    y = pool(jax.nn.relu(conv(x_nchw, w1, b1)))
    y = pool(jax.nn.relu(conv(y, w2, b2)))
    y = conv(y, w3, b3)
    return jnp.sum(y, axis=(2, 3)).reshape(-1, 10)


if __name__ == "__main__":
    key = jax.random.PRNGKey(0)
    k_x, k_p = jax.random.split(key)

    # Smallest spatial size that survives the conv/pool stack is 24x24; use
    # batch 16 so the TB=8 batch-tiled grid has 2 (even) parallel steps.
    x = jax.random.normal(k_x, (16, 1, 24, 24), dtype=jnp.float32)
    params = init_params(k_p)

    fwd = jax.jit(minimal_cnn_forward)
    out = jax.block_until_ready(fwd(x, params))

    ref = jax.block_until_ready(reference_forward(x, params))
    assert out.shape == (16, 10), out.shape
    assert bool(jnp.all(jnp.isfinite(out)))
    max_err = float(jnp.max(jnp.abs(out - ref)))
    # bf16 MXU operands with f32 accumulation -> slightly looser tolerance.
    assert bool(jnp.allclose(out, ref, atol=2e-2, rtol=2e-2)), ("max_err", max_err)

    print("KERNEL_OK")
</pallas_src>

<mosaic_0001>
module attributes {stable_mosaic.version = 11 : i64} {
  func.func @kernel(%arg0: i32, %arg1: memref<192x24xf32, #tpu.memory_space<vmem>>, %arg2: memref<5x24x80xbf16, #tpu.memory_space<vmem>>, %arg3: memref<1x80xf32, #tpu.memory_space<vmem>>, %arg4: memref<3x76x64xbf16, #tpu.memory_space<vmem>>, %arg5: memref<1x64xf32, #tpu.memory_space<vmem>>, %arg6: memref<4x56x10xbf16, #tpu.memory_space<vmem>>, %arg7: memref<1x10xf32, #tpu.memory_space<vmem>>, %arg8: memref<8x169xf32, #tpu.memory_space<vmem>>, %arg9: memref<8x10xf32, #tpu.memory_space<vmem>>) attributes {dimension_semantics = [#tpu.dimension_semantics<parallel>], iteration_bounds = array<i64: 2>, scalar_prefetch = 0 : i64, scratch_operands = 0 : i64, tpu.core_type = #tpu.core_type<tc>, window_params = [{transform_indices = @transform_0, window_bounds = array<i64: 192, 24>}, {pipeline_mode = #tpu.pipeline_mode<synchronous>, transform_indices = @transform_1, window_bounds = array<i64: 5, 24, 80>}, {pipeline_mode = #tpu.pipeline_mode<synchronous>, transform_indices = @transform_2, window_bounds = array<i64: 1, 80>}, {pipeline_mode = #tpu.pipeline_mode<synchronous>, transform_indices = @transform_3, window_bounds = array<i64: 3, 76, 64>}, {pipeline_mode = #tpu.pipeline_mode<synchronous>, transform_indices = @transform_4, window_bounds = array<i64: 1, 64>}, {pipeline_mode = #tpu.pipeline_mode<synchronous>, transform_indices = @transform_5, window_bounds = array<i64: 4, 56, 10>}, {pipeline_mode = #tpu.pipeline_mode<synchronous>, transform_indices = @transform_6, window_bounds = array<i64: 1, 10>}, {pipeline_mode = #tpu.pipeline_mode<synchronous>, transform_indices = @transform_7, window_bounds = array<i64: 8, 169>}, {transform_indices = @transform_8, window_bounds = array<i64: 8, 10>}]} {
    %c0 = arith.constant 0 : index
    %c0_0 = arith.constant 0 : index
    %0 = vector.load %arg1[%c0, %c0_0] : memref<192x24xf32, #tpu.memory_space<vmem>>, vector<192x24xf32>
    %cst = arith.constant 0.000000e+00 : f32
    %1 = vector.broadcast %cst : f32 to vector<188x80xf32>
    %2 = vector.extract_strided_slice %0 {offsets = [0, 0], sizes = [188, 24], strides = [1, 1]} : vector<192x24xf32> to vector<188x24xf32>
    %3 = arith.truncf %2 : vector<188x24xf32> to vector<188x24xbf16>
    %c0_1 = arith.constant 0 : index
    %c0_2 = arith.constant 0 : index
    %c0_3 = arith.constant 0 : index
    %4 = vector.load %arg2[%c0_1, %c0_2, %c0_3] : memref<5x24x80xbf16, #tpu.memory_space<vmem>>, vector<1x24x80xbf16>
    %5 = vector.shape_cast %4 : vector<1x24x80xbf16> to vector<24x80xbf16>
    %cst_4 = arith.constant dense<0.000000e+00> : vector<188x80xf32>
    %6 = tpu.matmul %3, %5, %cst_4 {dimension_numbers = #tpu.dot_dimension_numbers<[1], [0], [0], [1], [0, 0, 1, 1], [], []>} : vector<188x24xbf16>, vector<24x80xbf16>, vector<188x80xf32> -> vector<188x80xf32>
    %7 = arith.addf %1, %6 : vector<188x80xf32>
    %8 = vector.extract_strided_slice %0 {offsets = [1, 0], sizes = [188, 24], strides = [1, 1]} : vector<192x24xf32> to vector<188x24xf32>
    %9 = arith.truncf %8 : vector<188x24xf32> to vector<188x24xbf16>
    %c1 = arith.constant 1 : index
    %c0_5 = arith.constant 0 : index
    %c0_6 = arith.constant 0 : index
    %10 = vector.load %arg2[%c1, %c0_5, %c0_6] : memref<5x24x80xbf16, #tpu.memory_space<vmem>>, vector<1x24x80xbf16>
    %11 = vector.shape_cast %10 : vector<1x24x80xbf16> to vector<24x80xbf16>
    %cst_7 = arith.constant dense<0.000000e+00> : vector<188x80xf32>
    %12 = tpu.matmul %9, %11, %cst_7 {dimension_numbers = #tpu.dot_dimension_numbers<[1], [0], [0], [1], [0, 0, 1, 1], [], []>} : vector<188x24xbf16>, vector<24x80xbf16>, vector<188x80xf32> -> vector<188x80xf32>
    %13 = arith.addf %7, %12 : vector<188x80xf32>
    %14 = vector.extract_strided_slice %0 {offsets = [2, 0], sizes = [188, 24], strides = [1, 1]} : vector<192x24xf32> to vector<188x24xf32>
    %15 = arith.truncf %14 : vector<188x24xf32> to vector<188x24xbf16>
    %c2 = arith.constant 2 : index
    %c0_8 = arith.constant 0 : index
    %c0_9 = arith.constant 0 : index
    %16 = vector.load %arg2[%c2, %c0_8, %c0_9] : memref<5x24x80xbf16, #tpu.memory_space<vmem>>, vector<1x24x80xbf16>
    %17 = vector.shape_cast %16 : vector<1x24x80xbf16> to vector<24x80xbf16>
    %cst_10 = arith.constant dense<0.000000e+00> : vector<188x80xf32>
    %18 = tpu.matmul %15, %17, %cst_10 {dimension_numbers = #tpu.dot_dimension_numbers<[1], [0], [0], [1], [0, 0, 1, 1], [], []>} : vector<188x24xbf16>, vector<24x80xbf16>, vector<188x80xf32> -> vector<188x80xf32>
    %19 = arith.addf %13, %18 : vector<188x80xf32>
    %20 = vector.extract_strided_slice %0 {offsets = [3, 0], sizes = [188, 24], strides = [1, 1]} : vector<192x24xf32> to vector<188x24xf32>
    %21 = arith.truncf %20 : vector<188x24xf32> to vector<188x24xbf16>
    %c3 = arith.constant 3 : index
    %c0_11 = arith.constant 0 : index
    %c0_12 = arith.constant 0 : index
    %22 = vector.load %arg2[%c3, %c0_11, %c0_12] : memref<5x24x80xbf16, #tpu.memory_space<vmem>>, vector<1x24x80xbf16>
    %23 = vector.shape_cast %22 : vector<1x24x80xbf16> to vector<24x80xbf16>
    %cst_13 = arith.constant dense<0.000000e+00> : vector<188x80xf32>
    %24 = tpu.matmul %21, %23, %cst_13 {dimension_numbers = #tpu.dot_dimension_numbers<[1], [0], [0], [1], [0, 0, 1, 1], [], []>} : vector<188x24xbf16>, vector<24x80xbf16>, vector<188x80xf32> -> vector<188x80xf32>
    %25 = arith.addf %19, %24 : vector<188x80xf32>
    %26 = vector.extract_strided_slice %0 {offsets = [4, 0], sizes = [188, 24], strides = [1, 1]} : vector<192x24xf32> to vector<188x24xf32>
    %27 = arith.truncf %26 : vector<188x24xf32> to vector<188x24xbf16>
    %c4 = arith.constant 4 : index
    %c0_14 = arith.constant 0 : index
    %c0_15 = arith.constant 0 : index
    %28 = vector.load %arg2[%c4, %c0_14, %c0_15] : memref<5x24x80xbf16, #tpu.memory_space<vmem>>, vector<1x24x80xbf16>
    %29 = vector.shape_cast %28 : vector<1x24x80xbf16> to vector<24x80xbf16>
    %cst_16 = arith.constant dense<0.000000e+00> : vector<188x80xf32>
    %30 = tpu.matmul %27, %29, %cst_16 {dimension_numbers = #tpu.dot_dimension_numbers<[1], [0], [0], [1], [0, 0, 1, 1], [], []>} : vector<188x24xbf16>, vector<24x80xbf16>, vector<188x80xf32> -> vector<188x80xf32>
    %31 = arith.addf %25, %30 : vector<188x80xf32>
    %c0_17 = arith.constant 0 : index
    %c0_18 = arith.constant 0 : index
    %32 = vector.load %arg3[%c0_17, %c0_18] : memref<1x80xf32, #tpu.memory_space<vmem>>, vector<1x80xf32>
    %33 = vector.broadcast %32 : vector<1x80xf32> to vector<188x80xf32>
    %34 = arith.addf %31, %33 : vector<188x80xf32>
    %cst_19 = arith.constant 0.000000e+00 : f32
    %35 = vector.broadcast %cst_19 : f32 to vector<188x80xf32>
    %36 = arith.maximumf %34, %35 : vector<188x80xf32>
    %37 = vector.extract_strided_slice %36 {offsets = [0, 0], sizes = [187, 80], strides = [1, 1]} : vector<188x80xf32> to vector<187x80xf32>
    %38 = vector.extract_strided_slice %36 {offsets = [1, 0], sizes = [187, 80], strides = [1, 1]} : vector<188x80xf32> to vector<187x80xf32>
    %39 = arith.maximumf %37, %38 : vector<187x80xf32>
    %40 = vector.extract_strided_slice %39 {offsets = [0, 0], sizes = [187, 76], strides = [1, 1]} : vector<187x80xf32> to vector<187x76xf32>
    %41 = vector.extract_strided_slice %39 {offsets = [0, 4], sizes = [187, 76], strides = [1, 1]} : vector<187x80xf32> to vector<187x76xf32>
    %42 = arith.maximumf %40, %41 : vector<187x76xf32>
    %cst_20 = arith.constant 0.000000e+00 : f32
    %43 = vector.broadcast %cst_20 : f32 to vector<183x64xf32>
    %44 = vector.extract_strided_slice %42 {offsets = [0, 0], sizes = [183, 76], strides = [1, 1]} : vector<187x76xf32> to vector<183x76xf32>
    %45 = arith.truncf %44 : vector<183x76xf32> to vector<183x76xbf16>
    %c0_21 = arith.constant 0 : index
    %c0_22 = arith.constant 0 : index
    %c0_23 = arith.constant 0 : index
    %46 = vector.load %arg4[%c0_21, %c0_22, %c0_23] : memref<3x76x64xbf16, #tpu.memory_space<vmem>>, vector<1x76x64xbf16>
    %47 = vector.shape_cast %46 : vector<1x76x64xbf16> to vector<76x64xbf16>
    %cst_24 = arith.constant dense<0.000000e+00> : vector<183x64xf32>
    %48 = tpu.matmul %45, %47, %cst_24 {dimension_numbers = #tpu.dot_dimension_numbers<[1], [0], [0], [1], [0, 0, 1, 1], [], []>} : vector<183x76xbf16>, vector<76x64xbf16>, vector<183x64xf32> -> vector<183x64xf32>
    %49 = arith.addf %43, %48 : vector<183x64xf32>
    %50 = vector.extract_strided_slice %42 {offsets = [2, 0], sizes = [183, 76], strides = [1, 1]} : vector<187x76xf32> to vector<183x76xf32>
    %51 = arith.truncf %50 : vector<183x76xf32> to vector<183x76xbf16>
    %c1_25 = arith.constant 1 : index
    %c0_26 = arith.constant 0 : index
    %c0_27 = arith.constant 0 : index
    %52 = vector.load %arg4[%c1_25, %c0_26, %c0_27] : memref<3x76x64xbf16, #tpu.memory_space<vmem>>, vector<1x76x64xbf16>
    %53 = vector.shape_cast %52 : vector<1x76x64xbf16> to vector<76x64xbf16>
    %cst_28 = arith.constant dense<0.000000e+00> : vector<183x64xf32>
    %54 = tpu.matmul %51, %53, %cst_28 {dimension_numbers = #tpu.dot_dimension_numbers<[1], [0], [0], [1], [0, 0, 1, 1], [], []>} : vector<183x76xbf16>, vector<76x64xbf16>, vector<183x64xf32> -> vector<183x64xf32>
    %55 = arith.addf %49, %54 : vector<183x64xf32>
    %56 = vector.extract_strided_slice %42 {offsets = [4, 0], sizes = [183, 76], strides = [1, 1]} : vector<187x76xf32> to vector<183x76xf32>
    %57 = arith.truncf %56 : vector<183x76xf32> to vector<183x76xbf16>
    %c2_29 = arith.constant 2 : index
    %c0_30 = arith.constant 0 : index
    %c0_31 = arith.constant 0 : index
    %58 = vector.load %arg4[%c2_29, %c0_30, %c0_31] : memref<3x76x64xbf16, #tpu.memory_space<vmem>>, vector<1x76x64xbf16>
    %59 = vector.shape_cast %58 : vector<1x76x64xbf16> to vector<76x64xbf16>
    %cst_32 = arith.constant dense<0.000000e+00> : vector<183x64xf32>
    %60 = tpu.matmul %57, %59, %cst_32 {dimension_numbers = #tpu.dot_dimension_numbers<[1], [0], [0], [1], [0, 0, 1, 1], [], []>} : vector<183x76xbf16>, vector<76x64xbf16>, vector<183x64xf32> -> vector<183x64xf32>
    %61 = arith.addf %55, %60 : vector<183x64xf32>
    %c0_33 = arith.constant 0 : index
    %c0_34 = arith.constant 0 : index
    %62 = vector.load %arg5[%c0_33, %c0_34] : memref<1x64xf32, #tpu.memory_space<vmem>>, vector<1x64xf32>
    %63 = vector.broadcast %62 : vector<1x64xf32> to vector<183x64xf32>
    %64 = arith.addf %61, %63 : vector<183x64xf32>
    %cst_35 = arith.constant 0.000000e+00 : f32
    %65 = vector.broadcast %cst_35 : f32 to vector<183x64xf32>
    %66 = arith.maximumf %64, %65 : vector<183x64xf32>
    %67 = vector.extract_strided_slice %66 {offsets = [0, 0], sizes = [181, 64], strides = [1, 1]} : vector<183x64xf32> to vector<181x64xf32>
    %68 = vector.extract_strided_slice %66 {offsets = [2, 0], sizes = [181, 64], strides = [1, 1]} : vector<183x64xf32> to vector<181x64xf32>
    %69 = arith.maximumf %67, %68 : vector<181x64xf32>
    %70 = vector.extract_strided_slice %69 {offsets = [0, 0], sizes = [181, 56], strides = [1, 1]} : vector<181x64xf32> to vector<181x56xf32>
    %71 = vector.extract_strided_slice %69 {offsets = [0, 8], sizes = [181, 56], strides = [1, 1]} : vector<181x64xf32> to vector<181x56xf32>
    %72 = arith.maximumf %70, %71 : vector<181x56xf32>
    %cst_36 = arith.constant 0.000000e+00 : f32
    %73 = vector.broadcast %cst_36 : f32 to vector<169x10xf32>
    %74 = vector.extract_strided_slice %72 {offsets = [0, 0], sizes = [169, 56], strides = [1, 1]} : vector<181x56xf32> to vector<169x56xf32>
    %75 = arith.truncf %74 : vector<169x56xf32> to vector<169x56xbf16>
    %c0_37 = arith.constant 0 : index
    %c0_38 = arith.constant 0 : index
    %c0_39 = arith.constant 0 : index
    %76 = vector.load %arg6[%c0_37, %c0_38, %c0_39] : memref<4x56x10xbf16, #tpu.memory_space<vmem>>, vector<1x56x10xbf16>
    %77 = vector.shape_cast %76 : vector<1x56x10xbf16> to vector<56x10xbf16>
    %cst_40 = arith.constant dense<0.000000e+00> : vector<169x10xf32>
    %78 = tpu.matmul %75, %77, %cst_40 {dimension_numbers = #tpu.dot_dimension_numbers<[1], [0], [0], [1], [0, 0, 1, 1], [], []>} : vector<169x56xbf16>, vector<56x10xbf16>, vector<169x10xf32> -> vector<169x10xf32>
    %79 = arith.addf %73, %78 : vector<169x10xf32>
    %80 = vector.extract_strided_slice %72 {offsets = [4, 0], sizes = [169, 56], strides = [1, 1]} : vector<181x56xf32> to vector<169x56xf32>
    %81 = arith.truncf %80 : vector<169x56xf32> to vector<169x56xbf16>
    %c1_41 = arith.constant 1 : index
    %c0_42 = arith.constant 0 : index
    %c0_43 = arith.constant 0 : index
    %82 = vector.load %arg6[%c1_41, %c0_42, %c0_43] : memref<4x56x10xbf16, #tpu.memory_space<vmem>>, vector<1x56x10xbf16>
    %83 = vector.shape_cast %82 : vector<1x56x10xbf16> to vector<56x10xbf16>
    %cst_44 = arith.constant dense<0.000000e+00> : vector<169x10xf32>
    %84 = tpu.matmul %81, %83, %cst_44 {dimension_numbers = #tpu.dot_dimension_numbers<[1], [0], [0], [1], [0, 0, 1, 1], [], []>} : vector<169x56xbf16>, vector<56x10xbf16>, vector<169x10xf32> -> vector<169x10xf32>
    %85 = arith.addf %79, %84 : vector<169x10xf32>
    %86 = vector.extract_strided_slice %72 {offsets = [8, 0], sizes = [169, 56], strides = [1, 1]} : vector<181x56xf32> to vector<169x56xf32>
    %87 = arith.truncf %86 : vector<169x56xf32> to vector<169x56xbf16>
    %c2_45 = arith.constant 2 : index
    %c0_46 = arith.constant 0 : index
    %c0_47 = arith.constant 0 : index
    %88 = vector.load %arg6[%c2_45, %c0_46, %c0_47] : memref<4x56x10xbf16, #tpu.memory_space<vmem>>, vector<1x56x10xbf16>
    %89 = vector.shape_cast %88 : vector<1x56x10xbf16> to vector<56x10xbf16>
    %cst_48 = arith.constant dense<0.000000e+00> : vector<169x10xf32>
    %90 = tpu.matmul %87, %89, %cst_48 {dimension_numbers = #tpu.dot_dimension_numbers<[1], [0], [0], [1], [0, 0, 1, 1], [], []>} : vector<169x56xbf16>, vector<56x10xbf16>, vector<169x10xf32> -> vector<169x10xf32>
    %91 = arith.addf %85, %90 : vector<169x10xf32>
    %92 = vector.extract_strided_slice %72 {offsets = [12, 0], sizes = [169, 56], strides = [1, 1]} : vector<181x56xf32> to vector<169x56xf32>
    %93 = arith.truncf %92 : vector<169x56xf32> to vector<169x56xbf16>
    %c3_49 = arith.constant 3 : index
    %c0_50 = arith.constant 0 : index
    %c0_51 = arith.constant 0 : index
    %94 = vector.load %arg6[%c3_49, %c0_50, %c0_51] : memref<4x56x10xbf16, #tpu.memory_space<vmem>>, vector<1x56x10xbf16>
    %95 = vector.shape_cast %94 : vector<1x56x10xbf16> to vector<56x10xbf16>
    %cst_52 = arith.constant dense<0.000000e+00> : vector<169x10xf32>
    %96 = tpu.matmul %93, %95, %cst_52 {dimension_numbers = #tpu.dot_dimension_numbers<[1], [0], [0], [1], [0, 0, 1, 1], [], []>} : vector<169x56xbf16>, vector<56x10xbf16>, vector<169x10xf32> -> vector<169x10xf32>
    %97 = arith.addf %91, %96 : vector<169x10xf32>
    %c0_53 = arith.constant 0 : index
    %c0_54 = arith.constant 0 : index
    %98 = vector.load %arg8[%c0_53, %c0_54] : memref<8x169xf32, #tpu.memory_space<vmem>>, vector<8x169xf32>
    %cst_55 = arith.constant dense<0.000000e+00> : vector<8x10xf32>
    %99 = tpu.matmul %98, %97, %cst_55 {dimension_numbers = #tpu.dot_dimension_numbers<[1], [0], [0], [1], [0, 0, 1, 1], [], []>} : vector<8x169xf32>, vector<169x10xf32>, vector<8x10xf32> -> vector<8x10xf32>
    %c0_56 = arith.constant 0 : index
    %c0_57 = arith.constant 0 : index
    %100 = vector.load %arg7[%c0_56, %c0_57] : memref<1x10xf32, #tpu.memory_space<vmem>>, vector<1x10xf32>
    %101 = vector.broadcast %100 : vector<1x10xf32> to vector<8x10xf32>
    %102 = arith.addf %99, %101 : vector<8x10xf32>
    %c0_58 = arith.constant 0 : index
    %c0_59 = arith.constant 0 : index
    %103 = vector.load %arg9[%c0_58, %c0_59] : memref<8x10xf32, #tpu.memory_space<vmem>>, vector<8x10xf32>
    tpu.vector_store %arg9[%c0_58, %c0_59], %102 {strides = array<i32>} : memref<8x10xf32, #tpu.memory_space<vmem>>, vector<8x10xf32>,
    return
  }
  func.func @transform_0(%arg0: i32) -> (i32, i32) {
    %c0_i32 = arith.constant 0 : i32
    %c0_i32_0 = arith.constant 0 : i32
    return %arg0, %c0_i32 : i32, i32
  }
  func.func @transform_1(%arg0: i32) -> (i32, i32, i32) {
    %c0_i32 = arith.constant 0 : i32
    %c0_i32_0 = arith.constant 0 : i32
    %c0_i32_1 = arith.constant 0 : i32
    %c0_i32_2 = arith.constant 0 : i32
    return %c0_i32, %c0_i32_0, %c0_i32_1 : i32, i32, i32
  }
  func.func @transform_2(%arg0: i32) -> (i32, i32) {
    %c0_i32 = arith.constant 0 : i32
    %c0_i32_0 = arith.constant 0 : i32
    %c0_i32_1 = arith.constant 0 : i32
    return %c0_i32, %c0_i32_0 : i32, i32
  }
  func.func @transform_3(%arg0: i32) -> (i32, i32, i32) {
    %c0_i32 = arith.constant 0 : i32
    %c0_i32_0 = arith.constant 0 : i32
    %c0_i32_1 = arith.constant 0 : i32
    %c0_i32_2 = arith.constant 0 : i32
    return %c0_i32, %c0_i32_0, %c0_i32_1 : i32, i32, i32
  }
  func.func @transform_4(%arg0: i32) -> (i32, i32) {
    %c0_i32 = arith.constant 0 : i32
    %c0_i32_0 = arith.constant 0 : i32
    %c0_i32_1 = arith.constant 0 : i32
    return %c0_i32, %c0_i32_0 : i32, i32
  }
  func.func @transform_5(%arg0: i32) -> (i32, i32, i32) {
    %c0_i32 = arith.constant 0 : i32
    %c0_i32_0 = arith.constant 0 : i32
    %c0_i32_1 = arith.constant 0 : i32
    %c0_i32_2 = arith.constant 0 : i32
    return %c0_i32, %c0_i32_0, %c0_i32_1 : i32, i32, i32
  }
  func.func @transform_6(%arg0: i32) -> (i32, i32) {
    %c0_i32 = arith.constant 0 : i32
    %c0_i32_0 = arith.constant 0 : i32
    %c0_i32_1 = arith.constant 0 : i32
    return %c0_i32, %c0_i32_0 : i32, i32
  }
  func.func @transform_7(%arg0: i32) -> (i32, i32) {
    %c0_i32 = arith.constant 0 : i32
    %c0_i32_0 = arith.constant 0 : i32
    %c0_i32_1 = arith.constant 0 : i32
    return %c0_i32, %c0_i32_0 : i32, i32
  }
  func.func @transform_8(%arg0: i32) -> (i32, i32) {
    %c0_i32 = arith.constant 0 : i32
    %c0_i32_0 = arith.constant 0 : i32
    return %arg0, %c0_i32 : i32, i32
  }
}

</mosaic_0001>

<llo_original>
// kernel: tile.13
$region0: #{tile.13}
  #allocation0 [shape = 's32[1]{0}', space=sflag, size = 0x4, scoped, tag = 'scoped memory for tile.13']
  %s0 = inlined_call_operand.vmem [shape: f32[4], index: 0, kind: input, shape index: {}]
  %s1 = inlined_call_operand.vmem [shape: f32[20,4], index: 1, kind: output, shape index: {}]
  // Predicated region
  $region2: #{tile.13} parent=0 // pred_check
    _
  $region3: #{tile.13} parent=0 // pred_check_branch
    %3 = sbr.rel (0) target = $region5
  $region4: #{tile.13} parent=0 // pred_region
    _
  $region5: #{tile.13} parent=0 // pred_fallthru
    _
  %v4 = vld [vmem:[%s0] ss:$0 sm:$0xff]
  %5 = vst [vmem:[%s1] sm:$0xff] %v4
  %s6 = scalar_lea.vmem %s1, 8
  %7 = vst [vmem:[%s6] sm:$0xff] %v4
  %s8 = scalar_lea.vmem %s1, 16
  %9 = vst [vmem:[%s8] sm:$0xff] %v4

// kernel: tile.14
$region0: #{tile.14}
  %s0 = inlined_call_operand.vmem [shape: f32[20,4], index: 0, kind: input, shape index: {}]
  %s1 = inlined_call_operand.vmem [shape: f32[1,80], index: 1, kind: output, shape index: {}]
  $region1: #{tile.14} parent=0
    #allocation0 [shape = 'u8[4096]{0}', space=vmem, size = 0x1000, scoped, tag = 'scoped mem for output reshape']
    %v2 = vld [vmem:[%s0] sm:$0x1]
    %vm3 = vcmask 31744
    %4 = vst.msk [vmem:[#allocation0] sm:$0x1] %vm3, %v2
    %s5 = scalar_lea.vmem %s0, 19
    %v6 = vld [vmem:[%s5] sm:$0x1]
    %7 = vrot.lane.b32.xlu0 %v6, 76
    %v8 = vpop.permute.xlu0 %7
    %vm9 = vcmask 654944
    %10 = vst.msk [vmem:[#allocation0] sm:$0x1] %vm9, %v8
    %s11 = scalar_lea.vmem %s0, 18
    %v12 = vld [vmem:[%s11] sm:$0x1]
    %13 = vrot.lane.b32.xlu0 %v12, 72
    %v14 = vpop.permute.xlu0 %13
    %vm15 = vcmask 622144
    %16 = vst.msk [vmem:[#allocation0] sm:$0x1] %vm15, %v14
    %s17 = scalar_lea.vmem %s0, 17
    %v18 = vld [vmem:[%s17] sm:$0x1]
    %19 = vrot.lane.b32.xlu0 %v18, 68
    %v20 = vpop.permute.xlu0 %19
    %vm21 = vcmask 589344
    %22 = vst.msk [vmem:[#allocation0] sm:$0x1] %vm21, %v20
    %s23 = scalar_lea.vmem %s0, 16
    %v24 = vld [vmem:[%s23] sm:$0x1]
    %25 = vrot.lane.b32.xlu0 %v24, 64
    %v26 = vpop.permute.xlu0 %25
    %vm27 = vcmask 556544
    %28 = vst.msk [vmem:[#allocation0] sm:$0x1] %vm27, %v26
    %s29 = scalar_lea.vmem %s0, 15
    %v30 = vld [vmem:[%s29] sm:$0x1]
    %31 = vrot.lane.b32.xlu0 %v30, 60
    %v32 = vpop.permute.xlu0 %31
    %vm33 = vcmask 523744
    %34 = vst.msk [vmem:[#allocation0] sm:$0x1] %vm33, %v32
    %s35 = scalar_lea.vmem %s0, 14
    %v36 = vld [vmem:[%s35] sm:$0x1]
    %37 = vrot.lane.b32.xlu0 %v36, 56
    %v38 = vpop.permute.xlu0 %37
    %vm39 = vcmask 490944
    %40 = vst.msk [vmem:[#allocation0] sm:$0x1] %vm39, %v38
    %s41 = scalar_lea.vmem %s0, 13
    %v42 = vld [vmem:[%s41] sm:$0x1]
    %43 = vrot.lane.b32.xlu0 %v42, 52
    %v44 = vpop.permute.xlu0 %43
    %vm45 = vcmask 458144
    %46 = vst.msk [vmem:[#allocation0] sm:$0x1] %vm45, %v44
    %s47 = scalar_lea.vmem %s0, 12
    %v48 = vld [vmem:[%s47] sm:$0x1]
    %49 = vrot.lane.b32.xlu0 %v48, 48
    %v50 = vpop.permute.xlu0 %49
    %vm51 = vcmask 425344
    %52 = vst.msk [vmem:[#allocation0] sm:$0x1] %vm51, %v50
    %s53 = scalar_lea.vmem %s0, 11
    %v54 = vld [vmem:[%s53] sm:$0x1]
    %55 = vrot.lane.b32.xlu0 %v54, 44
    %v56 = vpop.permute.xlu0 %55
    %vm57 = vcmask 392544
    %58 = vst.msk [vmem:[#allocation0] sm:$0x1] %vm57, %v56
    %s59 = scalar_lea.vmem %s0, 10
    %v60 = vld [vmem:[%s59] sm:$0x1]
    %61 = vrot.lane.b32.xlu0 %v60, 40
    %v62 = vpop.permute.xlu0 %61
    %vm63 = vcmask 359744
    %64 = vst.msk [vmem:[#allocation0] sm:$0x1] %vm63, %v62
    %s65 = scalar_lea.vmem %s0, 9
    %v66 = vld [vmem:[%s65] sm:$0x1]
    %67 = vrot.lane.b32.xlu0 %v66, 36
    %v68 = vpop.permute.xlu0 %67
    %vm69 = vcmask 326944
    %70 = vst.msk [vmem:[#allocation0] sm:$0x1] %vm69, %v68
    %s71 = scalar_lea.vmem %s0, 8
    %v72 = vld [vmem:[%s71] sm:$0x1]
    %73 = vrot.lane.b32.xlu0 %v72, 32
    %v74 = vpop.permute.xlu0 %73
    %vm75 = vcmask 294144
    %76 = vst.msk [vmem:[#allocation0] sm:$0x1] %vm75, %v74
    %s77 = scalar_lea.vmem %s0, 7
    %v78 = vld [vmem:[%s77] sm:$0x1]
    %79 = vrot.lane.b32.xlu0 %v78, 28
    %v80 = vpop.permute.xlu0 %79
    %vm81 = vcmask 261344
    %82 = vst.msk [vmem:[#allocation0] sm:$0x1] %vm81, %v80
    %s83 = scalar_lea.vmem %s0, 6
    %v84 = vld [vmem:[%s83] sm:$0x1]
    %85 = vrot.lane.b32.xlu0 %v84, 24
    %v86 = vpop.permute.xlu0 %85
    %vm87 = vcmask 228544
    %88 = vst.msk [vmem:[#allocation0] sm:$0x1] %vm87, %v86
    %s89 = scalar_lea.vmem %s0, 5
    %v90 = vld [vmem:[%s89] sm:$0x1]
    %91 = vrot.lane.b32.xlu0 %v90, 20
    %v92 = vpop.permute.xlu0 %91
    %vm93 = vcmask 195744
    %94 = vst.msk [vmem:[#allocation0] sm:$0x1] %vm93, %v92
    %s95 = scalar_lea.vmem %s0, 4
    %v96 = vld [vmem:[%s95] sm:$0x1]
    %97 = vrot.lane.b32.xlu0 %v96, 16
    %v98 = vpop.permute.xlu0 %97
    %vm99 = vcmask 162944
    %100 = vst.msk [vmem:[#allocation0] sm:$0x1] %vm99, %v98
    %s101 = scalar_lea.vmem %s0, 3
    %v102 = vld [vmem:[%s101] sm:$0x1]
    %103 = vrot.lane.b32.xlu0 %v102, 12
    %v104 = vpop.permute.xlu0 %103
    %vm105 = vcmask 130144
    %106 = vst.msk [vmem:[#allocation0] sm:$0x1] %vm105, %v104
    %s107 = scalar_lea.vmem %s0, 2
    %v108 = vld [vmem:[%s107] sm:$0x1]
    %109 = vrot.lane.b32.xlu0 %v108, 8
    %v110 = vpop.permute.xlu0 %109
    %vm111 = vcmask 97344
    %112 = vst.msk [vmem:[#allocation0] sm:$0x1] %vm111, %v110
    %s113 = scalar_lea.vmem %s0, 1
    %v114 = vld [vmem:[%s113] sm:$0x1]
    %115 = vrot.lane.b32.xlu0 %v114, 4
    %v116 = vpop.permute.xlu0 %115
    %vm117 = vcmask 64544
    %118 = vst.msk [vmem:[#allocation0] sm:$0x1] %vm117, %v116
    %s120 = sshllo.u32 0, 1
    %v122 = vld [vmem:[#allocation0] sm:%s120]
    %s123 = sshllo.u32 0, 1
    %124 = vst [vmem:[%s1] sm:%s123] %v122

// kernel: tile.18
$region0: #{tile.18}
  #allocation0 [shape = 's32[1]{0}', space=sflag, size = 0x4, scoped, tag = 'scoped memory for tile.18']
  %s0 = inlined_call_operand.vmem [shape: f32[8], index: 0, kind: input, shape index: {}]
  %s1 = inlined_call_operand.vmem [shape: f32[8,8], index: 1, kind: output, shape index: {}]
  // Predicated region
  $region2: #{tile.18} parent=0 // pred_check
    _
  $region3: #{tile.18} parent=0 // pred_check_branch
    %3 = sbr.rel (0) target = $region5
  $region4: #{tile.18} parent=0 // pred_region
    _
  $region5: #{tile.18} parent=0 // pred_fallthru
    _
  %v4 = vld [vmem:[%s0] ss:$0 sm:$0xff]
  %5 = vst [vmem:[%s1] sm:$0xff] %v4

// kernel: tile.19
$region0: #{tile.19}
  %s0 = inlined_call_operand.vmem [shape: f32[8,8], index: 0, kind: input, shape index: {}]
  %s1 = inlined_call_operand.vmem [shape: f32[1,64], index: 1, kind: output, shape index: {}]
  $region1: #{tile.19} parent=0
    #allocation0 [shape = 'u8[4096]{0}', space=vmem, size = 0x1000, scoped, tag = 'scoped mem for output reshape']
    %v2 = vld [vmem:[%s0] sm:$0x1]
    %vm3 = vcmask 64512
    %4 = vst.msk [vmem:[#allocation0] sm:$0x1] %vm3, %v2
    %s5 = scalar_lea.vmem %s0, 7
    %v6 = vld [vmem:[%s5] sm:$0x1]
    %7 = vrot.lane.b32.xlu0 %v6, 56
    %v8 = vpop.permute.xlu0 %7
    %vm9 = vcmask 523712
    %10 = vst.msk [vmem:[#allocation0] sm:$0x1] %vm9, %v8
    %s11 = scalar_lea.vmem %s0, 6
    %v12 = vld [vmem:[%s11] sm:$0x1]
    %13 = vrot.lane.b32.xlu0 %v12, 48
    %v14 = vpop.permute.xlu0 %13
    %vm15 = vcmask 458112
    %16 = vst.msk [vmem:[#allocation0] sm:$0x1] %vm15, %v14
    %s17 = scalar_lea.vmem %s0, 5
    %v18 = vld [vmem:[%s17] sm:$0x1]
    %19 = vrot.lane.b32.xlu0 %v18, 40
    %v20 = vpop.permute.xlu0 %19
    %vm21 = vcmask 392512
    %22 = vst.msk [vmem:[#allocation0] sm:$0x1] %vm21, %v20
    %s23 = scalar_lea.vmem %s0, 4
    %v24 = vld [vmem:[%s23] sm:$0x1]
    %25 = vrot.lane.b32.xlu0 %v24, 32
    %v26 = vpop.permute.xlu0 %25
    %vm27 = vcmask 326912
    %28 = vst.msk [vmem:[#allocation0] sm:$0x1] %vm27, %v26
    %s29 = scalar_lea.vmem %s0, 3
    %v30 = vld [vmem:[%s29] sm:$0x1]
    %31 = vrot.lane.b32.xlu0 %v30, 24
    %v32 = vpop.permute.xlu0 %31
    %vm33 = vcmask 261312
    %34 = vst.msk [vmem:[#allocation0] sm:$0x1] %vm33, %v32
    %s35 = scalar_lea.vmem %s0, 2
    %v36 = vld [vmem:[%s35] sm:$0x1]
    %37 = vrot.lane.b32.xlu0 %v36, 16
    %v38 = vpop.permute.xlu0 %37
    %vm39 = vcmask 195712
    %40 = vst.msk [vmem:[#allocation0] sm:$0x1] %vm39, %v38
    %s41 = scalar_lea.vmem %s0, 1
    %v42 = vld [vmem:[%s41] sm:$0x1]
    %43 = vrot.lane.b32.xlu0 %v42, 8
    %v44 = vpop.permute.xlu0 %43
    %vm45 = vcmask 130112
    %46 = vst.msk [vmem:[#allocation0] sm:$0x1] %vm45, %v44
    %s48 = sshllo.u32 0, 1
    %v50 = vld [vmem:[#allocation0] sm:%s48]
    %s51 = sshllo.u32 0, 1
    %52 = vst [vmem:[%s1] sm:%s51] %v50

// kernel: minimal_cnn_forward.1
$region0: #{minimal_cnn_forward.1}
  #allocation0 [shape = 'u32[]', space=smem, size = 0x4, offset = 0x4, fixed_abs, tag = 'smem constant byte address 0x4 - core index']
  #allocation1 [shape = 'u32[144,128]{1,0:T(1,128)}', space=vmem, size = 0x12000, scoped, tag = 'internal scratch']
  %s0 = inlined_call_operand.vmem [shape: f32[384,24], index: 0, kind: input, shape index: {}]
  %s1 = inlined_call_operand.vmem [shape: bf16[5,24,80], index: 1, kind: input, shape index: {}]
  %s2 = inlined_call_operand.vmem [shape: f32[1,80], index: 2, kind: input, shape index: {}]
  %s3 = inlined_call_operand.vmem [shape: bf16[3,76,64], index: 3, kind: input, shape index: {}]
  %s4 = inlined_call_operand.vmem [shape: f32[1,64], index: 4, kind: input, shape index: {}]
  %s5 = inlined_call_operand.vmem [shape: bf16[4,56,10], index: 5, kind: input, shape index: {}]
  %s6 = inlined_call_operand.vmem [shape: f32[1,10], index: 6, kind: input, shape index: {}]
  %s7 = inlined_call_operand.vmem [shape: f32[8,169], index: 7, kind: input, shape index: {}]
  %s8 = inlined_call_operand.hbm [shape: f32[16,10], index: 8, kind: output, shape index: {}]
  %s9 = sld [smem:[#allocation0]]
  $region65: #{minimal_cnn_forward.1} parent=0
    _
  %s11 = ssub.s32 1, %s9
  %s12 = scalar_select 0, %s11, %s9
  $region1: #{minimal_cnn_forward.1} parent=0
    #allocation2 [shape = 'u8[8192]{0}', space=vmem, size = 0x2000, scoped, tag = 'output window, operand 0']
    #allocation3 [shape = 's32[2]{0}', space=sflag, size = 0x8, scoped, tag = 'scoped memory for minimal_cnn_forward.1']
    %13 = vsyncpa [#allocation3], 0
    %s14 = scalar_lea.sflag [#allocation3], 1
    %15 = vsyncpa %s14, 0
    loop: start=0, step=1, limit=4
    $region2: #{minimal_cnn_forward.1} parent=1 // loop_pre_header
      _
    $region3: #{minimal_cnn_forward.1} parent=1 // loop_header
      %s17 = sphi 0, %s21
      %p18 = scmp.ge.s32.totalorder %s17, 4
      %s27 = sphi 0, %s29
      %s30 = sphi 0, %s27
      %s31 = sphi 0, %s30
      %s47 = sphi 0, %s31
      %s51 = sphi 0, %s51
      %s53 = sphi 0, %s51
      %s54 = sphi 0, %s53
      %s68 = sphi 0, %s54
      %s72 = sphi 0, %s72
      %s74 = sphi 0, %s72
      %s75 = sphi 0, %s74
      %s89 = sphi 0, %s75
      %s93 = sphi 0, %s93
      %s95 = sphi 0, %s93
      %s96 = sphi 0, %s95
      %s110 = sphi 0, %s96
      %s114 = sphi 0, %s114
      %s116 = sphi 0, %s114
      %s117 = sphi 0, %s116
      %s131 = sphi 0, %s117
      %s135 = sphi 0, %s135
      %s137 = sphi 0, %s135
      %s138 = sphi 0, %s137
      %s152 = sphi 0, %s138
      %s156 = sphi 0, %s156
      %s158 = sphi 0, %s156
      %s159 = sphi 0, %s158
      %s173 = sphi 0, %s159
      %s177 = sphi 0, %s177
      %s179 = sphi 0, %s177
      %s180 = sphi 0, %s179
      %s194 = sphi 0, %s180
      %s200 = sphi 0, %s202
      %s203 = sphi 0, %s200
      %s204 = sphi 0, %s203
      %s220 = sphi 0, %s204
    $region4: #{minimal_cnn_forward.1} parent=1 // loop_header_branch
      %20 = sbr.rel (%p18) target = $region8
    $region5: #{minimal_cnn_forward.1} parent=1 // loop_body
      %s22 = ssub.s32 %s17, 1
      %s23 = ssub.s32 %s17, 2
      %s24 = sadd.s32 %s17, 1
      %s25 = ssub.s32 %s17, %s24
      %p26 = scmp.eq.s32.totalorder %s25, 0
      %s28 = sadd.s32 %s27, 1
      %s29 = scalar_select %p26, %s27, %s28
      %p32 = pneg %p26
      %p33 = scmp.eq.s32.totalorder %s17, 1
      %p34 = por %p32, %p33
      %p35 = scmp.ne.s32.totalorder %s27, %s30
      %p36 = scmp.eq.s32.totalorder %s17, 0
      %p37 = por %p35, %p36
      %p38 = scmp.ne.s32.totalorder %s27, %s30
      %p39 = scmp.eq.s32.totalorder %s22, 1
      %p40 = por %p38, %p39
      %p41 = scmp.ne.s32.totalorder %s30, %s31
      %p42 = scmp.eq.s32.totalorder %s22, 0
      %p43 = por %p41, %p42
      %p44 = scmp.ne.s32.totalorder %s30, %s31
      %p45 = scmp.eq.s32.totalorder %s23, 1
      %p46 = por %p44, %p45
      %p48 = scmp.ne.s32.totalorder %s31, %s47
      %p49 = scmp.eq.s32.totalorder %s23, 0
      %p50 = por %p48, %p49
      %s52 = sadd.s32 %s51, 1
      %p55 = scmp.eq.s32.totalorder %s17, 1
      %p56 = scmp.ne.s32.totalorder %s51, %s53
      %p57 = scmp.eq.s32.totalorder %s17, 0
      %p58 = por %p56, %p57
      %p59 = scmp.ne.s32.totalorder %s51, %s53
      %p60 = scmp.eq.s32.totalorder %s22, 1
      %p61 = por %p59, %p60
      %p62 = scmp.ne.s32.totalorder %s53, %s54
      %p63 = scmp.eq.s32.totalorder %s22, 0
      %p64 = por %p62, %p63
      %p65 = scmp.ne.s32.totalorder %s53, %s54
      %p66 = scmp.eq.s32.totalorder %s23, 1
      %p67 = por %p65, %p66
      %p69 = scmp.ne.s32.totalorder %s54, %s68
      %p70 = scmp.eq.s32.totalorder %s23, 0
      %p71 = por %p69, %p70
      %s73 = sadd.s32 %s72, 1
      %p76 = scmp.eq.s32.totalorder %s17, 1
      %p77 = scmp.ne.s32.totalorder %s72, %s74
      %p78 = scmp.eq.s32.totalorder %s17, 0
      %p79 = por %p77, %p78
      %p80 = scmp.ne.s32.totalorder %s72, %s74
      %p81 = scmp.eq.s32.totalorder %s22, 1
      %p82 = por %p80, %p81
      %p83 = scmp.ne.s32.totalorder %s74, %s75
      %p84 = scmp.eq.s32.totalorder %s22, 0
      %p85 = por %p83, %p84
      %p86 = scmp.ne.s32.totalorder %s74, %s75
      %p87 = scmp.eq.s32.totalorder %s23, 1
      %p88 = por %p86, %p87
      %p90 = scmp.ne.s32.totalorder %s75, %s89
      %p91 = scmp.eq.s32.totalorder %s23, 0
      %p92 = por %p90, %p91
      %s94 = sadd.s32 %s93, 1
      %p97 = scmp.eq.s32.totalorder %s17, 1
      %p98 = scmp.ne.s32.totalorder %s93, %s95
      %p99 = scmp.eq.s32.totalorder %s17, 0
      %p100 = por %p98, %p99
      %p101 = scmp.ne.s32.totalorder %s93, %s95
      %p102 = scmp.eq.s32.totalorder %s22, 1
      %p103 = por %p101, %p102
      %p104 = scmp.ne.s32.totalorder %s95, %s96
      %p105 = scmp.eq.s32.totalorder %s22, 0
      %p106 = por %p104, %p105
      %p107 = scmp.ne.s32.totalorder %s95, %s96
      %p108 = scmp.eq.s32.totalorder %s23, 1
      %p109 = por %p107, %p108
      %p111 = scmp.ne.s32.totalorder %s96, %s110
      %p112 = scmp.eq.s32.totalorder %s23, 0
      %p113 = por %p111, %p112
      %s115 = sadd.s32 %s114, 1
      %p118 = scmp.eq.s32.totalorder %s17, 1
      %p119 = scmp.ne.s32.totalorder %s114, %s116
      %p120 = scmp.eq.s32.totalorder %s17, 0
      %p121 = por %p119, %p120
      %p122 = scmp.ne.s32.totalorder %s114, %s116
      %p123 = scmp.eq.s32.totalorder %s22, 1
      %p124 = por %p122, %p123
      %p125 = scmp.ne.s32.totalorder %s116, %s117
      %p126 = scmp.eq.s32.totalorder %s22, 0
      %p127 = por %p125, %p126
      %p128 = scmp.ne.s32.totalorder %s116, %s117
      %p129 = scmp.eq.s32.totalorder %s23, 1
      %p130 = por %p128, %p129
      %p132 = scmp.ne.s32.totalorder %s117, %s131
      %p133 = scmp.eq.s32.totalorder %s23, 0
      %p134 = por %p132, %p133
      %s136 = sadd.s32 %s135, 1
      %p139 = scmp.eq.s32.totalorder %s17, 1
      %p140 = scmp.ne.s32.totalorder %s135, %s137
      %p141 = scmp.eq.s32.totalorder %s17, 0
      %p142 = por %p140, %p141
      %p143 = scmp.ne.s32.totalorder %s135, %s137
      %p144 = scmp.eq.s32.totalorder %s22, 1
      %p145 = por %p143, %p144
      %p146 = scmp.ne.s32.totalorder %s137, %s138
      %p147 = scmp.eq.s32.totalorder %s22, 0
      %p148 = por %p146, %p147
      %p149 = scmp.ne.s32.totalorder %s137, %s138
      %p150 = scmp.eq.s32.totalorder %s23, 1
      %p151 = por %p149, %p150
      %p153 = scmp.ne.s32.totalorder %s138, %s152
      %p154 = scmp.eq.s32.totalorder %s23, 0
      %p155 = por %p153, %p154
      %s157 = sadd.s32 %s156, 1
      %p160 = scmp.eq.s32.totalorder %s17, 1
      %p161 = scmp.ne.s32.totalorder %s156, %s158
      %p162 = scmp.eq.s32.totalorder %s17, 0
      %p163 = por %p161, %p162
      %p164 = scmp.ne.s32.totalorder %s156, %s158
      %p165 = scmp.eq.s32.totalorder %s22, 1
      %p166 = por %p164, %p165
      %p167 = scmp.ne.s32.totalorder %s158, %s159
      %p168 = scmp.eq.s32.totalorder %s22, 0
      %p169 = por %p167, %p168
      %p170 = scmp.ne.s32.totalorder %s158, %s159
      %p171 = scmp.eq.s32.totalorder %s23, 1
      %p172 = por %p170, %p171
      %p174 = scmp.ne.s32.totalorder %s159, %s173
      %p175 = scmp.eq.s32.totalorder %s23, 0
      %p176 = por %p174, %p175
      %s178 = sadd.s32 %s177, 1
      %p181 = scmp.eq.s32.totalorder %s17, 1
      %p182 = scmp.ne.s32.totalorder %s177, %s179
      %p183 = scmp.eq.s32.totalorder %s17, 0
      %p184 = por %p182, %p183
      %p185 = scmp.ne.s32.totalorder %s177, %s179
      %p186 = scmp.eq.s32.totalorder %s22, 1
      %p187 = por %p185, %p186
      %p188 = scmp.ne.s32.totalorder %s179, %s180
      %p189 = scmp.eq.s32.totalorder %s22, 0
      %p190 = por %p188, %p189
      %p191 = scmp.ne.s32.totalorder %s179, %s180
      %p192 = scmp.eq.s32.totalorder %s23, 1
      %p193 = por %p191, %p192
      %p195 = scmp.ne.s32.totalorder %s180, %s194
      %p196 = scmp.eq.s32.totalorder %s23, 0
      %p197 = por %p195, %p196
      %s198 = ssub.s32 %s17, %s24
      %p199 = scmp.eq.s32.totalorder %s198, 0
      %s201 = sadd.s32 %s200, 1
      %s202 = scalar_select %p199, %s200, %s201
      %p205 = pneg %p199
      %p206 = scmp.eq.s32.totalorder %s17, 1
      %p207 = por %p205, %p206
      %p208 = scmp.ne.s32.totalorder %s200, %s203
      %p209 = scmp.eq.s32.totalorder %s17, 0
      %p210 = por %p208, %p209
      %p211 = scmp.ne.s32.totalorder %s200, %s203
      %p212 = scmp.eq.s32.totalorder %s22, 1
      %p213 = por %p211, %p212
      %p214 = scmp.ne.s32.totalorder %s203, %s204
      %p215 = scmp.eq.s32.totalorder %s22, 0
      %p216 = por %p214, %p215
      %p217 = scmp.ne.s32.totalorder %s203, %s204
      %p218 = scmp.eq.s32.totalorder %s23, 1
      %p219 = por %p217, %p218
      %p221 = scmp.ne.s32.totalorder %s204, %s220
      %p222 = scmp.eq.s32.totalorder %s23, 0
      %p223 = por %p221, %p222
      %p224 = scmp.le.s32.totalorder 1, %s17
      %p225 = scmp.lt.s32.totalorder %s17, 3
      %p226 = pnand %p224, %p225
      %p227 = pneg %p226
      // Predicated region
      $region9: #{minimal_cnn_forward.1} parent=5 // pred_check
        _
      $region10: #{minimal_cnn_forward.1} parent=5 // pred_check_branch
        %229 = sbr.rel (%p226) target = $region12
      $region11: #{minimal_cnn_forward.1} parent=5 // pred_region
        %s230 = ssub.s32 %s17, 1
        // Predicated region
        $region13: #{minimal_cnn_forward.1} parent=11 // pred_check
          %p231 = pneg %p64
        $region14: #{minimal_cnn_forward.1} parent=11 // pred_check_branch
          %233 = sbr.rel (%p231) target = $region16
        $region15: #{minimal_cnn_forward.1} parent=11 // pred_region
          _
        $region16: #{minimal_cnn_forward.1} parent=11 // pred_fallthru
          _
        // Predicated region
        $region17: #{minimal_cnn_forward.1} parent=11 // pred_check
          %p234 = pneg %p85
        $region18: #{minimal_cnn_forward.1} parent=11 // pred_check_branch
          %236 = sbr.rel (%p234) target = $region20
        $region19: #{minimal_cnn_forward.1} parent=11 // pred_region
          _
        $region20: #{minimal_cnn_forward.1} parent=11 // pred_fallthru
          _
        // Predicated region
        $region21: #{minimal_cnn_forward.1} parent=11 // pred_check
          %p237 = pneg %p106
        $region22: #{minimal_cnn_forward.1} parent=11 // pred_check_branch
          %239 = sbr.rel (%p237) target = $region24
        $region23: #{minimal_cnn_forward.1} parent=11 // pred_region
          _
        $region24: #{minimal_cnn_forward.1} parent=11 // pred_fallthru
          _
        // Predicated region
        $region25: #{minimal_cnn_forward.1} parent=11 // pred_check
          %p240 = pneg %p127
        $region26: #{minimal_cnn_forward.1} parent=11 // pred_check_branch
          %242 = sbr.rel (%p240) target = $region28
        $region27: #{minimal_cnn_forward.1} parent=11 // pred_region
          _
        $region28: #{minimal_cnn_forward.1} parent=11 // pred_fallthru
          _
        // Predicated region
        $region29: #{minimal_cnn_forward.1} parent=11 // pred_check
          %p243 = pneg %p148
        $region30: #{minimal_cnn_forward.1} parent=11 // pred_check_branch
          %245 = sbr.rel (%p243) target = $region32
        $region31: #{minimal_cnn_forward.1} parent=11 // pred_region
          _
        $region32: #{minimal_cnn_forward.1} parent=11 // pred_fallthru
          _
        // Predicated region
        $region33: #{minimal_cnn_forward.1} parent=11 // pred_check
          %p246 = pneg %p169
        $region34: #{minimal_cnn_forward.1} parent=11 // pred_check_branch
          %248 = sbr.rel (%p246) target = $region36
        $region35: #{minimal_cnn_forward.1} parent=11 // pred_region
          _
        $region36: #{minimal_cnn_forward.1} parent=11 // pred_fallthru
          _
        // Predicated region
        $region37: #{minimal_cnn_forward.1} parent=11 // pred_check
          %p249 = pneg %p190
        $region38: #{minimal_cnn_forward.1} parent=11 // pred_check_branch
          %251 = sbr.rel (%p249) target = $region40
        $region39: #{minimal_cnn_forward.1} parent=11 // pred_region
          _
        $region40: #{minimal_cnn_forward.1} parent=11 // pred_fallthru
          _
      $region12: #{minimal_cnn_forward.1} parent=5 // pred_fallthru
        _
      %p252 = scmp.lt.s32.totalorder %s17, 2
      // Predicated region
      $region41: #{minimal_cnn_forward.1} parent=5 // pred_check
        %p253 = pneg %p252
      $region42: #{minimal_cnn_forward.1} parent=5 // pred_check_branch
        %255 = sbr.rel (%p253) target = $region44
      $region43: #{minimal_cnn_forward.1} parent=5 // pred_region
        // Predicated region
        $region45: #{minimal_cnn_forward.1} parent=43 // pred_check
          %p256 = pneg %p37
        $region46: #{minimal_cnn_forward.1} parent=43 // pred_check_branch
          %258 = sbr.rel (%p256) target = $region48
        $region47: #{minimal_cnn_forward.1} parent=43 // pred_region
          %s259 = smul.u32 24, %s17
          %p260 = scmp.lt.s32.totalorder %s259, 47
          %s261 = scalar_select %p260, %s259, 47
          %s262 = smul.addr %s261, 8
          %s263 = scalar_lea.vmem %s0, %s262
          %s264 = smul.u32 24, %s17
        $region48: #{minimal_cnn_forward.1} parent=43 // pred_fallthru
          _
      $region44: #{minimal_cnn_forward.1} parent=5 // pred_fallthru
        _
      %p265 = scmp.le.s32.totalorder 1, %s17
      %p266 = scmp.lt.s32.totalorder %s17, 3
      %p267 = pnand %p265, %p266
      %p268 = pneg %p267
      // Predicated region
      $region49: #{minimal_cnn_forward.1} parent=5 // pred_check
        _
      $region50: #{minimal_cnn_forward.1} parent=5 // pred_check_branch
        %270 = sbr.rel (%p267) target = $region52
      $region51: #{minimal_cnn_forward.1} parent=5 // pred_region
        %s271 = ssub.s32 %s17, 1
        %s272 = smul.u32 24, %s22
        %p273 = scmp.lt.s32.totalorder %s272, 47
        %s274 = scalar_select %p273, %s272, 47
        %s275 = smul.addr %s274, 8
        %s276 = scalar_lea.vmem %s0, %s275
        %p277 = pneg %p43
        %p278 = pneg %p40
        %p279 = pneg %p64
        %p280 = pneg %p61
        %p281 = pneg %p85
        %p282 = pneg %p82
        %p283 = pneg %p106
        %p284 = pneg %p103
        %p285 = pneg %p127
        %p286 = pneg %p124
        %p287 = pneg %p148
        %p288 = pneg %p145
        %p289 = pneg %p169
        %p290 = pneg %p166
        %p291 = pneg %p190
        %p292 = pneg %p187
        %p293 = pneg %p216
        %p294 = pneg %p213
        %s295 = sand.u32 %s203, 1
        %s296 = scalar_lea.sflag [#allocation3], %s295
        %s297 = sand.u32 %s203, 1
        %s298 = smul.addr %s297, 8
        %s299 = scalar_lea.vmem [#allocation2], %s298
        %s300 = smul.u32 24, %s22
        %p301 = scmp.lt.s32.totalorder %s300, 47
        %s302 = scalar_select %p301, %s300, 47
        %s303 = smul.addr %s302, 8
        %s304 = scalar_lea.vmem %s0, %s303
        %s305 = smul.u32 24, %s22
        %v307 = vld [vmem:[%s304] sm:$0xff]
        %v308 = vld [vmem:[%s304 + $0x8] sm:$0xff]
        %v309 = vld [vmem:[%s304 + $0x10] sm:$0xff]
        %v310 = vld [vmem:[%s304 + $0x18] sm:$0xff]
        %v311 = vld [vmem:[%s304 + $0x20] sm:$0xff]
        %v312 = vld [vmem:[%s304 + $0x28] sm:$0xff]
        %v313 = vld [vmem:[%s304 + $0x30] sm:$0xff]
        %v314 = vld [vmem:[%s304 + $0x38] sm:$0xff]
        %v315 = vld [vmem:[%s304 + $0x40] sm:$0xff]
        %v316 = vld [vmem:[%s304 + $0x48] sm:$0xff]
        %v317 = vld [vmem:[%s304 + $0x50] sm:$0xff]
        %v318 = vld [vmem:[%s304 + $0x58] sm:$0xff]
        %v319 = vld [vmem:[%s304 + $0x60] sm:$0xff]
        %v320 = vld [vmem:[%s304 + $0x68] sm:$0xff]
        %v321 = vld [vmem:[%s304 + $0x70] sm:$0xff]
        %v322 = vld [vmem:[%s304 + $0x78] sm:$0xff]
        %v323 = vld [vmem:[%s304 + $0x80] sm:$0xff]
        %v324 = vld [vmem:[%s304 + $0x88] sm:$0xff]
        %v325 = vld [vmem:[%s304 + $0x90] sm:$0xff]
        %v326 = vld [vmem:[%s304 + $0x98] sm:$0xff]
        %v327 = vld [vmem:[%s304 + $0xa0] sm:$0xff]
        %v328 = vld [vmem:[%s304 + $0xa8] sm:$0xff]
        %v329 = vld [vmem:[%s304 + $0xb0] sm:$0xff]
        %v330 = vld [vmem:[%s304 + $0xb8] sm:$0xff]
        %v331 = vpack.c.bf16 %v308, %v307
        %v332 = vpack.c.bf16 %v310, %v309
        %v333 = vpack.c.bf16 %v312, %v311
        %v334 = vpack.c.bf16 %v314, %v313
        %v335 = vpack.c.bf16 %v316, %v315
        %v336 = vpack.c.bf16 %v318, %v317
        %v337 = vpack.c.bf16 %v320, %v319
        %v338 = vpack.c.bf16 %v322, %v321
        %v339 = vpack.c.bf16 %v324, %v323
        %v340 = vpack.c.bf16 %v326, %v325
        %v341 = vpack.c.bf16 %v328, %v327
        %v342 = vpack.c.bf16 %v330, %v329
        %v343 = vld [vmem:[%s1] sm:$0xf]
        %v344 = vld [vmem:[%s1 + $0x4] sm:$0xf]
        %v345 = vld [vmem:[%s1 + $0x8] sm:$0xf]
        %s346 = scalar_lea.vmem %s1, 12
        %v347 = vld [vmem:[%s346] sm:$0xf]
        %v348 = vld [vmem:[%s346 + $0x4] sm:$0xf]
        %v349 = vld [vmem:[%s346 + $0x8] sm:$0xf]
        %vm350 = vsmask.f32 7424
        %v352 = vshrl.u32 %v331, 16
        %v354 = vshll.u32 %v331, 16
        %v356 = vrot.slane %v354, 1
        %v357 = vor.u32 %v352, %v356
        %v359 = vshll.u32 %v332, 16
        %v361 = vrot.slane %v359, 1
        %v362 = vsel %vm350, %v357, %v361
        %v363 = vshrl.u32 %v332, 16
        %v365 = vor.u32 %v363, %v361
        %v367 = vshll.u32 %v333, 16
        %v369 = vrot.slane %v367, 1
        %v370 = vsel %vm350, %v365, %v369
        %v371 = vshrl.u32 %v333, 16
        %v373 = vor.u32 %v371, %v369
        %v375 = vshll.u32 %v334, 16
        %v377 = vrot.slane %v375, 1
        %v378 = vsel %vm350, %v373, %v377
        %v379 = vshrl.u32 %v334, 16
        %v381 = vor.u32 %v379, %v377
        %v383 = vshll.u32 %v335, 16
        %v385 = vrot.slane %v383, 1
        %v386 = vsel %vm350, %v381, %v385
        %v387 = vshrl.u32 %v335, 16
        %v389 = vor.u32 %v387, %v385
        %v391 = vshll.u32 %v336, 16
        %v393 = vrot.slane %v391, 1
        %v394 = vsel %vm350, %v389, %v393
        %v395 = vshrl.u32 %v336, 16
        %v397 = vor.u32 %v395, %v393
        %v399 = vshll.u32 %v337, 16
        %v401 = vrot.slane %v399, 1
        %v402 = vsel %vm350, %v397, %v401
        %v403 = vshrl.u32 %v337, 16
        %v405 = vor.u32 %v403, %v401
        %v407 = vshll.u32 %v338, 16
        %v409 = vrot.slane %v407, 1
        %v410 = vsel %vm350, %v405, %v409
        %v411 = vshrl.u32 %v338, 16
        %v413 = vor.u32 %v411, %v409
        %v415 = vshll.u32 %v339, 16
        %v417 = vrot.slane %v415, 1
        %v418 = vsel %vm350, %v413, %v417
        %v419 = vshrl.u32 %v339, 16
        %v421 = vor.u32 %v419, %v417
        %v423 = vshll.u32 %v340, 16
        %v425 = vrot.slane %v423, 1
        %v426 = vsel %vm350, %v421, %v425
        %v427 = vshrl.u32 %v340, 16
        %v429 = vor.u32 %v427, %v425
        %v431 = vshll.u32 %v341, 16
        %v433 = vrot.slane %v431, 1
        %v434 = vsel %vm350, %v429, %v433
        %v435 = vshrl.u32 %v341, 16
        %v437 = vor.u32 %v435, %v433
        %v439 = vshll.u32 %v342, 16
        %v441 = vrot.slane %v439, 1
        %v442 = vsel %vm350, %v437, %v441
        %v443 = vshrl.u32 %v342, 16
        %v445 = vor.u32 %v443, %v441
        %v449 = vunpack.c.l.b16 %v347
        %v450 = vunpack.c.l.b16 %v348
        %v451 = vunpack.c.l.b16 %v349
        %v452 = vpack.c.b16 %v450, %v449
        %v453 = vpack.c.b16 %v451, %v451
        %vm455 = vcmask 195584
        %v457 = vsel %vm455, %v362, 0
        %v460 = vsel %vm455, %v370, 0
        %v463 = vsel %vm455, %v378, 0
        %v466 = vsel %vm455, %v386, 0
        %v469 = vsel %vm455, %v394, 0
        %v472 = vsel %vm455, %v402, 0
        %v475 = vsel %vm455, %v410, 0
        %v478 = vsel %vm455, %v418, 0
        %v481 = vsel %vm455, %v426, 0
        %v484 = vsel %vm455, %v434, 0
        %v487 = vsel %vm455, %v442, 0
        %v490 = vsel %vm455, %v445, 0
        %vm492 = vcmask 1043456
        %v494 = vsel %vm492, %v453, 0
        %496 = vmatprep.subr.bf16.mxu0 0
        %497 = vmatpush1.bf16.msra.mxu0 %v452
        %498 = vmatprep.subr.bf16.mxu0 0
        %499 = vmatpush1.bf16.msra.mxu0 %v494
        %500 = vmatprep.subr.bf16.mxu0 0
        %501 = vmatpush1.bf16.msra.mxu0 0
        %502 = vmatprep.subr.bf16.mxu0 0
        %503 = vmatpush1.bf16.msra.mxu0 0
        %504 = vmatprep.subr.bf16.mxu0 0
        %505 = vmatpush1.bf16.msra.mxu0 0
        %506 = vmatprep.subr.bf16.mxu0 0
        %507 = vmatpush1.bf16.msra.mxu0 0
        %508 = vmatprep.subr.bf16.mxu0 0
        %509 = vmatpush1.bf16.msra.mxu0 0
        %510 = vmatprep.subr.bf16.mxu0 0
        %511 = vmatpush1.bf16.msra.mxu0 0
        %512 = vmatprep.subr.bf16.mxu0 0
        %513 = vmatpush1.bf16.msra.mxu0 0
        %514 = vmatprep.subr.bf16.mxu0 0
        %515 = vmatpush1.bf16.msra.mxu0 0
        %516 = vmatprep.subr.bf16.mxu0 0
        %517 = vmatpush1.bf16.msra.mxu0 0
        %518 = vmatprep.subr.bf16.mxu0 0
        %519 = vmatpush1.bf16.msra.mxu0 0
        %520 = vmatprep.subr.bf16.mxu0 0
        %521 = vmatpush1.bf16.msra.mxu0 0
        %522 = vmatprep.subr.bf16.mxu0 0
        %523 = vmatpush1.bf16.msra.mxu0 0
        %524 = vmatprep.subr.bf16.mxu0 0
        %525 = vmatpush1.bf16.msra.mxu0 0
        %526 = vmatprep.subr.bf16.mxu0 0
        %527 = vmatpush1.bf16.msra.mxu0 0
        %528 = vmatprep.mubr.bf16.mxu0 0
        %529 = vmatmul.mubr.bf16.gmra.mrb[0].mxu0 %v457
        %v530 = vpop.f32.mrb[0].mxu0
        %v531 = vadd.f32 0.0, %v530
        %v532 = vpop.f32.mrb[0].mxu0
        %v533 = vpop.f32.mrb[0].mxu0
        %v534 = vadd.f32 0.0, %v533
        %v535 = vpop.f32.mrb[0].mxu0
        %536 = vmatprep.mubr.bf16.mxu0 0
        %537 = vmatmul.mubr.bf16.gmra.mrb[0].mxu0 %v460
        %v538 = vpop.f32.mrb[0].mxu0
        %v539 = vadd.f32 0.0, %v538
        %v540 = vpop.f32.mrb[0].mxu0
        %v541 = vpop.f32.mrb[0].mxu0
        %v542 = vadd.f32 0.0, %v541
        %v543 = vpop.f32.mrb[0].mxu0
        %544 = vmatprep.mubr.bf16.mxu0 0
        %545 = vmatmul.mubr.bf16.gmra.mrb[0].mxu0 %v463
        %v546 = vpop.f32.mrb[0].mxu0
        %v547 = vadd.f32 0.0, %v546
        %v548 = vpop.f32.mrb[0].mxu0
        %v549 = vpop.f32.mrb[0].mxu0
        %v550 = vadd.f32 0.0, %v549
        %v551 = vpop.f32.mrb[0].mxu0
        %552 = vmatprep.mubr.bf16.mxu0 0
        %553 = vmatmul.mubr.bf16.gmra.mrb[0].mxu0 %v466
        %v554 = vpop.f32.mrb[0].mxu0
        %v555 = vadd.f32 0.0, %v554
        %v556 = vpop.f32.mrb[0].mxu0
        %v557 = vpop.f32.mrb[0].mxu0
        %v558 = vadd.f32 0.0, %v557
        %v559 = vpop.f32.mrb[0].mxu0
        %560 = vmatprep.mubr.bf16.mxu0 0
        %561 = vmatmul.mubr.bf16.gmra.mrb[0].mxu0 %v469
        %v562 = vpop.f32.mrb[0].mxu0
        %v563 = vadd.f32 0.0, %v562
        %v564 = vpop.f32.mrb[0].mxu0
        %v565 = vpop.f32.mrb[0].mxu0
        %v566 = vadd.f32 0.0, %v565
        %v567 = vpop.f32.mrb[0].mxu0
        %568 = vmatprep.mubr.bf16.mxu0 0
        %569 = vmatmul.mubr.bf16.gmra.mrb[0].mxu0 %v472
        %v570 = vpop.f32.mrb[0].mxu0
        %v571 = vadd.f32 0.0, %v570
        %v572 = vpop.f32.mrb[0].mxu0
        %v573 = vpop.f32.mrb[0].mxu0
        %v574 = vadd.f32 0.0, %v573
        %v575 = vpop.f32.mrb[0].mxu0
        %576 = vmatprep.mubr.bf16.mxu0 0
        %577 = vmatmul.mubr.bf16.gmra.mrb[0].mxu0 %v475
        %v578 = vpop.f32.mrb[0].mxu0
        %v579 = vadd.f32 0.0, %v578
        %v580 = vpop.f32.mrb[0].mxu0
        %v581 = vpop.f32.mrb[0].mxu0
        %v582 = vadd.f32 0.0, %v581
        %v583 = vpop.f32.mrb[0].mxu0
        %584 = vmatprep.mubr.bf16.mxu0 0
        %585 = vmatmul.mubr.bf16.gmra.mrb[0].mxu0 %v478
        %v586 = vpop.f32.mrb[0].mxu0
        %v587 = vadd.f32 0.0, %v586
        %v588 = vpop.f32.mrb[0].mxu0
        %v589 = vpop.f32.mrb[0].mxu0
        %v590 = vadd.f32 0.0, %v589
        %v591 = vpop.f32.mrb[0].mxu0
        %592 = vmatprep.mubr.bf16.mxu0 0
        %593 = vmatmul.mubr.bf16.gmra.mrb[0].mxu0 %v481
        %v594 = vpop.f32.mrb[0].mxu0
        %v595 = vadd.f32 0.0, %v594
        %v596 = vpop.f32.mrb[0].mxu0
        %v597 = vpop.f32.mrb[0].mxu0
        %v598 = vadd.f32 0.0, %v597
        %v599 = vpop.f32.mrb[0].mxu0
        %600 = vmatprep.mubr.bf16.mxu0 0
        %601 = vmatmul.mubr.bf16.gmra.mrb[0].mxu0 %v484
        %v602 = vpop.f32.mrb[0].mxu0
        %v603 = vadd.f32 0.0, %v602
        %v604 = vpop.f32.mrb[0].mxu0
        %v605 = vpop.f32.mrb[0].mxu0
        %v606 = vadd.f32 0.0, %v605
        %v607 = vpop.f32.mrb[0].mxu0
        %608 = vmatprep.mubr.bf16.mxu0 0
        %609 = vmatmul.mubr.bf16.gmra.mrb[0].mxu0 %v487
        %v610 = vpop.f32.mrb[0].mxu0
        %v611 = vadd.f32 0.0, %v610
        %v612 = vpop.f32.mrb[0].mxu0
        %v613 = vpop.f32.mrb[0].mxu0
        %v614 = vadd.f32 0.0, %v613
        %v615 = vpop.f32.mrb[0].mxu0
        %616 = vmatprep.mubr.bf16.mxu0 0
        %617 = vmatmul.mubr.bf16.gmra.mrb[0].mxu0 %v490
        %v618 = vpop.f32.mrb[0].mxu0
        %v619 = vadd.f32 0.0, %v618
        %v620 = vpop.f32.mrb[0].mxu0
        %v621 = vpop.f32.mrb[0].mxu0
        %v622 = vadd.f32 0.0, %v621
        %v623 = vpop.f32.mrb[0].mxu0
        %624 = vdwg.mxu0
        %v628 = vunpack.c.l.b16 %v343
        %v629 = vunpack.c.l.b16 %v344
        %v630 = vunpack.c.l.b16 %v345
        %v631 = vpack.c.b16 %v629, %v628
        %v632 = vpack.c.b16 %v630, %v630
        %v634 = vsel %vm455, %v331, 0
        %v636 = vsel %vm455, %v332, 0
        %v638 = vsel %vm455, %v333, 0
        %v640 = vsel %vm455, %v334, 0
        %v642 = vsel %vm455, %v335, 0
        %v644 = vsel %vm455, %v336, 0
        %v646 = vsel %vm455, %v337, 0
        %v648 = vsel %vm455, %v338, 0
        %v650 = vsel %vm455, %v339, 0
        %v652 = vsel %vm455, %v340, 0
        %v654 = vsel %vm455, %v341, 0
        %v656 = vsel %vm455, %v342, 0
        %v659 = vsel %vm492, %v632, 0
        %661 = vmatprep.subr.bf16.mxu0 0
        %662 = vmatpush1.bf16.msra.mxu0 %v631
        %663 = vmatprep.subr.bf16.mxu0 0
        %664 = vmatpush1.bf16.msra.mxu0 %v659
        %665 = vmatprep.subr.bf16.mxu0 0
        %666 = vmatpush1.bf16.msra.mxu0 0
        %667 = vmatprep.subr.bf16.mxu0 0
        %668 = vmatpush1.bf16.msra.mxu0 0
        %669 = vmatprep.subr.bf16.mxu0 0
        %670 = vmatpush1.bf16.msra.mxu0 0
        %671 = vmatprep.subr.bf16.mxu0 0
        %672 = vmatpush1.bf16.msra.mxu0 0
        %673 = vmatprep.subr.bf16.mxu0 0
        %674 = vmatpush1.bf16.msra.mxu0 0
        %675 = vmatprep.subr.bf16.mxu0 0
        %676 = vmatpush1.bf16.msra.mxu0 0
        %677 = vmatprep.subr.bf16.mxu0 0
        %678 = vmatpush1.bf16.msra.mxu0 0
        %679 = vmatprep.subr.bf16.mxu0 0
        %680 = vmatpush1.bf16.msra.mxu0 0
        %681 = vmatprep.subr.bf16.mxu0 0
        %682 = vmatpush1.bf16.msra.mxu0 0
        %683 = vmatprep.subr.bf16.mxu0 0
        %684 = vmatpush1.bf16.msra.mxu0 0
        %685 = vmatprep.subr.bf16.mxu0 0
        %686 = vmatpush1.bf16.msra.mxu0 0
        %687 = vmatprep.subr.bf16.mxu0 0
        %688 = vmatpush1.bf16.msra.mxu0 0
        %689 = vmatprep.subr.bf16.mxu0 0
        %690 = vmatpush1.bf16.msra.mxu0 0
        %691 = vmatprep.subr.bf16.mxu0 0
        %692 = vmatpush1.bf16.msra.mxu0 0
        %693 = vmatprep.mubr.bf16.mxu0 0
        %694 = vmatmul.mubr.bf16.gmra.mrb[0].mxu0 %v634
        %v695 = vpop.f32.mrb[0].mxu0
        %v696 = vadd.f32 %v531, %v695
        %v697 = vpop.f32.mrb[0].mxu0
        %v698 = vpop.f32.mrb[0].mxu0
        %v699 = vadd.f32 %v534, %v698
        %v700 = vpop.f32.mrb[0].mxu0
        %701 = vmatprep.mubr.bf16.mxu0 0
        %702 = vmatmul.mubr.bf16.gmra.mrb[0].mxu0 %v636
        %v703 = vpop.f32.mrb[0].mxu0
        %v704 = vadd.f32 %v539, %v703
        %v705 = vpop.f32.mrb[0].mxu0
        %v706 = vpop.f32.mrb[0].mxu0
        %v707 = vadd.f32 %v542, %v706
        %v708 = vpop.f32.mrb[0].mxu0
        %709 = vmatprep.mubr.bf16.mxu0 0
        %710 = vmatmul.mubr.bf16.gmra.mrb[0].mxu0 %v638
        %v711 = vpop.f32.mrb[0].mxu0
        %v712 = vadd.f32 %v547, %v711
        %v713 = vpop.f32.mrb[0].mxu0
        %v714 = vpop.f32.mrb[0].mxu0
        %v715 = vadd.f32 %v550, %v714
        %v716 = vpop.f32.mrb[0].mxu0
        %717 = vmatprep.mubr.bf16.mxu0 0
        %718 = vmatmul.mubr.bf16.gmra.mrb[0].mxu0 %v640
        %v719 = vpop.f32.mrb[0].mxu0
        %v720 = vadd.f32 %v555, %v719
        %v721 = vpop.f32.mrb[0].mxu0
        %v722 = vpop.f32.mrb[0].mxu0
        %v723 = vadd.f32 %v558, %v722
        %v724 = vpop.f32.mrb[0].mxu0
        %725 = vmatprep.mubr.bf16.mxu0 0
        %726 = vmatmul.mubr.bf16.gmra.mrb[0].mxu0 %v642
        %v727 = vpop.f32.mrb[0].mxu0
        %v728 = vadd.f32 %v563, %v727
        %v729 = vpop.f32.mrb[0].mxu0
        %v730 = vpop.f32.mrb[0].mxu0
        %v731 = vadd.f32 %v566, %v730
        %v732 = vpop.f32.mrb[0].mxu0
        %733 = vmatprep.mubr.bf16.mxu0 0
        %734 = vmatmul.mubr.bf16.gmra.mrb[0].mxu0 %v644
        %v735 = vpop.f32.mrb[0].mxu0
        %v736 = vadd.f32 %v571, %v735
        %v737 = vpop.f32.mrb[0].mxu0
        %v738 = vpop.f32.mrb[0].mxu0
        %v739 = vadd.f32 %v574, %v738
        %v740 = vpop.f32.mrb[0].mxu0
        %741 = vmatprep.mubr.bf16.mxu0 0
        %742 = vmatmul.mubr.bf16.gmra.mrb[0].mxu0 %v646
        %v743 = vpop.f32.mrb[0].mxu0
        %v744 = vadd.f32 %v579, %v743
        %v745 = vpop.f32.mrb[0].mxu0
        %v746 = vpop.f32.mrb[0].mxu0
        %v747 = vadd.f32 %v582, %v746
        %v748 = vpop.f32.mrb[0].mxu0
        %749 = vmatprep.mubr.bf16.mxu0 0
        %750 = vmatmul.mubr.bf16.gmra.mrb[0].mxu0 %v648
        %v751 = vpop.f32.mrb[0].mxu0
        %v752 = vadd.f32 %v587, %v751
        %v753 = vpop.f32.mrb[0].mxu0
        %v754 = vpop.f32.mrb[0].mxu0
        %v755 = vadd.f32 %v590, %v754
        %v756 = vpop.f32.mrb[0].mxu0
        %757 = vmatprep.mubr.bf16.mxu0 0
        %758 = vmatmul.mubr.bf16.gmra.mrb[0].mxu0 %v650
        %v759 = vpop.f32.mrb[0].mxu0
        %v760 = vadd.f32 %v595, %v759
        %v761 = vpop.f32.mrb[0].mxu0
        %v762 = vpop.f32.mrb[0].mxu0
        %v763 = vadd.f32 %v598, %v762
        %v764 = vpop.f32.mrb[0].mxu0
        %765 = vmatprep.mubr.bf16.mxu0 0
        %766 = vmatmul.mubr.bf16.gmra.mrb[0].mxu0 %v652
        %v767 = vpop.f32.mrb[0].mxu0
        %v768 = vadd.f32 %v603, %v767
        %v769 = vpop.f32.mrb[0].mxu0
        %v770 = vpop.f32.mrb[0].mxu0
        %v771 = vadd.f32 %v606, %v770
        %v772 = vpop.f32.mrb[0].mxu0
        %773 = vmatprep.mubr.bf16.mxu0 0
        %774 = vmatmul.mubr.bf16.gmra.mrb[0].mxu0 %v654
        %v775 = vpop.f32.mrb[0].mxu0
        %v776 = vadd.f32 %v611, %v775
        %v777 = vpop.f32.mrb[0].mxu0
        %v778 = vpop.f32.mrb[0].mxu0
        %v779 = vadd.f32 %v614, %v778
        %v780 = vpop.f32.mrb[0].mxu0
        %781 = vmatprep.mubr.bf16.mxu0 0
        %782 = vmatmul.mubr.bf16.gmra.mrb[0].mxu0 %v656
        %v783 = vpop.f32.mrb[0].mxu0
        %v784 = vadd.f32 %v619, %v783
        %v785 = vpop.f32.mrb[0].mxu0
        %v786 = vpop.f32.mrb[0].mxu0
        %v787 = vadd.f32 %v622, %v786
        %v788 = vpop.f32.mrb[0].mxu0
        %789 = vdwg.mxu0
        %s790 = scalar_lea.vmem %s1, 24
        %v791 = vld [vmem:[%s790] sm:$0xf]
        %v792 = vld [vmem:[%s790 + $0x4] sm:$0xf]
        %v793 = vld [vmem:[%s790 + $0x8] sm:$0xf]
        %vm806 = vcmask 1046528
        %v807 = vrot.slane %v331, 1
        %v808 = vrot.slane %v332, 1
        %v809 = vsel %vm806, %v807, %v808
        %v810 = vrot.slane %v333, 1
        %v811 = vsel %vm806, %v808, %v810
        %v812 = vrot.slane %v334, 1
        %v813 = vsel %vm806, %v810, %v812
        %v814 = vrot.slane %v335, 1
        %v815 = vsel %vm806, %v812, %v814
        %v816 = vrot.slane %v336, 1
        %v817 = vsel %vm806, %v814, %v816
        %v818 = vrot.slane %v337, 1
        %v819 = vsel %vm806, %v816, %v818
        %v820 = vrot.slane %v338, 1
        %v821 = vsel %vm806, %v818, %v820
        %v822 = vrot.slane %v339, 1
        %v823 = vsel %vm806, %v820, %v822
        %v824 = vrot.slane %v340, 1
        %v825 = vsel %vm806, %v822, %v824
        %v826 = vrot.slane %v341, 1
        %v827 = vsel %vm806, %v824, %v826
        %v828 = vrot.slane %v342, 1
        %v829 = vsel %vm806, %v826, %v828
        %v833 = vunpack.c.l.b16 %v791
        %v834 = vunpack.c.l.b16 %v792
        %v835 = vunpack.c.l.b16 %v793
        %v836 = vpack.c.b16 %v834, %v833
        %v837 = vpack.c.b16 %v835, %v835
        %v840 = vsel %vm455, %v809, 0
        %v843 = vsel %vm455, %v811, 0
        %v846 = vsel %vm455, %v813, 0
        %v849 = vsel %vm455, %v815, 0
        %v852 = vsel %vm455, %v817, 0
        %v855 = vsel %vm455, %v819, 0
        %v858 = vsel %vm455, %v821, 0
        %v861 = vsel %vm455, %v823, 0
        %v864 = vsel %vm455, %v825, 0
        %v867 = vsel %vm455, %v827, 0
        %v870 = vsel %vm455, %v829, 0
        %v873 = vsel %vm455, %v828, 0
        %v876 = vsel %vm492, %v837, 0
        %878 = vmatprep.subr.bf16.mxu0 0
        %879 = vmatpush1.bf16.msra.mxu0 %v836
        %880 = vmatprep.subr.bf16.mxu0 0
        %881 = vmatpush1.bf16.msra.mxu0 %v876
        %882 = vmatprep.subr.bf16.mxu0 0
        %883 = vmatpush1.bf16.msra.mxu0 0
        %884 = vmatprep.subr.bf16.mxu0 0
        %885 = vmatpush1.bf16.msra.mxu0 0
        %886 = vmatprep.subr.bf16.mxu0 0
        %887 = vmatpush1.bf16.msra.mxu0 0
        %888 = vmatprep.subr.bf16.mxu0 0
        %889 = vmatpush1.bf16.msra.mxu0 0
        %890 = vmatprep.subr.bf16.mxu0 0
        %891 = vmatpush1.bf16.msra.mxu0 0
        %892 = vmatprep.subr.bf16.mxu0 0
        %893 = vmatpush1.bf16.msra.mxu0 0
        %894 = vmatprep.subr.bf16.mxu0 0
        %895 = vmatpush1.bf16.msra.mxu0 0
        %896 = vmatprep.subr.bf16.mxu0 0
        %897 = vmatpush1.bf16.msra.mxu0 0
        %898 = vmatprep.subr.bf16.mxu0 0
        %899 = vmatpush1.bf16.msra.mxu0 0
        %900 = vmatprep.subr.bf16.mxu0 0
        %901 = vmatpush1.bf16.msra.mxu0 0
        %902 = vmatprep.subr.bf16.mxu0 0
        %903 = vmatpush1.bf16.msra.mxu0 0
        %904 = vmatprep.subr.bf16.mxu0 0
        %905 = vmatpush1.bf16.msra.mxu0 0
        %906 = vmatprep.subr.bf16.mxu0 0
        %907 = vmatpush1.bf16.msra.mxu0 0
        %908 = vmatprep.subr.bf16.mxu0 0
        %909 = vmatpush1.bf16.msra.mxu0 0
        %910 = vmatprep.mubr.bf16.mxu0 0
        %911 = vmatmul.mubr.bf16.gmra.mrb[0].mxu0 %v840
        %v912 = vpop.f32.mrb[0].mxu0
        %v913 = vadd.f32 0.0, %v912
        %v914 = vpop.f32.mrb[0].mxu0
        %v915 = vpop.f32.mrb[0].mxu0
        %v916 = vadd.f32 0.0, %v915
        %v917 = vpop.f32.mrb[0].mxu0
        %918 = vmatprep.mubr.bf16.mxu0 0
        %919 = vmatmul.mubr.bf16.gmra.mrb[0].mxu0 %v843
        %v920 = vpop.f32.mrb[0].mxu0
        %v921 = vadd.f32 0.0, %v920
        %v922 = vpop.f32.mrb[0].mxu0
        %v923 = vpop.f32.mrb[0].mxu0
        %v924 = vadd.f32 0.0, %v923
        %v925 = vpop.f32.mrb[0].mxu0
        %926 = vmatprep.mubr.bf16.mxu0 0
        %927 = vmatmul.mubr.bf16.gmra.mrb[0].mxu0 %v846
        %v928 = vpop.f32.mrb[0].mxu0
        %v929 = vadd.f32 0.0, %v928
        %v930 = vpop.f32.mrb[0].mxu0
        %v931 = vpop.f32.mrb[0].mxu0
        %v932 = vadd.f32 0.0, %v931
        %v933 = vpop.f32.mrb[0].mxu0
        %934 = vmatprep.mubr.bf16.mxu0 0
        %935 = vmatmul.mubr.bf16.gmra.mrb[0].mxu0 %v849
        %v936 = vpop.f32.mrb[0].mxu0
        %v937 = vadd.f32 0.0, %v936
        %v938 = vpop.f32.mrb[0].mxu0
        %v939 = vpop.f32.mrb[0].mxu0
        %v940 = vadd.f32 0.0, %v939
        %v941 = vpop.f32.mrb[0].mxu0
        %942 = vmatprep.mubr.bf16.mxu0 0
        %943 = vmatmul.mubr.bf16.gmra.mrb[0].mxu0 %v852
        %v944 = vpop.f32.mrb[0].mxu0
        %v945 = vadd.f32 0.0, %v944
        %v946 = vpop.f32.mrb[0].mxu0
        %v947 = vpop.f32.mrb[0].mxu0
        %v948 = vadd.f32 0.0, %v947
        %v949 = vpop.f32.mrb[0].mxu0
        %950 = vmatprep.mubr.bf16.mxu0 0
        %951 = vmatmul.mubr.bf16.gmra.mrb[0].mxu0 %v855
        %v952 = vpop.f32.mrb[0].mxu0
        %v953 = vadd.f32 0.0, %v952
        %v954 = vpop.f32.mrb[0].mxu0
        %v955 = vpop.f32.mrb[0].mxu0
        %v956 = vadd.f32 0.0, %v955
        %v957 = vpop.f32.mrb[0].mxu0
        %958 = vmatprep.mubr.bf16.mxu0 0
        %959 = vmatmul.mubr.bf16.gmra.mrb[0].mxu0 %v858
        %v960 = vpop.f32.mrb[0].mxu0
        %v961 = vadd.f32 0.0, %v960
        %v962 = vpop.f32.mrb[0].mxu0
        %v963 = vpop.f32.mrb[0].mxu0
        %v964 = vadd.f32 0.0, %v963
        %v965 = vpop.f32.mrb[0].mxu0
        %966 = vmatprep.mubr.bf16.mxu0 0
        %967 = vmatmul.mubr.bf16.gmra.mrb[0].mxu0 %v861
        %v968 = vpop.f32.mrb[0].mxu0
        %v969 = vadd.f32 0.0, %v968
        %v970 = vpop.f32.mrb[0].mxu0
        %v971 = vpop.f32.mrb[0].mxu0
        %v972 = vadd.f32 0.0, %v971
        %v973 = vpop.f32.mrb[0].mxu0
        %974 = vmatprep.mubr.bf16.mxu0 0
        %975 = vmatmul.mubr.bf16.gmra.mrb[0].mxu0 %v864
        %v976 = vpop.f32.mrb[0].mxu0
        %v977 = vadd.f32 0.0, %v976
        %v978 = vpop.f32.mrb[0].mxu0
        %v979 = vpop.f32.mrb[0].mxu0
        %v980 = vadd.f32 0.0, %v979
        %v981 = vpop.f32.mrb[0].mxu0
        %982 = vmatprep.mubr.bf16.mxu0 0
        %983 = vmatmul.mubr.bf16.gmra.mrb[0].mxu0 %v867
        %v984 = vpop.f32.mrb[0].mxu0
        %v985 = vadd.f32 0.0, %v984
        %v986 = vpop.f32.mrb[0].mxu0
        %v987 = vpop.f32.mrb[0].mxu0
        %v988 = vadd.f32 0.0, %v987
        %v989 = vpop.f32.mrb[0].mxu0
        %990 = vmatprep.mubr.bf16.mxu0 0
        %991 = vmatmul.mubr.bf16.gmra.mrb[0].mxu0 %v870
        %v992 = vpop.f32.mrb[0].mxu0
        %v993 = vadd.f32 0.0, %v992
        %v994 = vpop.f32.mrb[0].mxu0
        %v995 = vpop.f32.mrb[0].mxu0
        %v996 = vadd.f32 0.0, %v995
        %v997 = vpop.f32.mrb[0].mxu0
        %998 = vmatprep.mubr.bf16.mxu0 0
        %999 = vmatmul.mubr.bf16.gmra.mrb[0].mxu0 %v873
        %v1000 = vpop.f32.mrb[0].mxu0
        %v1001 = vadd.f32 0.0, %v1000
        %v1002 = vpop.f32.mrb[0].mxu0
        %v1003 = vpop.f32.mrb[0].mxu0
        %v1004 = vadd.f32 0.0, %v1003
        %v1005 = vpop.f32.mrb[0].mxu0
        %1006 = vdwg.mxu0
        %v1007 = vadd.f32 %v696, %v913
        %v1008 = vadd.f32 %v699, %v916
        %v1009 = vadd.f32 %v704, %v921
        %v1010 = vadd.f32 %v707, %v924
        %v1011 = vadd.f32 %v712, %v929
        %v1012 = vadd.f32 %v715, %v932
        %v1013 = vadd.f32 %v720, %v937
        %v1014 = vadd.f32 %v723, %v940
        %v1015 = vadd.f32 %v728, %v945
        %v1016 = vadd.f32 %v731, %v948
        %v1017 = vadd.f32 %v736, %v953
        %v1018 = vadd.f32 %v739, %v956
        %v1019 = vadd.f32 %v744, %v961
        %v1020 = vadd.f32 %v747, %v964
        %v1021 = vadd.f32 %v752, %v969
        %v1022 = vadd.f32 %v755, %v972
        %v1023 = vadd.f32 %v760, %v977
        %v1024 = vadd.f32 %v763, %v980
        %v1025 = vadd.f32 %v768, %v985
        %v1026 = vadd.f32 %v771, %v988
        %v1027 = vadd.f32 %v776, %v993
        %v1028 = vadd.f32 %v779, %v996
        %v1029 = vadd.f32 %v784, %v1001
        %v1030 = vadd.f32 %v787, %v1004
        %s1031 = scalar_lea.vmem %s1, 36
        %v1032 = vld [vmem:[%s1031] sm:$0xf]
        %v1033 = vld [vmem:[%s1031 + $0x4] sm:$0xf]
        %v1034 = vld [vmem:[%s1031 + $0x8] sm:$0xf]
        %vm1035 = vsmask.f32 6400
        %v1036 = vrot.slane %v352, 1
        %v1037 = vrot.slane %v354, 2
        %v1038 = vor.u32 %v1036, %v1037
        %v1039 = vrot.slane %v363, 1
        %v1040 = vrot.slane %v359, 2
        %v1041 = vor.u32 %v1039, %v1040
        %v1042 = vsel %vm1035, %v1038, %v1041
        %v1043 = vrot.slane %v371, 1
        %v1044 = vrot.slane %v367, 2
        %v1045 = vor.u32 %v1043, %v1044
        %v1046 = vsel %vm1035, %v1041, %v1045
        %v1047 = vrot.slane %v379, 1
        %v1048 = vrot.slane %v375, 2
        %v1049 = vor.u32 %v1047, %v1048
        %v1050 = vsel %vm1035, %v1045, %v1049
        %v1051 = vrot.slane %v387, 1
        %v1052 = vrot.slane %v383, 2
        %v1053 = vor.u32 %v1051, %v1052
        %v1054 = vsel %vm1035, %v1049, %v1053
        %v1055 = vrot.slane %v395, 1
        %v1056 = vrot.slane %v391, 2
        %v1057 = vor.u32 %v1055, %v1056
        %v1058 = vsel %vm1035, %v1053, %v1057
        %v1059 = vrot.slane %v403, 1
        %v1060 = vrot.slane %v399, 2
        %v1061 = vor.u32 %v1059, %v1060
        %v1062 = vsel %vm1035, %v1057, %v1061
        %v1063 = vrot.slane %v411, 1
        %v1064 = vrot.slane %v407, 2
        %v1065 = vor.u32 %v1063, %v1064
        %v1066 = vsel %vm1035, %v1061, %v1065
        %v1067 = vrot.slane %v419, 1
        %v1068 = vrot.slane %v415, 2
        %v1069 = vor.u32 %v1067, %v1068
        %v1070 = vsel %vm1035, %v1065, %v1069
        %v1071 = vrot.slane %v427, 1
        %v1072 = vrot.slane %v423, 2
        %v1073 = vor.u32 %v1071, %v1072
        %v1074 = vsel %vm1035, %v1069, %v1073
        %v1075 = vrot.slane %v435, 1
        %v1076 = vrot.slane %v431, 2
        %v1077 = vor.u32 %v1075, %v1076
        %v1078 = vsel %vm1035, %v1073, %v1077
        %v1079 = vrot.slane %v443, 1
        %v1080 = vrot.slane %v439, 2
        %v1081 = vor.u32 %v1079, %v1080
        %v1082 = vsel %vm1035, %v1077, %v1081
        %v1086 = vunpack.c.l.b16 %v1032
        %v1087 = vunpack.c.l.b16 %v1033
        %v1088 = vunpack.c.l.b16 %v1034
        %v1089 = vpack.c.b16 %v1087, %v1086
        %v1090 = vpack.c.b16 %v1088, %v1088
        %v1093 = vsel %vm455, %v1042, 0
        %v1096 = vsel %vm455, %v1046, 0
        %v1099 = vsel %vm455, %v1050, 0
        %v1102 = vsel %vm455, %v1054, 0
        %v1105 = vsel %vm455, %v1058, 0
        %v1108 = vsel %vm455, %v1062, 0
        %v1111 = vsel %vm455, %v1066, 0
        %v1114 = vsel %vm455, %v1070, 0
        %v1117 = vsel %vm455, %v1074, 0
        %v1120 = vsel %vm455, %v1078, 0
        %v1123 = vsel %vm455, %v1082, 0
        %v1126 = vsel %vm455, %v1081, 0
        %v1129 = vsel %vm492, %v1090, 0
        %1131 = vmatprep.subr.bf16.mxu0 0
        %1132 = vmatpush1.bf16.msra.mxu0 %v1089
        %1133 = vmatprep.subr.bf16.mxu0 0
        %1134 = vmatpush1.bf16.msra.mxu0 %v1129
        %1135 = vmatprep.subr.bf16.mxu0 0
        %1136 = vmatpush1.bf16.msra.mxu0 0
        %1137 = vmatprep.subr.bf16.mxu0 0
        %1138 = vmatpush1.bf16.msra.mxu0 0
        %1139 = vmatprep.subr.bf16.mxu0 0
        %1140 = vmatpush1.bf16.msra.mxu0 0
        %1141 = vmatprep.subr.bf16.mxu0 0
        %1142 = vmatpush1.bf16.msra.mxu0 0
        %1143 = vmatprep.subr.bf16.mxu0 0
        %1144 = vmatpush1.bf16.msra.mxu0 0
        %1145 = vmatprep.subr.bf16.mxu0 0
        %1146 = vmatpush1.bf16.msra.mxu0 0
        %1147 = vmatprep.subr.bf16.mxu0 0
        %1148 = vmatpush1.bf16.msra.mxu0 0
        %1149 = vmatprep.subr.bf16.mxu0 0
        %1150 = vmatpush1.bf16.msra.mxu0 0
        %1151 = vmatprep.subr.bf16.mxu0 0
        %1152 = vmatpush1.bf16.msra.mxu0 0
        %1153 = vmatprep.subr.bf16.mxu0 0
        %1154 = vmatpush1.bf16.msra.mxu0 0
        %1155 = vmatprep.subr.bf16.mxu0 0
        %1156 = vmatpush1.bf16.msra.mxu0 0
        %1157 = vmatprep.subr.bf16.mxu0 0
        %1158 = vmatpush1.bf16.msra.mxu0 0
        %1159 = vmatprep.subr.bf16.mxu0 0
        %1160 = vmatpush1.bf16.msra.mxu0 0
        %1161 = vmatprep.subr.bf16.mxu0 0
        %1162 = vmatpush1.bf16.msra.mxu0 0
        %1163 = vmatprep.mubr.bf16.mxu0 0
        %1164 = vmatmul.mubr.bf16.gmra.mrb[0].mxu0 %v1093
        %v1165 = vpop.f32.mrb[0].mxu0
        %v1166 = vadd.f32 0.0, %v1165
        %v1167 = vpop.f32.mrb[0].mxu0
        %v1168 = vpop.f32.mrb[0].mxu0
        %v1169 = vadd.f32 0.0, %v1168
        %v1170 = vpop.f32.mrb[0].mxu0
        %1171 = vmatprep.mubr.bf16.mxu0 0
        %1172 = vmatmul.mubr.bf16.gmra.mrb[0].mxu0 %v1096
        %v1173 = vpop.f32.mrb[0].mxu0
        %v1174 = vadd.f32 0.0, %v1173
        %v1175 = vpop.f32.mrb[0].mxu0
        %v1176 = vpop.f32.mrb[0].mxu0
        %v1177 = vadd.f32 0.0, %v1176
        %v1178 = vpop.f32.mrb[0].mxu0
        %1179 = vmatprep.mubr.bf16.mxu0 0
        %1180 = vmatmul.mubr.bf16.gmra.mrb[0].mxu0 %v1099
        %v1181 = vpop.f32.mrb[0].mxu0
        %v1182 = vadd.f32 0.0, %v1181
        %v1183 = vpop.f32.mrb[0].mxu0
        %v1184 = vpop.f32.mrb[0].mxu0
        %v1185 = vadd.f32 0.0, %v1184
        %v1186 = vpop.f32.mrb[0].mxu0
        %1187 = vmatprep.mubr.bf16.mxu0 0
        %1188 = vmatmul.mubr.bf16.gmra.mrb[0].mxu0 %v1102
        %v1189 = vpop.f32.mrb[0].mxu0
        %v1190 = vadd.f32 0.0, %v1189
        %v1191 = vpop.f32.mrb[0].mxu0
        %v1192 = vpop.f32.mrb[0].mxu0
        %v1193 = vadd.f32 0.0, %v1192
        %v1194 = vpop.f32.mrb[0].mxu0
        %1195 = vmatprep.mubr.bf16.mxu0 0
        %1196 = vmatmul.mubr.bf16.gmra.mrb[0].mxu0 %v1105
        %v1197 = vpop.f32.mrb[0].mxu0
        %v1198 = vadd.f32 0.0, %v1197
        %v1199 = vpop.f32.mrb[0].mxu0
        %v1200 = vpop.f32.mrb[0].mxu0
        %v1201 = vadd.f32 0.0, %v1200
        %v1202 = vpop.f32.mrb[0].mxu0
        %1203 = vmatprep.mubr.bf16.mxu0 0
        %1204 = vmatmul.mubr.bf16.gmra.mrb[0].mxu0 %v1108
        %v1205 = vpop.f32.mrb[0].mxu0
        %v1206 = vadd.f32 0.0, %v1205
        %v1207 = vpop.f32.mrb[0].mxu0
        %v1208 = vpop.f32.mrb[0].mxu0
        %v1209 = vadd.f32 0.0, %v1208
        %v1210 = vpop.f32.mrb[0].mxu0
        %1211 = vmatprep.mubr.bf16.mxu0 0
        %1212 = vmatmul.mubr.bf16.gmra.mrb[0].mxu0 %v1111
        %v1213 = vpop.f32.mrb[0].mxu0
        %v1214 = vadd.f32 0.0, %v1213
        %v1215 = vpop.f32.mrb[0].mxu0
        %v1216 = vpop.f32.mrb[0].mxu0
        %v1217 = vadd.f32 0.0, %v1216
        %v1218 = vpop.f32.mrb[0].mxu0
        %1219 = vmatprep.mubr.bf16.mxu0 0
        %1220 = vmatmul.mubr.bf16.gmra.mrb[0].mxu0 %v1114
        %v1221 = vpop.f32.mrb[0].mxu0
        %v1222 = vadd.f32 0.0, %v1221
        %v1223 = vpop.f32.mrb[0].mxu0
        %v1224 = vpop.f32.mrb[0].mxu0
        %v1225 = vadd.f32 0.0, %v1224
        %v1226 = vpop.f32.mrb[0].mxu0
        %1227 = vmatprep.mubr.bf16.mxu0 0
        %1228 = vmatmul.mubr.bf16.gmra.mrb[0].mxu0 %v1117
        %v1229 = vpop.f32.mrb[0].mxu0
        %v1230 = vadd.f32 0.0, %v1229
        %v1231 = vpop.f32.mrb[0].mxu0
        %v1232 = vpop.f32.mrb[0].mxu0
        %v1233 = vadd.f32 0.0, %v1232
        %v1234 = vpop.f32.mrb[0].mxu0
        %1235 = vmatprep.mubr.bf16.mxu0 0
        %1236 = vmatmul.mubr.bf16.gmra.mrb[0].mxu0 %v1120
        %v1237 = vpop.f32.mrb[0].mxu0
        %v1238 = vadd.f32 0.0, %v1237
        %v1239 = vpop.f32.mrb[0].mxu0
        %v1240 = vpop.f32.mrb[0].mxu0
        %v1241 = vadd.f32 0.0, %v1240
        %v1242 = vpop.f32.mrb[0].mxu0
        %1243 = vmatprep.mubr.bf16.mxu0 0
        %1244 = vmatmul.mubr.bf16.gmra.mrb[0].mxu0 %v1123
        %v1245 = vpop.f32.mrb[0].mxu0
        %v1246 = vadd.f32 0.0, %v1245
        %v1247 = vpop.f32.mrb[0].mxu0
        %v1248 = vpop.f32.mrb[0].mxu0
        %v1249 = vadd.f32 0.0, %v1248
        %v1250 = vpop.f32.mrb[0].mxu0
        %1251 = vmatprep.mubr.bf16.mxu0 0
        %1252 = vmatmul.mubr.bf16.gmra.mrb[0].mxu0 %v1126
        %v1253 = vpop.f32.mrb[0].mxu0
        %v1254 = vadd.f32 0.0, %v1253
        %v1255 = vpop.f32.mrb[0].mxu0
        %v1256 = vpop.f32.mrb[0].mxu0
        %v1257 = vadd.f32 0.0, %v1256
        %v1258 = vpop.f32.mrb[0].mxu0
        %1259 = vdwg.mxu0
        %v1260 = vadd.f32 %v1007, %v1166
        %v1261 = vadd.f32 %v1008, %v1169
        %v1262 = vadd.f32 %v1009, %v1174
        %v1263 = vadd.f32 %v1010, %v1177
        %v1264 = vadd.f32 %v1011, %v1182
        %v1265 = vadd.f32 %v1012, %v1185
        %v1266 = vadd.f32 %v1013, %v1190
        %v1267 = vadd.f32 %v1014, %v1193
        %v1268 = vadd.f32 %v1015, %v1198
        %v1269 = vadd.f32 %v1016, %v1201
        %v1270 = vadd.f32 %v1017, %v1206
        %v1271 = vadd.f32 %v1018, %v1209
        %v1272 = vadd.f32 %v1019, %v1214
        %v1273 = vadd.f32 %v1020, %v1217
        %v1274 = vadd.f32 %v1021, %v1222
        %v1275 = vadd.f32 %v1022, %v1225
        %v1276 = vadd.f32 %v1023, %v1230
        %v1277 = vadd.f32 %v1024, %v1233
        %v1278 = vadd.f32 %v1025, %v1238
        %v1279 = vadd.f32 %v1026, %v1241
        %v1280 = vadd.f32 %v1027, %v1246
        %v1281 = vadd.f32 %v1028, %v1249
        %v1282 = vadd.f32 %v1029, %v1254
        %v1283 = vadd.f32 %v1030, %v1257
        %s1284 = scalar_lea.vmem %s1, 48
        %v1285 = vld [vmem:[%s1284] sm:$0xf]
        %v1286 = vld [vmem:[%s1284 + $0x4] sm:$0xf]
        %v1287 = vld [vmem:[%s1284 + $0x8] sm:$0xf]
        %vm1288 = vcmask 1045504
        %v1289 = vrot.slane %v331, 2
        %v1290 = vrot.slane %v332, 2
        %v1291 = vsel %vm1288, %v1289, %v1290
        %v1292 = vrot.slane %v333, 2
        %v1293 = vsel %vm1288, %v1290, %v1292
        %v1294 = vrot.slane %v334, 2
        %v1295 = vsel %vm1288, %v1292, %v1294
        %v1296 = vrot.slane %v335, 2
        %v1297 = vsel %vm1288, %v1294, %v1296
        %v1298 = vrot.slane %v336, 2
        %v1299 = vsel %vm1288, %v1296, %v1298
        %v1300 = vrot.slane %v337, 2
        %v1301 = vsel %vm1288, %v1298, %v1300
        %v1302 = vrot.slane %v338, 2
        %v1303 = vsel %vm1288, %v1300, %v1302
        %v1304 = vrot.slane %v339, 2
        %v1305 = vsel %vm1288, %v1302, %v1304
        %v1306 = vrot.slane %v340, 2
        %v1307 = vsel %vm1288, %v1304, %v1306
        %v1308 = vrot.slane %v341, 2
        %v1309 = vsel %vm1288, %v1306, %v1308
        %v1310 = vrot.slane %v342, 2
        %v1311 = vsel %vm1288, %v1308, %v1310
        %v1315 = vunpack.c.l.b16 %v1285
        %v1316 = vunpack.c.l.b16 %v1286
        %v1317 = vunpack.c.l.b16 %v1287
        %v1318 = vpack.c.b16 %v1316, %v1315
        %v1319 = vpack.c.b16 %v1317, %v1317
        %v1322 = vsel %vm455, %v1291, 0
        %v1325 = vsel %vm455, %v1293, 0
        %v1328 = vsel %vm455, %v1295, 0
        %v1331 = vsel %vm455, %v1297, 0
        %v1334 = vsel %vm455, %v1299, 0
        %v1337 = vsel %vm455, %v1301, 0
        %v1340 = vsel %vm455, %v1303, 0
        %v1343 = vsel %vm455, %v1305, 0
        %v1346 = vsel %vm455, %v1307, 0
        %v1349 = vsel %vm455, %v1309, 0
        %v1352 = vsel %vm455, %v1311, 0
        %v1355 = vsel %vm455, %v1310, 0
        %v1358 = vsel %vm492, %v1319, 0
        %1360 = vmatprep.subr.bf16.mxu0 0
        %1361 = vmatpush1.bf16.msra.mxu0 %v1318
        %1362 = vmatprep.subr.bf16.mxu0 0
        %1363 = vmatpush1.bf16.msra.mxu0 %v1358
        %1364 = vmatprep.subr.bf16.mxu0 0
        %1365 = vmatpush1.bf16.msra.mxu0 0
        %1366 = vmatprep.subr.bf16.mxu0 0
        %1367 = vmatpush1.bf16.msra.mxu0 0
        %1368 = vmatprep.subr.bf16.mxu0 0
        %1369 = vmatpush1.bf16.msra.mxu0 0
        %1370 = vmatprep.subr.bf16.mxu0 0
        %1371 = vmatpush1.bf16.msra.mxu0 0
        %1372 = vmatprep.subr.bf16.mxu0 0
        %1373 = vmatpush1.bf16.msra.mxu0 0
        %1374 = vmatprep.subr.bf16.mxu0 0
        %1375 = vmatpush1.bf16.msra.mxu0 0
        %1376 = vmatprep.subr.bf16.mxu0 0
        %1377 = vmatpush1.bf16.msra.mxu0 0
        %1378 = vmatprep.subr.bf16.mxu0 0
        %1379 = vmatpush1.bf16.msra.mxu0 0
        %1380 = vmatprep.subr.bf16.mxu0 0
        %1381 = vmatpush1.bf16.msra.mxu0 0
        %1382 = vmatprep.subr.bf16.mxu0 0
        %1383 = vmatpush1.bf16.msra.mxu0 0
        %1384 = vmatprep.subr.bf16.mxu0 0
        %1385 = vmatpush1.bf16.msra.mxu0 0
        %1386 = vmatprep.subr.bf16.mxu0 0
        %1387 = vmatpush1.bf16.msra.mxu0 0
        %1388 = vmatprep.subr.bf16.mxu0 0
        %1389 = vmatpush1.bf16.msra.mxu0 0
        %1390 = vmatprep.subr.bf16.mxu0 0
        %1391 = vmatpush1.bf16.msra.mxu0 0
        %1392 = vmatprep.mubr.bf16.mxu0 0
        %1393 = vmatmul.mubr.bf16.gmra.mrb[0].mxu0 %v1322
        %v1394 = vpop.f32.mrb[0].mxu0
        %v1395 = vadd.f32 0.0, %v1394
        %v1396 = vpop.f32.mrb[0].mxu0
        %v1397 = vpop.f32.mrb[0].mxu0
        %v1398 = vadd.f32 0.0, %v1397
        %v1399 = vpop.f32.mrb[0].mxu0
        %1400 = vmatprep.mubr.bf16.mxu0 0
        %1401 = vmatmul.mubr.bf16.gmra.mrb[0].mxu0 %v1325
        %v1402 = vpop.f32.mrb[0].mxu0
        %v1403 = vadd.f32 0.0, %v1402
        %v1404 = vpop.f32.mrb[0].mxu0
        %v1405 = vpop.f32.mrb[0].mxu0
        %v1406 = vadd.f32 0.0, %v1405
        %v1407 = vpop.f32.mrb[0].mxu0
        %1408 = vmatprep.mubr.bf16.mxu0 0
        %1409 = vmatmul.mubr.bf16.gmra.mrb[0].mxu0 %v1328
        %v1410 = vpop.f32.mrb[0].mxu0
        %v1411 = vadd.f32 0.0, %v1410
        %v1412 = vpop.f32.mrb[0].mxu0
        %v1413 = vpop.f32.mrb[0].mxu0
        %v1414 = vadd.f32 0.0, %v1413
        %v1415 = vpop.f32.mrb[0].mxu0
        %1416 = vmatprep.mubr.bf16.mxu0 0
        %1417 = vmatmul.mubr.bf16.gmra.mrb[0].mxu0 %v1331
        %v1418 = vpop.f32.mrb[0].mxu0
        %v1419 = vadd.f32 0.0, %v1418
        %v1420 = vpop.f32.mrb[0].mxu0
        %v1421 = vpop.f32.mrb[0].mxu0
        %v1422 = vadd.f32 0.0, %v1421
        %v1423 = vpop.f32.mrb[0].mxu0
        %1424 = vmatprep.mubr.bf16.mxu0 0
        %1425 = vmatmul.mubr.bf16.gmra.mrb[0].mxu0 %v1334
        %v1426 = vpop.f32.mrb[0].mxu0
        %v1427 = vadd.f32 0.0, %v1426
        %v1428 = vpop.f32.mrb[0].mxu0
        %v1429 = vpop.f32.mrb[0].mxu0
        %v1430 = vadd.f32 0.0, %v1429
        %v1431 = vpop.f32.mrb[0].mxu0
        %1432 = vmatprep.mubr.bf16.mxu0 0
        %1433 = vmatmul.mubr.bf16.gmra.mrb[0].mxu0 %v1337
        %v1434 = vpop.f32.mrb[0].mxu0
        %v1435 = vadd.f32 0.0, %v1434
        %v1436 = vpop.f32.mrb[0].mxu0
        %v1437 = vpop.f32.mrb[0].mxu0
        %v1438 = vadd.f32 0.0, %v1437
        %v1439 = vpop.f32.mrb[0].mxu0
        %1440 = vmatprep.mubr.bf16.mxu0 0
        %1441 = vmatmul.mubr.bf16.gmra.mrb[0].mxu0 %v1340
        %v1442 = vpop.f32.mrb[0].mxu0
        %v1443 = vadd.f32 0.0, %v1442
        %v1444 = vpop.f32.mrb[0].mxu0
        %v1445 = vpop.f32.mrb[0].mxu0
        %v1446 = vadd.f32 0.0, %v1445
        %v1447 = vpop.f32.mrb[0].mxu0
        %1448 = vmatprep.mubr.bf16.mxu0 0
        %1449 = vmatmul.mubr.bf16.gmra.mrb[0].mxu0 %v1343
        %v1450 = vpop.f32.mrb[0].mxu0
        %v1451 = vadd.f32 0.0, %v1450
        %v1452 = vpop.f32.mrb[0].mxu0
        %v1453 = vpop.f32.mrb[0].mxu0
        %v1454 = vadd.f32 0.0, %v1453
        %v1455 = vpop.f32.mrb[0].mxu0
        %1456 = vmatprep.mubr.bf16.mxu0 0
        %1457 = vmatmul.mubr.bf16.gmra.mrb[0].mxu0 %v1346
        %v1458 = vpop.f32.mrb[0].mxu0
        %v1459 = vadd.f32 0.0, %v1458
        %v1460 = vpop.f32.mrb[0].mxu0
        %v1461 = vpop.f32.mrb[0].mxu0
        %v1462 = vadd.f32 0.0, %v1461
        %v1463 = vpop.f32.mrb[0].mxu0
        %1464 = vmatprep.mubr.bf16.mxu0 0
        %1465 = vmatmul.mubr.bf16.gmra.mrb[0].mxu0 %v1349
        %v1466 = vpop.f32.mrb[0].mxu0
        %v1467 = vadd.f32 0.0, %v1466
        %v1468 = vpop.f32.mrb[0].mxu0
        %v1469 = vpop.f32.mrb[0].mxu0
        %v1470 = vadd.f32 0.0, %v1469
        %v1471 = vpop.f32.mrb[0].mxu0
        %1472 = vmatprep.mubr.bf16.mxu0 0
        %1473 = vmatmul.mubr.bf16.gmra.mrb[0].mxu0 %v1352
        %v1474 = vpop.f32.mrb[0].mxu0
        %v1475 = vadd.f32 0.0, %v1474
        %v1476 = vpop.f32.mrb[0].mxu0
        %v1477 = vpop.f32.mrb[0].mxu0
        %v1478 = vadd.f32 0.0, %v1477
        %v1479 = vpop.f32.mrb[0].mxu0
        %1480 = vmatprep.mubr.bf16.mxu0 0
        %1481 = vmatmul.mubr.bf16.gmra.mrb[0].mxu0 %v1355
        %v1482 = vpop.f32.mrb[0].mxu0
        %v1483 = vadd.f32 0.0, %v1482
        %v1484 = vpop.f32.mrb[0].mxu0
        %v1485 = vpop.f32.mrb[0].mxu0
        %v1486 = vadd.f32 0.0, %v1485
        %v1487 = vpop.f32.mrb[0].mxu0
        %1488 = vdwg.mxu0
        %v1489 = vadd.f32 %v1260, %v1395
        %v1490 = vadd.f32 %v1261, %v1398
        %v1491 = vadd.f32 %v1262, %v1403
        %v1492 = vadd.f32 %v1263, %v1406
        %v1493 = vadd.f32 %v1264, %v1411
        %v1494 = vadd.f32 %v1265, %v1414
        %v1495 = vadd.f32 %v1266, %v1419
        %v1496 = vadd.f32 %v1267, %v1422
        %v1497 = vadd.f32 %v1268, %v1427
        %v1498 = vadd.f32 %v1269, %v1430
        %v1499 = vadd.f32 %v1270, %v1435
        %v1500 = vadd.f32 %v1271, %v1438
        %v1501 = vadd.f32 %v1272, %v1443
        %v1502 = vadd.f32 %v1273, %v1446
        %v1503 = vadd.f32 %v1274, %v1451
        %v1504 = vadd.f32 %v1275, %v1454
        %v1505 = vadd.f32 %v1276, %v1459
        %v1506 = vadd.f32 %v1277, %v1462
        %v1507 = vadd.f32 %v1278, %v1467
        %v1508 = vadd.f32 %v1279, %v1470
        %v1509 = vadd.f32 %v1280, %v1475
        %v1510 = vadd.f32 %v1281, %v1478
        %v1511 = vadd.f32 %v1282, %v1483
        %v1512 = vadd.f32 %v1283, %v1486
        %v1513 = vld [vmem:[%s2] sm:$0x1]
        %v1515 = vlaneseq
        %v1516 = vshrl.u32 %v1515, 7
        %v1517 = vsub.s32 0, %v1516
        %v1518 = vrot.slane %v1513, %v1517
        %v1520 = vadd.f32 %v1489, %v1518
        %v1521 = vadd.f32 %v1490, %v1518
        %v1522 = vadd.f32 %v1491, %v1518
        %v1523 = vadd.f32 %v1492, %v1518
        %v1524 = vadd.f32 %v1493, %v1518
        %v1525 = vadd.f32 %v1494, %v1518
        %v1526 = vadd.f32 %v1495, %v1518
        %v1527 = vadd.f32 %v1496, %v1518
        %v1528 = vadd.f32 %v1497, %v1518
        %v1529 = vadd.f32 %v1498, %v1518
        %v1530 = vadd.f32 %v1499, %v1518
        %v1531 = vadd.f32 %v1500, %v1518
        %v1532 = vadd.f32 %v1501, %v1518
        %v1533 = vadd.f32 %v1502, %v1518
        %v1534 = vadd.f32 %v1503, %v1518
        %v1535 = vadd.f32 %v1504, %v1518
        %v1536 = vadd.f32 %v1505, %v1518
        %v1537 = vadd.f32 %v1506, %v1518
        %v1538 = vadd.f32 %v1507, %v1518
        %v1539 = vadd.f32 %v1508, %v1518
        %v1540 = vadd.f32 %v1509, %v1518
        %v1541 = vadd.f32 %v1510, %v1518
        %v1542 = vadd.f32 %v1511, %v1518
        %v1543 = vadd.f32 %v1512, %v1518
        %v1544 = vmax.f32 %v1520, 0.0
        %v1545 = vmax.f32 %v1521, 0.0
        %v1546 = vmax.f32 %v1522, 0.0
        %v1547 = vmax.f32 %v1523, 0.0
        %v1548 = vmax.f32 %v1524, 0.0
        %v1549 = vmax.f32 %v1525, 0.0
        %v1550 = vmax.f32 %v1526, 0.0
        %v1551 = vmax.f32 %v1527, 0.0
        %v1552 = vmax.f32 %v1528, 0.0
        %v1553 = vmax.f32 %v1529, 0.0
        %v1554 = vmax.f32 %v1530, 0.0
        %v1555 = vmax.f32 %v1531, 0.0
        %v1556 = vmax.f32 %v1532, 0.0
        %v1557 = vmax.f32 %v1533, 0.0
        %v1558 = vmax.f32 %v1534, 0.0
        %v1559 = vmax.f32 %v1535, 0.0
        %v1560 = vmax.f32 %v1536, 0.0
        %v1561 = vmax.f32 %v1537, 0.0
        %v1562 = vmax.f32 %v1538, 0.0
        %v1563 = vmax.f32 %v1539, 0.0
        %v1564 = vmax.f32 %v1540, 0.0
        %v1565 = vmax.f32 %v1541, 0.0
        %v1566 = vmax.f32 %v1542, 0.0
        %v1567 = vmax.f32 %v1543, 0.0
        %vm1592 = vcmask 1046528
        %v1593 = vrot.slane %v1544, 1
        %v1594 = vrot.slane %v1545, 1
        %v1595 = vsel %vm1592, %v1593, %v1594
        %v1596 = vrot.slane %v1546, 1
        %v1597 = vsel %vm1592, %v1594, %v1596
        %v1598 = vrot.slane %v1547, 1
        %v1599 = vsel %vm1592, %v1596, %v1598
        %v1600 = vrot.slane %v1548, 1
        %v1601 = vsel %vm1592, %v1598, %v1600
        %v1602 = vrot.slane %v1549, 1
        %v1603 = vsel %vm1592, %v1600, %v1602
        %v1604 = vrot.slane %v1550, 1
        %v1605 = vsel %vm1592, %v1602, %v1604
        %v1606 = vrot.slane %v1551, 1
        %v1607 = vsel %vm1592, %v1604, %v1606
        %v1608 = vrot.slane %v1552, 1
        %v1609 = vsel %vm1592, %v1606, %v1608
        %v1610 = vrot.slane %v1553, 1
        %v1611 = vsel %vm1592, %v1608, %v1610
        %v1612 = vrot.slane %v1554, 1
        %v1613 = vsel %vm1592, %v1610, %v1612
        %v1614 = vrot.slane %v1555, 1
        %v1615 = vsel %vm1592, %v1612, %v1614
        %v1616 = vrot.slane %v1556, 1
        %v1617 = vsel %vm1592, %v1614, %v1616
        %v1618 = vrot.slane %v1557, 1
        %v1619 = vsel %vm1592, %v1616, %v1618
        %v1620 = vrot.slane %v1558, 1
        %v1621 = vsel %vm1592, %v1618, %v1620
        %v1622 = vrot.slane %v1559, 1
        %v1623 = vsel %vm1592, %v1620, %v1622
        %v1624 = vrot.slane %v1560, 1
        %v1625 = vsel %vm1592, %v1622, %v1624
        %v1626 = vrot.slane %v1561, 1
        %v1627 = vsel %vm1592, %v1624, %v1626
        %v1628 = vrot.slane %v1562, 1
        %v1629 = vsel %vm1592, %v1626, %v1628
        %v1630 = vrot.slane %v1563, 1
        %v1631 = vsel %vm1592, %v1628, %v1630
        %v1632 = vrot.slane %v1564, 1
        %v1633 = vsel %vm1592, %v1630, %v1632
        %v1634 = vrot.slane %v1565, 1
        %v1635 = vsel %vm1592, %v1632, %v1634
        %v1636 = vrot.slane %v1566, 1
        %v1637 = vsel %vm1592, %v1634, %v1636
        %v1638 = vrot.slane %v1567, 1
        %v1639 = vsel %vm1592, %v1636, %v1638
        %v1664 = vmax.f32 %v1544, %v1595
        %v1665 = vmax.f32 %v1545, %v1597
        %v1666 = vmax.f32 %v1546, %v1599
        %v1667 = vmax.f32 %v1547, %v1601
        %v1668 = vmax.f32 %v1548, %v1603
        %v1669 = vmax.f32 %v1549, %v1605
        %v1670 = vmax.f32 %v1550, %v1607
        %v1671 = vmax.f32 %v1551, %v1609
        %v1672 = vmax.f32 %v1552, %v1611
        %v1673 = vmax.f32 %v1553, %v1613
        %v1674 = vmax.f32 %v1554, %v1615
        %v1675 = vmax.f32 %v1555, %v1617
        %v1676 = vmax.f32 %v1556, %v1619
        %v1677 = vmax.f32 %v1557, %v1621
        %v1678 = vmax.f32 %v1558, %v1623
        %v1679 = vmax.f32 %v1559, %v1625
        %v1680 = vmax.f32 %v1560, %v1627
        %v1681 = vmax.f32 %v1561, %v1629
        %v1682 = vmax.f32 %v1562, %v1631
        %v1683 = vmax.f32 %v1563, %v1633
        %v1684 = vmax.f32 %v1564, %v1635
        %v1685 = vmax.f32 %v1565, %v1637
        %v1686 = vmax.f32 %v1566, %v1639
        %v1687 = vmax.f32 %v1567, %v1638
        %1712 = vrot.lane.b32.xlu0 %v1664, 124
        %v1713 = vpop.permute.xlu0 %1712
        %1714 = vrot.lane.b32.xlu0 %v1665, 124
        %v1715 = vpop.permute.xlu0 %1714
        %1716 = vrot.lane.b32.xlu0 %v1666, 124
        %v1717 = vpop.permute.xlu0 %1716
        %1718 = vrot.lane.b32.xlu0 %v1667, 124
        %v1719 = vpop.permute.xlu0 %1718
        %1720 = vrot.lane.b32.xlu0 %v1668, 124
        %v1721 = vpop.permute.xlu0 %1720
        %1722 = vrot.lane.b32.xlu0 %v1669, 124
        %v1723 = vpop.permute.xlu0 %1722
        %1724 = vrot.lane.b32.xlu0 %v1670, 124
        %v1725 = vpop.permute.xlu0 %1724
        %1726 = vrot.lane.b32.xlu0 %v1671, 124
        %v1727 = vpop.permute.xlu0 %1726
        %1728 = vrot.lane.b32.xlu0 %v1672, 124
        %v1729 = vpop.permute.xlu0 %1728
        %1730 = vrot.lane.b32.xlu0 %v1673, 124
        %v1731 = vpop.permute.xlu0 %1730
        %1732 = vrot.lane.b32.xlu0 %v1674, 124
        %v1733 = vpop.permute.xlu0 %1732
        %1734 = vrot.lane.b32.xlu0 %v1675, 124
        %v1735 = vpop.permute.xlu0 %1734
        %1736 = vrot.lane.b32.xlu0 %v1676, 124
        %v1737 = vpop.permute.xlu0 %1736
        %1738 = vrot.lane.b32.xlu0 %v1677, 124
        %v1739 = vpop.permute.xlu0 %1738
        %1740 = vrot.lane.b32.xlu0 %v1678, 124
        %v1741 = vpop.permute.xlu0 %1740
        %1742 = vrot.lane.b32.xlu0 %v1679, 124
        %v1743 = vpop.permute.xlu0 %1742
        %1744 = vrot.lane.b32.xlu0 %v1680, 124
        %v1745 = vpop.permute.xlu0 %1744
        %1746 = vrot.lane.b32.xlu0 %v1681, 124
        %v1747 = vpop.permute.xlu0 %1746
        %1748 = vrot.lane.b32.xlu0 %v1682, 124
        %v1749 = vpop.permute.xlu0 %1748
        %1750 = vrot.lane.b32.xlu0 %v1683, 124
        %v1751 = vpop.permute.xlu0 %1750
        %1752 = vrot.lane.b32.xlu0 %v1684, 124
        %v1753 = vpop.permute.xlu0 %1752
        %1754 = vrot.lane.b32.xlu0 %v1685, 124
        %v1755 = vpop.permute.xlu0 %1754
        %1756 = vrot.lane.b32.xlu0 %v1686, 124
        %v1757 = vpop.permute.xlu0 %1756
        %1758 = vrot.lane.b32.xlu0 %v1687, 124
        %v1759 = vpop.permute.xlu0 %1758
        %v1784 = vmax.f32 %v1664, %v1713
        %v1785 = vmax.f32 %v1665, %v1715
        %v1786 = vmax.f32 %v1666, %v1717
        %v1787 = vmax.f32 %v1667, %v1719
        %v1788 = vmax.f32 %v1668, %v1721
        %v1789 = vmax.f32 %v1669, %v1723
        %v1790 = vmax.f32 %v1670, %v1725
        %v1791 = vmax.f32 %v1671, %v1727
        %v1792 = vmax.f32 %v1672, %v1729
        %v1793 = vmax.f32 %v1673, %v1731
        %v1794 = vmax.f32 %v1674, %v1733
        %v1795 = vmax.f32 %v1675, %v1735
        %v1796 = vmax.f32 %v1676, %v1737
        %v1797 = vmax.f32 %v1677, %v1739
        %v1798 = vmax.f32 %v1678, %v1741
        %v1799 = vmax.f32 %v1679, %v1743
        %v1800 = vmax.f32 %v1680, %v1745
        %v1801 = vmax.f32 %v1681, %v1747
        %v1802 = vmax.f32 %v1682, %v1749
        %v1803 = vmax.f32 %v1683, %v1751
        %v1804 = vmax.f32 %v1684, %v1753
        %v1805 = vmax.f32 %v1685, %v1755
        %v1806 = vmax.f32 %v1686, %v1757
        %v1807 = vmax.f32 %v1687, %v1759
        %v1808 = vpack.c.bf16 %v1785, %v1784
        %v1809 = vpack.c.bf16 %v1787, %v1786
        %v1810 = vpack.c.bf16 %v1789, %v1788
        %v1811 = vpack.c.bf16 %v1791, %v1790
        %v1812 = vpack.c.bf16 %v1793, %v1792
        %v1813 = vpack.c.bf16 %v1795, %v1794
        %v1814 = vpack.c.bf16 %v1797, %v1796
        %v1815 = vpack.c.bf16 %v1799, %v1798
        %v1816 = vpack.c.bf16 %v1801, %v1800
        %v1817 = vpack.c.bf16 %v1803, %v1802
        %v1818 = vpack.c.bf16 %v1805, %v1804
        %v1819 = vpack.c.bf16 %v1806, %v1806
        %v1820 = vld [vmem:[%s3] sm:$0xf]
        %v1821 = vld [vmem:[%s3 + $0x4] sm:$0xf]
        %v1822 = vld [vmem:[%s3 + $0x8] sm:$0xf]
        %v1823 = vld [vmem:[%s3 + $0xc] sm:$0xf]
        %v1824 = vld [vmem:[%s3 + $0x10] sm:$0xf]
        %v1825 = vld [vmem:[%s3 + $0x14] sm:$0xf]
        %v1826 = vld [vmem:[%s3 + $0x18] sm:$0xf]
        %v1827 = vld [vmem:[%s3 + $0x1c] sm:$0xf]
        %v1828 = vld [vmem:[%s3 + $0x20] sm:$0xf]
        %v1829 = vld [vmem:[%s3 + $0x24] sm:$0x3]
        %v1830 = vpack.c.bf16 %v1807, %v1806
        %s1831 = scalar_lea.vmem %s3, 40
        %v1832 = vld [vmem:[%s1831] sm:$0xf]
        %v1833 = vld [vmem:[%s1831 + $0x4] sm:$0xf]
        %v1834 = vld [vmem:[%s1831 + $0x8] sm:$0xf]
        %v1835 = vld [vmem:[%s1831 + $0xc] sm:$0xf]
        %v1836 = vld [vmem:[%s1831 + $0x10] sm:$0xf]
        %v1837 = vld [vmem:[%s1831 + $0x14] sm:$0xf]
        %v1838 = vld [vmem:[%s1831 + $0x18] sm:$0xf]
        %v1839 = vld [vmem:[%s1831 + $0x1c] sm:$0xf]
        %v1840 = vld [vmem:[%s1831 + $0x20] sm:$0xf]
        %v1841 = vld [vmem:[%s1831 + $0x24] sm:$0x3]
        %v1854 = vrot.slane %v1808, 1
        %v1855 = vrot.slane %v1809, 1
        %v1856 = vsel %vm806, %v1854, %v1855
        %v1857 = vrot.slane %v1810, 1
        %v1858 = vsel %vm806, %v1855, %v1857
        %v1859 = vrot.slane %v1811, 1
        %v1860 = vsel %vm806, %v1857, %v1859
        %v1861 = vrot.slane %v1812, 1
        %v1862 = vsel %vm806, %v1859, %v1861
        %v1863 = vrot.slane %v1813, 1
        %v1864 = vsel %vm806, %v1861, %v1863
        %v1865 = vrot.slane %v1814, 1
        %v1866 = vsel %vm806, %v1863, %v1865
        %v1867 = vrot.slane %v1815, 1
        %v1868 = vsel %vm806, %v1865, %v1867
        %v1869 = vrot.slane %v1816, 1
        %v1870 = vsel %vm806, %v1867, %v1869
        %v1871 = vrot.slane %v1817, 1
        %v1872 = vsel %vm806, %v1869, %v1871
        %v1873 = vrot.slane %v1818, 1
        %v1874 = vsel %vm806, %v1871, %v1873
        %v1875 = vrot.slane %v1830, 1
        %v1876 = vsel %vm806, %v1873, %v1875
        %v1887 = vunpack.c.l.b16 %v1832
        %v1888 = vunpack.c.l.b16 %v1833
        %v1889 = vunpack.c.l.b16 %v1834
        %v1890 = vunpack.c.l.b16 %v1835
        %v1891 = vunpack.c.l.b16 %v1836
        %v1892 = vunpack.c.l.b16 %v1837
        %v1893 = vunpack.c.l.b16 %v1838
        %v1894 = vunpack.c.l.b16 %v1839
        %v1895 = vunpack.c.l.b16 %v1840
        %v1896 = vunpack.c.l.b16 %v1841
        %v1897 = vpack.c.b16 %v1888, %v1887
        %v1898 = vpack.c.b16 %v1890, %v1889
        %v1899 = vpack.c.b16 %v1892, %v1891
        %v1900 = vpack.c.b16 %v1894, %v1893
        %v1901 = vpack.c.b16 %v1896, %v1895
        %vm1906 = vcmask 621568
        %v1908 = vsel %vm1906, %v1856, 0
        %v1911 = vsel %vm1906, %v1858, 0
        %v1914 = vsel %vm1906, %v1860, 0
        %v1917 = vsel %vm1906, %v1862, 0
        %v1920 = vsel %vm1906, %v1864, 0
        %v1923 = vsel %vm1906, %v1866, 0
        %v1926 = vsel %vm1906, %v1868, 0
        %v1929 = vsel %vm1906, %v1870, 0
        %v1932 = vsel %vm1906, %v1872, 0
        %v1935 = vsel %vm1906, %v1874, 0
        %v1938 = vsel %vm1906, %v1876, 0
        %v1941 = vsel %vm1906, %v1875, 0
        %vm1943 = vcmask 1045504
        %v1945 = vsel %vm1943, %v1901, 0
        %1947 = vmatprep.subr.bf16.mxu0 0
        %1948 = vmatpush1.bf16.msra.mxu0 %v1897
        %1949 = vmatprep.subr.bf16.mxu0 0
        %1950 = vmatpush1.bf16.msra.mxu0 %v1898
        %1951 = vmatprep.subr.bf16.mxu0 0
        %1952 = vmatpush1.bf16.msra.mxu0 %v1899
        %1953 = vmatprep.subr.bf16.mxu0 0
        %1954 = vmatpush1.bf16.msra.mxu0 %v1900
        %1955 = vmatprep.subr.bf16.mxu0 0
        %1956 = vmatpush1.bf16.msra.mxu0 %v1945
        %1957 = vmatprep.subr.bf16.mxu0 0
        %1958 = vmatpush1.bf16.msra.mxu0 0
        %1959 = vmatprep.subr.bf16.mxu0 0
        %1960 = vmatpush1.bf16.msra.mxu0 0
        %1961 = vmatprep.subr.bf16.mxu0 0
        %1962 = vmatpush1.bf16.msra.mxu0 0
        %1963 = vmatprep.subr.bf16.mxu0 0
        %1964 = vmatpush1.bf16.msra.mxu0 0
        %1965 = vmatprep.subr.bf16.mxu0 0
        %1966 = vmatpush1.bf16.msra.mxu0 0
        %1967 = vmatprep.subr.bf16.mxu0 0
        %1968 = vmatpush1.bf16.msra.mxu0 0
        %1969 = vmatprep.subr.bf16.mxu0 0
        %1970 = vmatpush1.bf16.msra.mxu0 0
        %1971 = vmatprep.subr.bf16.mxu0 0
        %1972 = vmatpush1.bf16.msra.mxu0 0
        %1973 = vmatprep.subr.bf16.mxu0 0
        %1974 = vmatpush1.bf16.msra.mxu0 0
        %1975 = vmatprep.subr.bf16.mxu0 0
        %1976 = vmatpush1.bf16.msra.mxu0 0
        %1977 = vmatprep.subr.bf16.mxu0 0
        %1978 = vmatpush1.bf16.msra.mxu0 0
        %1979 = vmatprep.mubr.bf16.mxu0 0
        %1980 = vmatmul.mubr.bf16.gmra.mrb[0].mxu0 %v1908
        %v1981 = vpop.f32.mrb[0].mxu0
        %v1982 = vadd.f32 0.0, %v1981
        %v1983 = vpop.f32.mrb[0].mxu0
        %v1984 = vpop.f32.mrb[0].mxu0
        %v1985 = vadd.f32 0.0, %v1984
        %v1986 = vpop.f32.mrb[0].mxu0
        %1987 = vmatprep.mubr.bf16.mxu0 0
        %1988 = vmatmul.mubr.bf16.gmra.mrb[0].mxu0 %v1911
        %v1989 = vpop.f32.mrb[0].mxu0
        %v1990 = vadd.f32 0.0, %v1989
        %v1991 = vpop.f32.mrb[0].mxu0
        %v1992 = vpop.f32.mrb[0].mxu0
        %v1993 = vadd.f32 0.0, %v1992
        %v1994 = vpop.f32.mrb[0].mxu0
        %1995 = vmatprep.mubr.bf16.mxu0 0
        %1996 = vmatmul.mubr.bf16.gmra.mrb[0].mxu0 %v1914
        %v1997 = vpop.f32.mrb[0].mxu0
        %v1998 = vadd.f32 0.0, %v1997
        %v1999 = vpop.f32.mrb[0].mxu0
        %v2000 = vpop.f32.mrb[0].mxu0
        %v2001 = vadd.f32 0.0, %v2000
        %v2002 = vpop.f32.mrb[0].mxu0
        %2003 = vmatprep.mubr.bf16.mxu0 0
        %2004 = vmatmul.mubr.bf16.gmra.mrb[0].mxu0 %v1917
        %v2005 = vpop.f32.mrb[0].mxu0
        %v2006 = vadd.f32 0.0, %v2005
        %v2007 = vpop.f32.mrb[0].mxu0
        %v2008 = vpop.f32.mrb[0].mxu0
        %v2009 = vadd.f32 0.0, %v2008
        %v2010 = vpop.f32.mrb[0].mxu0
        %2011 = vmatprep.mubr.bf16.mxu0 0
        %2012 = vmatmul.mubr.bf16.gmra.mrb[0].mxu0 %v1920
        %v2013 = vpop.f32.mrb[0].mxu0
        %v2014 = vadd.f32 0.0, %v2013
        %v2015 = vpop.f32.mrb[0].mxu0
        %v2016 = vpop.f32.mrb[0].mxu0
        %v2017 = vadd.f32 0.0, %v2016
        %v2018 = vpop.f32.mrb[0].mxu0
        %2019 = vmatprep.mubr.bf16.mxu0 0
        %2020 = vmatmul.mubr.bf16.gmra.mrb[0].mxu0 %v1923
        %v2021 = vpop.f32.mrb[0].mxu0
        %v2022 = vadd.f32 0.0, %v2021
        %v2023 = vpop.f32.mrb[0].mxu0
        %v2024 = vpop.f32.mrb[0].mxu0
        %v2025 = vadd.f32 0.0, %v2024
        %v2026 = vpop.f32.mrb[0].mxu0
        %2027 = vmatprep.mubr.bf16.mxu0 0
        %2028 = vmatmul.mubr.bf16.gmra.mrb[0].mxu0 %v1926
        %v2029 = vpop.f32.mrb[0].mxu0
        %v2030 = vadd.f32 0.0, %v2029
        %v2031 = vpop.f32.mrb[0].mxu0
        %v2032 = vpop.f32.mrb[0].mxu0
        %v2033 = vadd.f32 0.0, %v2032
        %v2034 = vpop.f32.mrb[0].mxu0
        %2035 = vmatprep.mubr.bf16.mxu0 0
        %2036 = vmatmul.mubr.bf16.gmra.mrb[0].mxu0 %v1929
        %v2037 = vpop.f32.mrb[0].mxu0
        %v2038 = vadd.f32 0.0, %v2037
        %v2039 = vpop.f32.mrb[0].mxu0
        %v2040 = vpop.f32.mrb[0].mxu0
        %v2041 = vadd.f32 0.0, %v2040
        %v2042 = vpop.f32.mrb[0].mxu0
        %2043 = vmatprep.mubr.bf16.mxu0 0
        %2044 = vmatmul.mubr.bf16.gmra.mrb[0].mxu0 %v1932
        %v2045 = vpop.f32.mrb[0].mxu0
        %v2046 = vadd.f32 0.0, %v2045
        %v2047 = vpop.f32.mrb[0].mxu0
        %v2048 = vpop.f32.mrb[0].mxu0
        %v2049 = vadd.f32 0.0, %v2048
        %v2050 = vpop.f32.mrb[0].mxu0
        %2051 = vmatprep.mubr.bf16.mxu0 0
        %2052 = vmatmul.mubr.bf16.gmra.mrb[0].mxu0 %v1935
        %v2053 = vpop.f32.mrb[0].mxu0
        %v2054 = vadd.f32 0.0, %v2053
        %v2055 = vpop.f32.mrb[0].mxu0
        %v2056 = vpop.f32.mrb[0].mxu0
        %v2057 = vadd.f32 0.0, %v2056
        %v2058 = vpop.f32.mrb[0].mxu0
        %2059 = vmatprep.mubr.bf16.mxu0 0
        %2060 = vmatmul.mubr.bf16.gmra.mrb[0].mxu0 %v1938
        %v2061 = vpop.f32.mrb[0].mxu0
        %v2062 = vadd.f32 0.0, %v2061
        %v2063 = vpop.f32.mrb[0].mxu0
        %v2064 = vpop.f32.mrb[0].mxu0
        %v2065 = vadd.f32 0.0, %v2064
        %v2066 = vpop.f32.mrb[0].mxu0
        %2067 = vmatprep.mubr.bf16.mxu0 0
        %2068 = vmatmul.mubr.bf16.gmra.mrb[0].mxu0 %v1941
        %v2069 = vpop.f32.mrb[0].mxu0
        %v2070 = vadd.f32 0.0, %v2069
        %v2071 = vpop.f32.mrb[0].mxu0
        %v2072 = vpop.f32.mrb[0].mxu0
        %v2073 = vpop.f32.mrb[0].mxu0
        %2074 = vdwg.mxu0
        %v2085 = vunpack.c.l.b16 %v1820
        %v2086 = vunpack.c.l.b16 %v1821
        %v2087 = vunpack.c.l.b16 %v1822
        %v2088 = vunpack.c.l.b16 %v1823
        %v2089 = vunpack.c.l.b16 %v1824
        %v2090 = vunpack.c.l.b16 %v1825
        %v2091 = vunpack.c.l.b16 %v1826
        %v2092 = vunpack.c.l.b16 %v1827
        %v2093 = vunpack.c.l.b16 %v1828
        %v2094 = vunpack.c.l.b16 %v1829
        %v2095 = vpack.c.b16 %v2086, %v2085
        %v2096 = vpack.c.b16 %v2088, %v2087
        %v2097 = vpack.c.b16 %v2090, %v2089
        %v2098 = vpack.c.b16 %v2092, %v2091
        %v2099 = vpack.c.b16 %v2094, %v2093
        %v2105 = vsel %vm1906, %v1808, 0
        %v2108 = vsel %vm1906, %v1809, 0
        %v2111 = vsel %vm1906, %v1810, 0
        %v2114 = vsel %vm1906, %v1811, 0
        %v2117 = vsel %vm1906, %v1812, 0
        %v2120 = vsel %vm1906, %v1813, 0
        %v2123 = vsel %vm1906, %v1814, 0
        %v2126 = vsel %vm1906, %v1815, 0
        %v2129 = vsel %vm1906, %v1816, 0
        %v2132 = vsel %vm1906, %v1817, 0
        %v2135 = vsel %vm1906, %v1818, 0
        %v2138 = vsel %vm1906, %v1819, 0
        %v2141 = vsel %vm1943, %v2099, 0
        %2143 = vmatprep.subr.bf16.mxu0 0
        %2144 = vmatpush1.bf16.msra.mxu0 %v2095
        %2145 = vmatprep.subr.bf16.mxu0 0
        %2146 = vmatpush1.bf16.msra.mxu0 %v2096
        %2147 = vmatprep.subr.bf16.mxu0 0
        %2148 = vmatpush1.bf16.msra.mxu0 %v2097
        %2149 = vmatprep.subr.bf16.mxu0 0
        %2150 = vmatpush1.bf16.msra.mxu0 %v2098
        %2151 = vmatprep.subr.bf16.mxu0 0
        %2152 = vmatpush1.bf16.msra.mxu0 %v2141
        %2153 = vmatprep.subr.bf16.mxu0 0
        %2154 = vmatpush1.bf16.msra.mxu0 0
        %2155 = vmatprep.subr.bf16.mxu0 0
        %2156 = vmatpush1.bf16.msra.mxu0 0
        %2157 = vmatprep.subr.bf16.mxu0 0
        %2158 = vmatpush1.bf16.msra.mxu0 0
        %2159 = vmatprep.subr.bf16.mxu0 0
        %2160 = vmatpush1.bf16.msra.mxu0 0
        %2161 = vmatprep.subr.bf16.mxu0 0
        %2162 = vmatpush1.bf16.msra.mxu0 0
        %2163 = vmatprep.subr.bf16.mxu0 0
        %2164 = vmatpush1.bf16.msra.mxu0 0
        %2165 = vmatprep.subr.bf16.mxu0 0
        %2166 = vmatpush1.bf16.msra.mxu0 0
        %2167 = vmatprep.subr.bf16.mxu0 0
        %2168 = vmatpush1.bf16.msra.mxu0 0
        %2169 = vmatprep.subr.bf16.mxu0 0
        %2170 = vmatpush1.bf16.msra.mxu0 0
        %2171 = vmatprep.subr.bf16.mxu0 0
        %2172 = vmatpush1.bf16.msra.mxu0 0
        %2173 = vmatprep.subr.bf16.mxu0 0
        %2174 = vmatpush1.bf16.msra.mxu0 0
        %2175 = vmatprep.mubr.bf16.mxu0 0
        %2176 = vmatmul.mubr.bf16.gmra.mrb[0].mxu0 %v2105
        %v2177 = vpop.f32.mrb[0].mxu0
        %v2178 = vadd.f32 %v1982, %v2177
        %v2179 = vpop.f32.mrb[0].mxu0
        %v2180 = vpop.f32.mrb[0].mxu0
        %v2181 = vadd.f32 %v1985, %v2180
        %v2182 = vpop.f32.mrb[0].mxu0
        %2183 = vmatprep.mubr.bf16.mxu0 0
        %2184 = vmatmul.mubr.bf16.gmra.mrb[0].mxu0 %v2108
        %v2185 = vpop.f32.mrb[0].mxu0
        %v2186 = vadd.f32 %v1990, %v2185
        %v2187 = vpop.f32.mrb[0].mxu0
        %v2188 = vpop.f32.mrb[0].mxu0
        %v2189 = vadd.f32 %v1993, %v2188
        %v2190 = vpop.f32.mrb[0].mxu0
        %2191 = vmatprep.mubr.bf16.mxu0 0
        %2192 = vmatmul.mubr.bf16.gmra.mrb[0].mxu0 %v2111
        %v2193 = vpop.f32.mrb[0].mxu0
        %v2194 = vadd.f32 %v1998, %v2193
        %v2195 = vpop.f32.mrb[0].mxu0
        %v2196 = vpop.f32.mrb[0].mxu0
        %v2197 = vadd.f32 %v2001, %v2196
        %v2198 = vpop.f32.mrb[0].mxu0
        %2199 = vmatprep.mubr.bf16.mxu0 0
        %2200 = vmatmul.mubr.bf16.gmra.mrb[0].mxu0 %v2114
        %v2201 = vpop.f32.mrb[0].mxu0
        %v2202 = vadd.f32 %v2006, %v2201
        %v2203 = vpop.f32.mrb[0].mxu0
        %v2204 = vpop.f32.mrb[0].mxu0
        %v2205 = vadd.f32 %v2009, %v2204
        %v2206 = vpop.f32.mrb[0].mxu0
        %2207 = vmatprep.mubr.bf16.mxu0 0
        %2208 = vmatmul.mubr.bf16.gmra.mrb[0].mxu0 %v2117
        %v2209 = vpop.f32.mrb[0].mxu0
        %v2210 = vadd.f32 %v2014, %v2209
        %v2211 = vpop.f32.mrb[0].mxu0
        %v2212 = vpop.f32.mrb[0].mxu0
        %v2213 = vadd.f32 %v2017, %v2212
        %v2214 = vpop.f32.mrb[0].mxu0
        %2215 = vmatprep.mubr.bf16.mxu0 0
        %2216 = vmatmul.mubr.bf16.gmra.mrb[0].mxu0 %v2120
        %v2217 = vpop.f32.mrb[0].mxu0
        %v2218 = vadd.f32 %v2022, %v2217
        %v2219 = vpop.f32.mrb[0].mxu0
        %v2220 = vpop.f32.mrb[0].mxu0
        %v2221 = vadd.f32 %v2025, %v2220
        %v2222 = vpop.f32.mrb[0].mxu0
        %2223 = vmatprep.mubr.bf16.mxu0 0
        %2224 = vmatmul.mubr.bf16.gmra.mrb[0].mxu0 %v2123
        %v2225 = vpop.f32.mrb[0].mxu0
        %v2226 = vadd.f32 %v2030, %v2225
        %v2227 = vpop.f32.mrb[0].mxu0
        %v2228 = vpop.f32.mrb[0].mxu0
        %v2229 = vadd.f32 %v2033, %v2228
        %v2230 = vpop.f32.mrb[0].mxu0
        %2231 = vmatprep.mubr.bf16.mxu0 0
        %2232 = vmatmul.mubr.bf16.gmra.mrb[0].mxu0 %v2126
        %v2233 = vpop.f32.mrb[0].mxu0
        %v2234 = vadd.f32 %v2038, %v2233
        %v2235 = vpop.f32.mrb[0].mxu0
        %v2236 = vpop.f32.mrb[0].mxu0
        %v2237 = vadd.f32 %v2041, %v2236
        %v2238 = vpop.f32.mrb[0].mxu0
        %2239 = vmatprep.mubr.bf16.mxu0 0
        %2240 = vmatmul.mubr.bf16.gmra.mrb[0].mxu0 %v2129
        %v2241 = vpop.f32.mrb[0].mxu0
        %v2242 = vadd.f32 %v2046, %v2241
        %v2243 = vpop.f32.mrb[0].mxu0
        %v2244 = vpop.f32.mrb[0].mxu0
        %v2245 = vadd.f32 %v2049, %v2244
        %v2246 = vpop.f32.mrb[0].mxu0
        %2247 = vmatprep.mubr.bf16.mxu0 0
        %2248 = vmatmul.mubr.bf16.gmra.mrb[0].mxu0 %v2132
        %v2249 = vpop.f32.mrb[0].mxu0
        %v2250 = vadd.f32 %v2054, %v2249
        %v2251 = vpop.f32.mrb[0].mxu0
        %v2252 = vpop.f32.mrb[0].mxu0
        %v2253 = vadd.f32 %v2057, %v2252
        %v2254 = vpop.f32.mrb[0].mxu0
        %2255 = vmatprep.mubr.bf16.mxu0 0
        %2256 = vmatmul.mubr.bf16.gmra.mrb[0].mxu0 %v2135
        %v2257 = vpop.f32.mrb[0].mxu0
        %v2258 = vadd.f32 %v2062, %v2257
        %v2259 = vpop.f32.mrb[0].mxu0
        %v2260 = vpop.f32.mrb[0].mxu0
        %v2261 = vadd.f32 %v2065, %v2260
        %v2262 = vpop.f32.mrb[0].mxu0
        %2263 = vmatprep.mubr.bf16.mxu0 0
        %2264 = vmatmul.mubr.bf16.gmra.mrb[0].mxu0 %v2138
        %v2265 = vpop.f32.mrb[0].mxu0
        %v2266 = vadd.f32 %v2070, %v2265
        %v2267 = vpop.f32.mrb[0].mxu0
        %v2268 = vpop.f32.mrb[0].mxu0
        %v2269 = vpop.f32.mrb[0].mxu0
        %2270 = vdwg.mxu0
        %s2271 = scalar_lea.vmem %s3, 80
        %v2272 = vld [vmem:[%s2271] sm:$0xf]
        %v2273 = vld [vmem:[%s2271 + $0x4] sm:$0xf]
        %v2274 = vld [vmem:[%s2271 + $0x8] sm:$0xf]
        %v2275 = vld [vmem:[%s2271 + $0xc] sm:$0xf]
        %v2276 = vld [vmem:[%s2271 + $0x10] sm:$0xf]
        %v2277 = vld [vmem:[%s2271 + $0x14] sm:$0xf]
        %v2278 = vld [vmem:[%s2271 + $0x18] sm:$0xf]
        %v2279 = vld [vmem:[%s2271 + $0x1c] sm:$0xf]
        %v2280 = vld [vmem:[%s2271 + $0x20] sm:$0xf]
        %v2281 = vld [vmem:[%s2271 + $0x24] sm:$0x3]
        %v2282 = vrot.slane %v1808, 2
        %v2283 = vrot.slane %v1809, 2
        %v2284 = vsel %vm1288, %v2282, %v2283
        %v2285 = vrot.slane %v1810, 2
        %v2286 = vsel %vm1288, %v2283, %v2285
        %v2287 = vrot.slane %v1811, 2
        %v2288 = vsel %vm1288, %v2285, %v2287
        %v2289 = vrot.slane %v1812, 2
        %v2290 = vsel %vm1288, %v2287, %v2289
        %v2291 = vrot.slane %v1813, 2
        %v2292 = vsel %vm1288, %v2289, %v2291
        %v2293 = vrot.slane %v1814, 2
        %v2294 = vsel %vm1288, %v2291, %v2293
        %v2295 = vrot.slane %v1815, 2
        %v2296 = vsel %vm1288, %v2293, %v2295
        %v2297 = vrot.slane %v1816, 2
        %v2298 = vsel %vm1288, %v2295, %v2297
        %v2299 = vrot.slane %v1817, 2
        %v2300 = vsel %vm1288, %v2297, %v2299
        %v2301 = vrot.slane %v1818, 2
        %v2302 = vsel %vm1288, %v2299, %v2301
        %v2303 = vrot.slane %v1830, 2
        %v2304 = vsel %vm1288, %v2301, %v2303
        %v2315 = vunpack.c.l.b16 %v2272
        %v2316 = vunpack.c.l.b16 %v2273
        %v2317 = vunpack.c.l.b16 %v2274
        %v2318 = vunpack.c.l.b16 %v2275
        %v2319 = vunpack.c.l.b16 %v2276
        %v2320 = vunpack.c.l.b16 %v2277
        %v2321 = vunpack.c.l.b16 %v2278
        %v2322 = vunpack.c.l.b16 %v2279
        %v2323 = vunpack.c.l.b16 %v2280
        %v2324 = vunpack.c.l.b16 %v2281
        %v2325 = vpack.c.b16 %v2316, %v2315
        %v2326 = vpack.c.b16 %v2318, %v2317
        %v2327 = vpack.c.b16 %v2320, %v2319
        %v2328 = vpack.c.b16 %v2322, %v2321
        %v2329 = vpack.c.b16 %v2324, %v2323
        %v2335 = vsel %vm1906, %v2284, 0
        %v2338 = vsel %vm1906, %v2286, 0
        %v2341 = vsel %vm1906, %v2288, 0
        %v2344 = vsel %vm1906, %v2290, 0
        %v2347 = vsel %vm1906, %v2292, 0
        %v2350 = vsel %vm1906, %v2294, 0
        %v2353 = vsel %vm1906, %v2296, 0
        %v2356 = vsel %vm1906, %v2298, 0
        %v2359 = vsel %vm1906, %v2300, 0
        %v2362 = vsel %vm1906, %v2302, 0
        %v2365 = vsel %vm1906, %v2304, 0
        %v2368 = vsel %vm1906, %v2303, 0
        %v2371 = vsel %vm1943, %v2329, 0
        %2373 = vmatprep.subr.bf16.mxu0 0
        %2374 = vmatpush1.bf16.msra.mxu0 %v2325
        %2375 = vmatprep.subr.bf16.mxu0 0
        %2376 = vmatpush1.bf16.msra.mxu0 %v2326
        %2377 = vmatprep.subr.bf16.mxu0 0
        %2378 = vmatpush1.bf16.msra.mxu0 %v2327
        %2379 = vmatprep.subr.bf16.mxu0 0
        %2380 = vmatpush1.bf16.msra.mxu0 %v2328
        %2381 = vmatprep.subr.bf16.mxu0 0
        %2382 = vmatpush1.bf16.msra.mxu0 %v2371
        %2383 = vmatprep.subr.bf16.mxu0 0
        %2384 = vmatpush1.bf16.msra.mxu0 0
        %2385 = vmatprep.subr.bf16.mxu0 0
        %2386 = vmatpush1.bf16.msra.mxu0 0
        %2387 = vmatprep.subr.bf16.mxu0 0
        %2388 = vmatpush1.bf16.msra.mxu0 0
        %2389 = vmatprep.subr.bf16.mxu0 0
        %2390 = vmatpush1.bf16.msra.mxu0 0
        %2391 = vmatprep.subr.bf16.mxu0 0
        %2392 = vmatpush1.bf16.msra.mxu0 0
        %2393 = vmatprep.subr.bf16.mxu0 0
        %2394 = vmatpush1.bf16.msra.mxu0 0
        %2395 = vmatprep.subr.bf16.mxu0 0
        %2396 = vmatpush1.bf16.msra.mxu0 0
        %2397 = vmatprep.subr.bf16.mxu0 0
        %2398 = vmatpush1.bf16.msra.mxu0 0
        %2399 = vmatprep.subr.bf16.mxu0 0
        %2400 = vmatpush1.bf16.msra.mxu0 0
        %2401 = vmatprep.subr.bf16.mxu0 0
        %2402 = vmatpush1.bf16.msra.mxu0 0
        %2403 = vmatprep.subr.bf16.mxu0 0
        %2404 = vmatpush1.bf16.msra.mxu0 0
        %2405 = vmatprep.mubr.bf16.mxu0 0
        %2406 = vmatmul.mubr.bf16.gmra.mrb[0].mxu0 %v2335
        %v2407 = vpop.f32.mrb[0].mxu0
        %v2408 = vadd.f32 0.0, %v2407
        %v2409 = vpop.f32.mrb[0].mxu0
        %v2410 = vpop.f32.mrb[0].mxu0
        %v2411 = vadd.f32 0.0, %v2410
        %v2412 = vpop.f32.mrb[0].mxu0
        %2413 = vmatprep.mubr.bf16.mxu0 0
        %2414 = vmatmul.mubr.bf16.gmra.mrb[0].mxu0 %v2338
        %v2415 = vpop.f32.mrb[0].mxu0
        %v2416 = vadd.f32 0.0, %v2415
        %v2417 = vpop.f32.mrb[0].mxu0
        %v2418 = vpop.f32.mrb[0].mxu0
        %v2419 = vadd.f32 0.0, %v2418
        %v2420 = vpop.f32.mrb[0].mxu0
        %2421 = vmatprep.mubr.bf16.mxu0 0
        %2422 = vmatmul.mubr.bf16.gmra.mrb[0].mxu0 %v2341
        %v2423 = vpop.f32.mrb[0].mxu0
        %v2424 = vadd.f32 0.0, %v2423
        %v2425 = vpop.f32.mrb[0].mxu0
        %v2426 = vpop.f32.mrb[0].mxu0
        %v2427 = vadd.f32 0.0, %v2426
        %v2428 = vpop.f32.mrb[0].mxu0
        %2429 = vmatprep.mubr.bf16.mxu0 0
        %2430 = vmatmul.mubr.bf16.gmra.mrb[0].mxu0 %v2344
        %v2431 = vpop.f32.mrb[0].mxu0
        %v2432 = vadd.f32 0.0, %v2431
        %v2433 = vpop.f32.mrb[0].mxu0
        %v2434 = vpop.f32.mrb[0].mxu0
        %v2435 = vadd.f32 0.0, %v2434
        %v2436 = vpop.f32.mrb[0].mxu0
        %2437 = vmatprep.mubr.bf16.mxu0 0
        %2438 = vmatmul.mubr.bf16.gmra.mrb[0].mxu0 %v2347
        %v2439 = vpop.f32.mrb[0].mxu0
        %v2440 = vadd.f32 0.0, %v2439
        %v2441 = vpop.f32.mrb[0].mxu0
        %v2442 = vpop.f32.mrb[0].mxu0
        %v2443 = vadd.f32 0.0, %v2442
        %v2444 = vpop.f32.mrb[0].mxu0
        %2445 = vmatprep.mubr.bf16.mxu0 0
        %2446 = vmatmul.mubr.bf16.gmra.mrb[0].mxu0 %v2350
        %v2447 = vpop.f32.mrb[0].mxu0
        %v2448 = vadd.f32 0.0, %v2447
        %v2449 = vpop.f32.mrb[0].mxu0
        %v2450 = vpop.f32.mrb[0].mxu0
        %v2451 = vadd.f32 0.0, %v2450
        %v2452 = vpop.f32.mrb[0].mxu0
        %2453 = vmatprep.mubr.bf16.mxu0 0
        %2454 = vmatmul.mubr.bf16.gmra.mrb[0].mxu0 %v2353
        %v2455 = vpop.f32.mrb[0].mxu0
        %v2456 = vadd.f32 0.0, %v2455
        %v2457 = vpop.f32.mrb[0].mxu0
        %v2458 = vpop.f32.mrb[0].mxu0
        %v2459 = vadd.f32 0.0, %v2458
        %v2460 = vpop.f32.mrb[0].mxu0
        %2461 = vmatprep.mubr.bf16.mxu0 0
        %2462 = vmatmul.mubr.bf16.gmra.mrb[0].mxu0 %v2356
        %v2463 = vpop.f32.mrb[0].mxu0
        %v2464 = vadd.f32 0.0, %v2463
        %v2465 = vpop.f32.mrb[0].mxu0
        %v2466 = vpop.f32.mrb[0].mxu0
        %v2467 = vadd.f32 0.0, %v2466
        %v2468 = vpop.f32.mrb[0].mxu0
        %2469 = vmatprep.mubr.bf16.mxu0 0
        %2470 = vmatmul.mubr.bf16.gmra.mrb[0].mxu0 %v2359
        %v2471 = vpop.f32.mrb[0].mxu0
        %v2472 = vadd.f32 0.0, %v2471
        %v2473 = vpop.f32.mrb[0].mxu0
        %v2474 = vpop.f32.mrb[0].mxu0
        %v2475 = vadd.f32 0.0, %v2474
        %v2476 = vpop.f32.mrb[0].mxu0
        %2477 = vmatprep.mubr.bf16.mxu0 0
        %2478 = vmatmul.mubr.bf16.gmra.mrb[0].mxu0 %v2362
        %v2479 = vpop.f32.mrb[0].mxu0
        %v2480 = vadd.f32 0.0, %v2479
        %v2481 = vpop.f32.mrb[0].mxu0
        %v2482 = vpop.f32.mrb[0].mxu0
        %v2483 = vadd.f32 0.0, %v2482
        %v2484 = vpop.f32.mrb[0].mxu0
        %2485 = vmatprep.mubr.bf16.mxu0 0
        %2486 = vmatmul.mubr.bf16.gmra.mrb[0].mxu0 %v2365
        %v2487 = vpop.f32.mrb[0].mxu0
        %v2488 = vadd.f32 0.0, %v2487
        %v2489 = vpop.f32.mrb[0].mxu0
        %v2490 = vpop.f32.mrb[0].mxu0
        %v2491 = vadd.f32 0.0, %v2490
        %v2492 = vpop.f32.mrb[0].mxu0
        %2493 = vmatprep.mubr.bf16.mxu0 0
        %2494 = vmatmul.mubr.bf16.gmra.mrb[0].mxu0 %v2368
        %v2495 = vpop.f32.mrb[0].mxu0
        %v2496 = vadd.f32 0.0, %v2495
        %v2497 = vpop.f32.mrb[0].mxu0
        %v2498 = vpop.f32.mrb[0].mxu0
        %v2499 = vpop.f32.mrb[0].mxu0
        %2500 = vdwg.mxu0
        %v2501 = vadd.f32 %v2178, %v2408
        %v2502 = vadd.f32 %v2181, %v2411
        %v2503 = vadd.f32 %v2186, %v2416
        %v2504 = vadd.f32 %v2189, %v2419
        %v2505 = vadd.f32 %v2194, %v2424
        %v2506 = vadd.f32 %v2197, %v2427
        %v2507 = vadd.f32 %v2202, %v2432
        %v2508 = vadd.f32 %v2205, %v2435
        %v2509 = vadd.f32 %v2210, %v2440
        %v2510 = vadd.f32 %v2213, %v2443
        %v2511 = vadd.f32 %v2218, %v2448
        %v2512 = vadd.f32 %v2221, %v2451
        %v2513 = vadd.f32 %v2226, %v2456
        %v2514 = vadd.f32 %v2229, %v2459
        %v2515 = vadd.f32 %v2234, %v2464
        %v2516 = vadd.f32 %v2237, %v2467
        %v2517 = vadd.f32 %v2242, %v2472
        %v2518 = vadd.f32 %v2245, %v2475
        %v2519 = vadd.f32 %v2250, %v2480
        %v2520 = vadd.f32 %v2253, %v2483
        %v2521 = vadd.f32 %v2258, %v2488
        %v2522 = vadd.f32 %v2261, %v2491
        %v2523 = vadd.f32 %v2266, %v2496
        %v2524 = vld [vmem:[%s4] sm:$0x1]
        %v2526 = vlaneseq
        %v2527 = vshrl.u32 %v2526, 7
        %v2528 = vsub.s32 0, %v2527
        %v2529 = vrot.slane %v2524, %v2528
        %v2531 = vadd.f32 %v2501, %v2529
        %v2532 = vadd.f32 %v2502, %v2529
        %v2533 = vadd.f32 %v2503, %v2529
        %v2534 = vadd.f32 %v2504, %v2529
        %v2535 = vadd.f32 %v2505, %v2529
        %v2536 = vadd.f32 %v2506, %v2529
        %v2537 = vadd.f32 %v2507, %v2529
        %v2538 = vadd.f32 %v2508, %v2529
        %v2539 = vadd.f32 %v2509, %v2529
        %v2540 = vadd.f32 %v2510, %v2529
        %v2541 = vadd.f32 %v2511, %v2529
        %v2542 = vadd.f32 %v2512, %v2529
        %v2543 = vadd.f32 %v2513, %v2529
        %v2544 = vadd.f32 %v2514, %v2529
        %v2545 = vadd.f32 %v2515, %v2529
        %v2546 = vadd.f32 %v2516, %v2529
        %v2547 = vadd.f32 %v2517, %v2529
        %v2548 = vadd.f32 %v2518, %v2529
        %v2549 = vadd.f32 %v2519, %v2529
        %v2550 = vadd.f32 %v2520, %v2529
        %v2551 = vadd.f32 %v2521, %v2529
        %v2552 = vadd.f32 %v2522, %v2529
        %v2553 = vadd.f32 %v2523, %v2529
        %v2554 = vmax.f32 %v2531, 0.0
        %v2555 = vmax.f32 %v2532, 0.0
        %v2556 = vmax.f32 %v2533, 0.0
        %v2557 = vmax.f32 %v2534, 0.0
        %v2558 = vmax.f32 %v2535, 0.0
        %v2559 = vmax.f32 %v2536, 0.0
        %v2560 = vmax.f32 %v2537, 0.0
        %v2561 = vmax.f32 %v2538, 0.0
        %v2562 = vmax.f32 %v2539, 0.0
        %v2563 = vmax.f32 %v2540, 0.0
        %v2564 = vmax.f32 %v2541, 0.0
        %v2565 = vmax.f32 %v2542, 0.0
        %v2566 = vmax.f32 %v2543, 0.0
        %v2567 = vmax.f32 %v2544, 0.0
        %v2568 = vmax.f32 %v2545, 0.0
        %v2569 = vmax.f32 %v2546, 0.0
        %v2570 = vmax.f32 %v2547, 0.0
        %v2571 = vmax.f32 %v2548, 0.0
        %v2572 = vmax.f32 %v2549, 0.0
        %v2573 = vmax.f32 %v2550, 0.0
        %v2574 = vmax.f32 %v2551, 0.0
        %v2575 = vmax.f32 %v2552, 0.0
        %v2576 = vmax.f32 %v2553, 0.0
        %v2600 = vrot.slane %v2554, 2
        %v2601 = vrot.slane %v2555, 2
        %v2602 = vsel %vm1943, %v2600, %v2601
        %v2603 = vrot.slane %v2556, 2
        %v2604 = vsel %vm1943, %v2601, %v2603
        %v2605 = vrot.slane %v2557, 2
        %v2606 = vsel %vm1943, %v2603, %v2605
        %v2607 = vrot.slane %v2558, 2
        %v2608 = vsel %vm1943, %v2605, %v2607
        %v2609 = vrot.slane %v2559, 2
        %v2610 = vsel %vm1943, %v2607, %v2609
        %v2611 = vrot.slane %v2560, 2
        %v2612 = vsel %vm1943, %v2609, %v2611
        %v2613 = vrot.slane %v2561, 2
        %v2614 = vsel %vm1943, %v2611, %v2613
        %v2615 = vrot.slane %v2562, 2
        %v2616 = vsel %vm1943, %v2613, %v2615
        %v2617 = vrot.slane %v2563, 2
        %v2618 = vsel %vm1943, %v2615, %v2617
        %v2619 = vrot.slane %v2564, 2
        %v2620 = vsel %vm1943, %v2617, %v2619
        %v2621 = vrot.slane %v2565, 2
        %v2622 = vsel %vm1943, %v2619, %v2621
        %v2623 = vrot.slane %v2566, 2
        %v2624 = vsel %vm1943, %v2621, %v2623
        %v2625 = vrot.slane %v2567, 2
        %v2626 = vsel %vm1943, %v2623, %v2625
        %v2627 = vrot.slane %v2568, 2
        %v2628 = vsel %vm1943, %v2625, %v2627
        %v2629 = vrot.slane %v2569, 2
        %v2630 = vsel %vm1943, %v2627, %v2629
        %v2631 = vrot.slane %v2570, 2
        %v2632 = vsel %vm1943, %v2629, %v2631
        %v2633 = vrot.slane %v2571, 2
        %v2634 = vsel %vm1943, %v2631, %v2633
        %v2635 = vrot.slane %v2572, 2
        %v2636 = vsel %vm1943, %v2633, %v2635
        %v2637 = vrot.slane %v2573, 2
        %v2638 = vsel %vm1943, %v2635, %v2637
        %v2639 = vrot.slane %v2574, 2
        %v2640 = vsel %vm1943, %v2637, %v2639
        %v2641 = vrot.slane %v2575, 2
        %v2642 = vsel %vm1943, %v2639, %v2641
        %v2643 = vrot.slane %v2576, 2
        %v2644 = vsel %vm1943, %v2641, %v2643
        %v2668 = vmax.f32 %v2554, %v2602
        %v2669 = vmax.f32 %v2555, %v2604
        %v2670 = vmax.f32 %v2556, %v2606
        %v2671 = vmax.f32 %v2557, %v2608
        %v2672 = vmax.f32 %v2558, %v2610
        %v2673 = vmax.f32 %v2559, %v2612
        %v2674 = vmax.f32 %v2560, %v2614
        %v2675 = vmax.f32 %v2561, %v2616
        %v2676 = vmax.f32 %v2562, %v2618
        %v2677 = vmax.f32 %v2563, %v2620
        %v2678 = vmax.f32 %v2564, %v2622
        %v2679 = vmax.f32 %v2565, %v2624
        %v2680 = vmax.f32 %v2566, %v2626
        %v2681 = vmax.f32 %v2567, %v2628
        %v2682 = vmax.f32 %v2568, %v2630
        %v2683 = vmax.f32 %v2569, %v2632
        %v2684 = vmax.f32 %v2570, %v2634
        %v2685 = vmax.f32 %v2571, %v2636
        %v2686 = vmax.f32 %v2572, %v2638
        %v2687 = vmax.f32 %v2573, %v2640
        %v2688 = vmax.f32 %v2574, %v2642
        %v2689 = vmax.f32 %v2575, %v2644
        %v2690 = vmax.f32 %v2576, %v2643
        %2714 = vrot.lane.b32.xlu0 %v2668, 120
        %v2715 = vpop.permute.xlu0 %2714
        %2716 = vrot.lane.b32.xlu0 %v2669, 120
        %v2717 = vpop.permute.xlu0 %2716
        %2718 = vrot.lane.b32.xlu0 %v2670, 120
        %v2719 = vpop.permute.xlu0 %2718
        %2720 = vrot.lane.b32.xlu0 %v2671, 120
        %v2721 = vpop.permute.xlu0 %2720
        %2722 = vrot.lane.b32.xlu0 %v2672, 120
        %v2723 = vpop.permute.xlu0 %2722
        %2724 = vrot.lane.b32.xlu0 %v2673, 120
        %v2725 = vpop.permute.xlu0 %2724
        %2726 = vrot.lane.b32.xlu0 %v2674, 120
        %v2727 = vpop.permute.xlu0 %2726
        %2728 = vrot.lane.b32.xlu0 %v2675, 120
        %v2729 = vpop.permute.xlu0 %2728
        %2730 = vrot.lane.b32.xlu0 %v2676, 120
        %v2731 = vpop.permute.xlu0 %2730
        %2732 = vrot.lane.b32.xlu0 %v2677, 120
        %v2733 = vpop.permute.xlu0 %2732
        %2734 = vrot.lane.b32.xlu0 %v2678, 120
        %v2735 = vpop.permute.xlu0 %2734
        %2736 = vrot.lane.b32.xlu0 %v2679, 120
        %v2737 = vpop.permute.xlu0 %2736
        %2738 = vrot.lane.b32.xlu0 %v2680, 120
        %v2739 = vpop.permute.xlu0 %2738
        %2740 = vrot.lane.b32.xlu0 %v2681, 120
        %v2741 = vpop.permute.xlu0 %2740
        %2742 = vrot.lane.b32.xlu0 %v2682, 120
        %v2743 = vpop.permute.xlu0 %2742
        %2744 = vrot.lane.b32.xlu0 %v2683, 120
        %v2745 = vpop.permute.xlu0 %2744
        %2746 = vrot.lane.b32.xlu0 %v2684, 120
        %v2747 = vpop.permute.xlu0 %2746
        %2748 = vrot.lane.b32.xlu0 %v2685, 120
        %v2749 = vpop.permute.xlu0 %2748
        %2750 = vrot.lane.b32.xlu0 %v2686, 120
        %v2751 = vpop.permute.xlu0 %2750
        %2752 = vrot.lane.b32.xlu0 %v2687, 120
        %v2753 = vpop.permute.xlu0 %2752
        %2754 = vrot.lane.b32.xlu0 %v2688, 120
        %v2755 = vpop.permute.xlu0 %2754
        %2756 = vrot.lane.b32.xlu0 %v2689, 120
        %v2757 = vpop.permute.xlu0 %2756
        %2758 = vrot.lane.b32.xlu0 %v2690, 120
        %v2759 = vpop.permute.xlu0 %2758
        %v2783 = vmax.f32 %v2668, %v2715
        %v2784 = vmax.f32 %v2669, %v2717
        %v2785 = vmax.f32 %v2670, %v2719
        %v2786 = vmax.f32 %v2671, %v2721
        %v2787 = vmax.f32 %v2672, %v2723
        %v2788 = vmax.f32 %v2673, %v2725
        %v2789 = vmax.f32 %v2674, %v2727
        %v2790 = vmax.f32 %v2675, %v2729
        %v2791 = vmax.f32 %v2676, %v2731
        %v2792 = vmax.f32 %v2677, %v2733
        %v2793 = vmax.f32 %v2678, %v2735
        %v2794 = vmax.f32 %v2679, %v2737
        %v2795 = vmax.f32 %v2680, %v2739
        %v2796 = vmax.f32 %v2681, %v2741
        %v2797 = vmax.f32 %v2682, %v2743
        %v2798 = vmax.f32 %v2683, %v2745
        %v2799 = vmax.f32 %v2684, %v2747
        %v2800 = vmax.f32 %v2685, %v2749
        %v2801 = vmax.f32 %v2686, %v2751
        %v2802 = vmax.f32 %v2687, %v2753
        %v2803 = vmax.f32 %v2688, %v2755
        %v2804 = vmax.f32 %v2689, %v2757
        %v2805 = vmax.f32 %v2690, %v2759
        %v2806 = vpack.c.bf16 %v2784, %v2783
        %v2807 = vpack.c.bf16 %v2786, %v2785
        %v2808 = vpack.c.bf16 %v2788, %v2787
        %v2809 = vpack.c.bf16 %v2790, %v2789
        %v2810 = vpack.c.bf16 %v2792, %v2791
        %v2811 = vpack.c.bf16 %v2794, %v2793
        %v2812 = vpack.c.bf16 %v2796, %v2795
        %v2813 = vpack.c.bf16 %v2798, %v2797
        %v2814 = vpack.c.bf16 %v2800, %v2799
        %v2815 = vpack.c.bf16 %v2802, %v2801
        %v2816 = vpack.c.bf16 %v2804, %v2803
        %v2817 = vld [vmem:[%s5] sm:$0xf]
        %v2818 = vld [vmem:[%s5 + $0x4] sm:$0xf]
        %v2819 = vld [vmem:[%s5 + $0x8] sm:$0xf]
        %v2820 = vld [vmem:[%s5 + $0xc] sm:$0xf]
        %v2821 = vld [vmem:[%s5 + $0x10] sm:$0xf]
        %v2822 = vld [vmem:[%s5 + $0x14] sm:$0xf]
        %v2823 = vld [vmem:[%s5 + $0x18] sm:$0xf]
        %s2824 = scalar_lea.vmem %s5, 28
        %v2825 = vld [vmem:[%s2824] sm:$0xf]
        %v2826 = vld [vmem:[%s2824 + $0x4] sm:$0xf]
        %v2827 = vld [vmem:[%s2824 + $0x8] sm:$0xf]
        %v2828 = vld [vmem:[%s2824 + $0xc] sm:$0xf]
        %v2829 = vld [vmem:[%s2824 + $0x10] sm:$0xf]
        %v2830 = vld [vmem:[%s2824 + $0x14] sm:$0xf]
        %v2831 = vld [vmem:[%s2824 + $0x18] sm:$0xf]
        %v2843 = vrot.slane %v2806, 2
        %v2844 = vrot.slane %v2807, 2
        %v2845 = vsel %vm1288, %v2843, %v2844
        %v2846 = vrot.slane %v2808, 2
        %v2847 = vsel %vm1288, %v2844, %v2846
        %v2848 = vrot.slane %v2809, 2
        %v2849 = vsel %vm1288, %v2846, %v2848
        %v2850 = vrot.slane %v2810, 2
        %v2851 = vsel %vm1288, %v2848, %v2850
        %v2852 = vrot.slane %v2811, 2
        %v2853 = vsel %vm1288, %v2850, %v2852
        %v2854 = vrot.slane %v2812, 2
        %v2855 = vsel %vm1288, %v2852, %v2854
        %v2856 = vrot.slane %v2813, 2
        %v2857 = vsel %vm1288, %v2854, %v2856
        %v2858 = vrot.slane %v2814, 2
        %v2859 = vsel %vm1288, %v2856, %v2858
        %v2860 = vrot.slane %v2815, 2
        %v2861 = vsel %vm1288, %v2858, %v2860
        %v2862 = vrot.slane %v2816, 2
        %v2863 = vsel %vm1288, %v2860, %v2862
        %v2871 = vunpack.c.l.b16 %v2825
        %v2872 = vunpack.c.l.b16 %v2826
        %v2873 = vunpack.c.l.b16 %v2827
        %v2874 = vunpack.c.l.b16 %v2828
        %v2875 = vunpack.c.l.b16 %v2829
        %v2876 = vunpack.c.l.b16 %v2830
        %v2877 = vunpack.c.l.b16 %v2831
        %v2878 = vpack.c.b16 %v2872, %v2871
        %v2879 = vpack.c.b16 %v2874, %v2873
        %v2880 = vpack.c.b16 %v2876, %v2875
        %v2881 = vpack.c.b16 %v2877, %v2877
        %vm2885 = vcmask 457728
        %v2887 = vsel %vm2885, %v2845, 0
        %v2890 = vsel %vm2885, %v2847, 0
        %v2893 = vsel %vm2885, %v2849, 0
        %v2896 = vsel %vm2885, %v2851, 0
        %v2899 = vsel %vm2885, %v2853, 0
        %v2902 = vsel %vm2885, %v2855, 0
        %v2905 = vsel %vm2885, %v2857, 0
        %v2908 = vsel %vm2885, %v2859, 0
        %v2911 = vsel %vm2885, %v2861, 0
        %v2914 = vsel %vm2885, %v2863, 0
        %v2917 = vsel %vm2885, %v2862, 0
        %v2920 = vsel %vm492, %v2881, 0
        %2922 = vmatprep.subr.bf16.mxu0 0
        %2923 = vmatpush1.bf16.msra.mxu0 %v2878
        %2924 = vmatprep.subr.bf16.mxu0 0
        %2925 = vmatpush1.bf16.msra.mxu0 %v2879
        %2926 = vmatprep.subr.bf16.mxu0 0
        %2927 = vmatpush1.bf16.msra.mxu0 %v2880
        %2928 = vmatprep.subr.bf16.mxu0 0
        %2929 = vmatpush1.bf16.msra.mxu0 %v2920
        %2930 = vmatprep.subr.bf16.mxu0 0
        %2931 = vmatpush1.bf16.msra.mxu0 0
        %2932 = vmatprep.subr.bf16.mxu0 0
        %2933 = vmatpush1.bf16.msra.mxu0 0
        %2934 = vmatprep.subr.bf16.mxu0 0
        %2935 = vmatpush1.bf16.msra.mxu0 0
        %2936 = vmatprep.subr.bf16.mxu0 0
        %2937 = vmatpush1.bf16.msra.mxu0 0
        %2938 = vmatprep.subr.bf16.mxu0 0
        %2939 = vmatpush1.bf16.msra.mxu0 0
        %2940 = vmatprep.subr.bf16.mxu0 0
        %2941 = vmatpush1.bf16.msra.mxu0 0
        %2942 = vmatprep.subr.bf16.mxu0 0
        %2943 = vmatpush1.bf16.msra.mxu0 0
        %2944 = vmatprep.subr.bf16.mxu0 0
        %2945 = vmatpush1.bf16.msra.mxu0 0
        %2946 = vmatprep.subr.bf16.mxu0 0
        %2947 = vmatpush1.bf16.msra.mxu0 0
        %2948 = vmatprep.subr.bf16.mxu0 0
        %2949 = vmatpush1.bf16.msra.mxu0 0
        %2950 = vmatprep.subr.bf16.mxu0 0
        %2951 = vmatpush1.bf16.msra.mxu0 0
        %2952 = vmatprep.subr.bf16.mxu0 0
        %2953 = vmatpush1.bf16.msra.mxu0 0
        %2954 = vmatprep.mubr.bf16.mxu0 0
        %2955 = vmatmul.mubr.bf16.gmra.mrb[0].mxu0 %v2887
        %v2956 = vpop.f32.mrb[0].mxu0
        %v2957 = vadd.f32 0.0, %v2956
        %v2958 = vpop.f32.mrb[0].mxu0
        %v2959 = vpop.f32.mrb[0].mxu0
        %v2960 = vadd.f32 0.0, %v2959
        %v2961 = vpop.f32.mrb[0].mxu0
        %2962 = vmatprep.mubr.bf16.mxu0 0
        %2963 = vmatmul.mubr.bf16.gmra.mrb[0].mxu0 %v2890
        %v2964 = vpop.f32.mrb[0].mxu0
        %v2965 = vadd.f32 0.0, %v2964
        %v2966 = vpop.f32.mrb[0].mxu0
        %v2967 = vpop.f32.mrb[0].mxu0
        %v2968 = vadd.f32 0.0, %v2967
        %v2969 = vpop.f32.mrb[0].mxu0
        %2970 = vmatprep.mubr.bf16.mxu0 0
        %2971 = vmatmul.mubr.bf16.gmra.mrb[0].mxu0 %v2893
        %v2972 = vpop.f32.mrb[0].mxu0
        %v2973 = vadd.f32 0.0, %v2972
        %v2974 = vpop.f32.mrb[0].mxu0
        %v2975 = vpop.f32.mrb[0].mxu0
        %v2976 = vadd.f32 0.0, %v2975
        %v2977 = vpop.f32.mrb[0].mxu0
        %2978 = vmatprep.mubr.bf16.mxu0 0
        %2979 = vmatmul.mubr.bf16.gmra.mrb[0].mxu0 %v2896
        %v2980 = vpop.f32.mrb[0].mxu0
        %v2981 = vadd.f32 0.0, %v2980
        %v2982 = vpop.f32.mrb[0].mxu0
        %v2983 = vpop.f32.mrb[0].mxu0
        %v2984 = vadd.f32 0.0, %v2983
        %v2985 = vpop.f32.mrb[0].mxu0
        %2986 = vmatprep.mubr.bf16.mxu0 0
        %2987 = vmatmul.mubr.bf16.gmra.mrb[0].mxu0 %v2899
        %v2988 = vpop.f32.mrb[0].mxu0
        %v2989 = vadd.f32 0.0, %v2988
        %v2990 = vpop.f32.mrb[0].mxu0
        %v2991 = vpop.f32.mrb[0].mxu0
        %v2992 = vadd.f32 0.0, %v2991
        %v2993 = vpop.f32.mrb[0].mxu0
        %2994 = vmatprep.mubr.bf16.mxu0 0
        %2995 = vmatmul.mubr.bf16.gmra.mrb[0].mxu0 %v2902
        %v2996 = vpop.f32.mrb[0].mxu0
        %v2997 = vadd.f32 0.0, %v2996
        %v2998 = vpop.f32.mrb[0].mxu0
        %v2999 = vpop.f32.mrb[0].mxu0
        %v3000 = vadd.f32 0.0, %v2999
        %v3001 = vpop.f32.mrb[0].mxu0
        %3002 = vmatprep.mubr.bf16.mxu0 0
        %3003 = vmatmul.mubr.bf16.gmra.mrb[0].mxu0 %v2905
        %v3004 = vpop.f32.mrb[0].mxu0
        %v3005 = vadd.f32 0.0, %v3004
        %v3006 = vpop.f32.mrb[0].mxu0
        %v3007 = vpop.f32.mrb[0].mxu0
        %v3008 = vadd.f32 0.0, %v3007
        %v3009 = vpop.f32.mrb[0].mxu0
        %3010 = vmatprep.mubr.bf16.mxu0 0
        %3011 = vmatmul.mubr.bf16.gmra.mrb[0].mxu0 %v2908
        %v3012 = vpop.f32.mrb[0].mxu0
        %v3013 = vadd.f32 0.0, %v3012
        %v3014 = vpop.f32.mrb[0].mxu0
        %v3015 = vpop.f32.mrb[0].mxu0
        %v3016 = vadd.f32 0.0, %v3015
        %v3017 = vpop.f32.mrb[0].mxu0
        %3018 = vmatprep.mubr.bf16.mxu0 0
        %3019 = vmatmul.mubr.bf16.gmra.mrb[0].mxu0 %v2911
        %v3020 = vpop.f32.mrb[0].mxu0
        %v3021 = vadd.f32 0.0, %v3020
        %v3022 = vpop.f32.mrb[0].mxu0
        %v3023 = vpop.f32.mrb[0].mxu0
        %v3024 = vadd.f32 0.0, %v3023
        %v3025 = vpop.f32.mrb[0].mxu0
        %3026 = vmatprep.mubr.bf16.mxu0 0
        %3027 = vmatmul.mubr.bf16.gmra.mrb[0].mxu0 %v2914
        %v3028 = vpop.f32.mrb[0].mxu0
        %v3029 = vadd.f32 0.0, %v3028
        %v3030 = vpop.f32.mrb[0].mxu0
        %v3031 = vpop.f32.mrb[0].mxu0
        %v3032 = vadd.f32 0.0, %v3031
        %v3033 = vpop.f32.mrb[0].mxu0
        %3034 = vmatprep.mubr.bf16.mxu0 0
        %3035 = vmatmul.mubr.bf16.gmra.mrb[0].mxu0 %v2917
        %v3036 = vpop.f32.mrb[0].mxu0
        %v3037 = vadd.f32 0.0, %v3036
        %v3038 = vpop.f32.mrb[0].mxu0
        %v3039 = vpop.f32.mrb[0].mxu0
        %v3040 = vadd.f32 0.0, %v3039
        %v3041 = vpop.f32.mrb[0].mxu0
        %3042 = vdwg.mxu0
        %v3050 = vunpack.c.l.b16 %v2817
        %v3051 = vunpack.c.l.b16 %v2818
        %v3052 = vunpack.c.l.b16 %v2819
        %v3053 = vunpack.c.l.b16 %v2820
        %v3054 = vunpack.c.l.b16 %v2821
        %v3055 = vunpack.c.l.b16 %v2822
        %v3056 = vunpack.c.l.b16 %v2823
        %v3057 = vpack.c.b16 %v3051, %v3050
        %v3058 = vpack.c.b16 %v3053, %v3052
        %v3059 = vpack.c.b16 %v3055, %v3054
        %v3060 = vpack.c.b16 %v3056, %v3056
        %v3065 = vsel %vm2885, %v2806, 0
        %v3068 = vsel %vm2885, %v2807, 0
        %v3071 = vsel %vm2885, %v2808, 0
        %v3074 = vsel %vm2885, %v2809, 0
        %v3077 = vsel %vm2885, %v2810, 0
        %v3080 = vsel %vm2885, %v2811, 0
        %v3083 = vsel %vm2885, %v2812, 0
        %v3086 = vsel %vm2885, %v2813, 0
        %v3089 = vsel %vm2885, %v2814, 0
        %v3092 = vsel %vm2885, %v2815, 0
        %v3095 = vsel %vm2885, %v2816, 0
        %v3098 = vsel %vm492, %v3060, 0
        %3100 = vmatprep.subr.bf16.mxu0 0
        %3101 = vmatpush1.bf16.msra.mxu0 %v3057
        %3102 = vmatprep.subr.bf16.mxu0 0
        %3103 = vmatpush1.bf16.msra.mxu0 %v3058
        %3104 = vmatprep.subr.bf16.mxu0 0
        %3105 = vmatpush1.bf16.msra.mxu0 %v3059
        %3106 = vmatprep.subr.bf16.mxu0 0
        %3107 = vmatpush1.bf16.msra.mxu0 %v3098
        %3108 = vmatprep.subr.bf16.mxu0 0
        %3109 = vmatpush1.bf16.msra.mxu0 0
        %3110 = vmatprep.subr.bf16.mxu0 0
        %3111 = vmatpush1.bf16.msra.mxu0 0
        %3112 = vmatprep.subr.bf16.mxu0 0
        %3113 = vmatpush1.bf16.msra.mxu0 0
        %3114 = vmatprep.subr.bf16.mxu0 0
        %3115 = vmatpush1.bf16.msra.mxu0 0
        %3116 = vmatprep.subr.bf16.mxu0 0
        %3117 = vmatpush1.bf16.msra.mxu0 0
        %3118 = vmatprep.subr.bf16.mxu0 0
        %3119 = vmatpush1.bf16.msra.mxu0 0
        %3120 = vmatprep.subr.bf16.mxu0 0
        %3121 = vmatpush1.bf16.msra.mxu0 0
        %3122 = vmatprep.subr.bf16.mxu0 0
        %3123 = vmatpush1.bf16.msra.mxu0 0
        %3124 = vmatprep.subr.bf16.mxu0 0
        %3125 = vmatpush1.bf16.msra.mxu0 0
        %3126 = vmatprep.subr.bf16.mxu0 0
        %3127 = vmatpush1.bf16.msra.mxu0 0
        %3128 = vmatprep.subr.bf16.mxu0 0
        %3129 = vmatpush1.bf16.msra.mxu0 0
        %3130 = vmatprep.subr.bf16.mxu0 0
        %3131 = vmatpush1.bf16.msra.mxu0 0
        %3132 = vmatprep.mubr.bf16.mxu0 0
        %3133 = vmatmul.mubr.bf16.gmra.mrb[0].mxu0 %v3065
        %v3134 = vpop.f32.mrb[0].mxu0
        %v3135 = vadd.f32 %v2957, %v3134
        %v3136 = vpop.f32.mrb[0].mxu0
        %v3137 = vpop.f32.mrb[0].mxu0
        %v3138 = vadd.f32 %v2960, %v3137
        %v3139 = vpop.f32.mrb[0].mxu0
        %3140 = vmatprep.mubr.bf16.mxu0 0
        %3141 = vmatmul.mubr.bf16.gmra.mrb[0].mxu0 %v3068
        %v3142 = vpop.f32.mrb[0].mxu0
        %v3143 = vadd.f32 %v2965, %v3142
        %v3144 = vpop.f32.mrb[0].mxu0
        %v3145 = vpop.f32.mrb[0].mxu0
        %v3146 = vadd.f32 %v2968, %v3145
        %v3147 = vpop.f32.mrb[0].mxu0
        %3148 = vmatprep.mubr.bf16.mxu0 0
        %3149 = vmatmul.mubr.bf16.gmra.mrb[0].mxu0 %v3071
        %v3150 = vpop.f32.mrb[0].mxu0
        %v3151 = vadd.f32 %v2973, %v3150
        %v3152 = vpop.f32.mrb[0].mxu0
        %v3153 = vpop.f32.mrb[0].mxu0
        %v3154 = vadd.f32 %v2976, %v3153
        %v3155 = vpop.f32.mrb[0].mxu0
        %3156 = vmatprep.mubr.bf16.mxu0 0
        %3157 = vmatmul.mubr.bf16.gmra.mrb[0].mxu0 %v3074
        %v3158 = vpop.f32.mrb[0].mxu0
        %v3159 = vadd.f32 %v2981, %v3158
        %v3160 = vpop.f32.mrb[0].mxu0
        %v3161 = vpop.f32.mrb[0].mxu0
        %v3162 = vadd.f32 %v2984, %v3161
        %v3163 = vpop.f32.mrb[0].mxu0
        %3164 = vmatprep.mubr.bf16.mxu0 0
        %3165 = vmatmul.mubr.bf16.gmra.mrb[0].mxu0 %v3077
        %v3166 = vpop.f32.mrb[0].mxu0
        %v3167 = vadd.f32 %v2989, %v3166
        %v3168 = vpop.f32.mrb[0].mxu0
        %v3169 = vpop.f32.mrb[0].mxu0
        %v3170 = vadd.f32 %v2992, %v3169
        %v3171 = vpop.f32.mrb[0].mxu0
        %3172 = vmatprep.mubr.bf16.mxu0 0
        %3173 = vmatmul.mubr.bf16.gmra.mrb[0].mxu0 %v3080
        %v3174 = vpop.f32.mrb[0].mxu0
        %v3175 = vadd.f32 %v2997, %v3174
        %v3176 = vpop.f32.mrb[0].mxu0
        %v3177 = vpop.f32.mrb[0].mxu0
        %v3178 = vadd.f32 %v3000, %v3177
        %v3179 = vpop.f32.mrb[0].mxu0
        %3180 = vmatprep.mubr.bf16.mxu0 0
        %3181 = vmatmul.mubr.bf16.gmra.mrb[0].mxu0 %v3083
        %v3182 = vpop.f32.mrb[0].mxu0
        %v3183 = vadd.f32 %v3005, %v3182
        %v3184 = vpop.f32.mrb[0].mxu0
        %v3185 = vpop.f32.mrb[0].mxu0
        %v3186 = vadd.f32 %v3008, %v3185
        %v3187 = vpop.f32.mrb[0].mxu0
        %3188 = vmatprep.mubr.bf16.mxu0 0
        %3189 = vmatmul.mubr.bf16.gmra.mrb[0].mxu0 %v3086
        %v3190 = vpop.f32.mrb[0].mxu0
        %v3191 = vadd.f32 %v3013, %v3190
        %v3192 = vpop.f32.mrb[0].mxu0
        %v3193 = vpop.f32.mrb[0].mxu0
        %v3194 = vadd.f32 %v3016, %v3193
        %v3195 = vpop.f32.mrb[0].mxu0
        %3196 = vmatprep.mubr.bf16.mxu0 0
        %3197 = vmatmul.mubr.bf16.gmra.mrb[0].mxu0 %v3089
        %v3198 = vpop.f32.mrb[0].mxu0
        %v3199 = vadd.f32 %v3021, %v3198
        %v3200 = vpop.f32.mrb[0].mxu0
        %v3201 = vpop.f32.mrb[0].mxu0
        %v3202 = vadd.f32 %v3024, %v3201
        %v3203 = vpop.f32.mrb[0].mxu0
        %3204 = vmatprep.mubr.bf16.mxu0 0
        %3205 = vmatmul.mubr.bf16.gmra.mrb[0].mxu0 %v3092
        %v3206 = vpop.f32.mrb[0].mxu0
        %v3207 = vadd.f32 %v3029, %v3206
        %v3208 = vpop.f32.mrb[0].mxu0
        %v3209 = vpop.f32.mrb[0].mxu0
        %v3210 = vadd.f32 %v3032, %v3209
        %v3211 = vpop.f32.mrb[0].mxu0
        %3212 = vmatprep.mubr.bf16.mxu0 0
        %3213 = vmatmul.mubr.bf16.gmra.mrb[0].mxu0 %v3095
        %v3214 = vpop.f32.mrb[0].mxu0
        %v3215 = vadd.f32 %v3037, %v3214
        %v3216 = vpop.f32.mrb[0].mxu0
        %v3217 = vpop.f32.mrb[0].mxu0
        %v3218 = vadd.f32 %v3040, %v3217
        %v3219 = vpop.f32.mrb[0].mxu0
        %3220 = vdwg.mxu0
        %v3221 = vpack.c.bf16 %v2785, %v2784
        %v3222 = vpack.c.bf16 %v2787, %v2786
        %v3223 = vpack.c.bf16 %v2789, %v2788
        %v3224 = vpack.c.bf16 %v2791, %v2790
        %v3225 = vpack.c.bf16 %v2793, %v2792
        %v3226 = vpack.c.bf16 %v2795, %v2794
        %v3227 = vpack.c.bf16 %v2797, %v2796
        %v3228 = vpack.c.bf16 %v2799, %v2798
        %v3229 = vpack.c.bf16 %v2801, %v2800
        %v3230 = vpack.c.bf16 %v2803, %v2802
        %v3231 = vpack.c.bf16 %v2805, %v2804
        %s3232 = scalar_lea.vmem %s5, 56
        %v3233 = vld [vmem:[%s3232] sm:$0xf]
        %v3234 = vld [vmem:[%s3232 + $0x4] sm:$0xf]
        %v3235 = vld [vmem:[%s3232 + $0x8] sm:$0xf]
        %v3236 = vld [vmem:[%s3232 + $0xc] sm:$0xf]
        %v3237 = vld [vmem:[%s3232 + $0x10] sm:$0xf]
        %v3238 = vld [vmem:[%s3232 + $0x14] sm:$0xf]
        %v3239 = vld [vmem:[%s3232 + $0x18] sm:$0xf]
        %v3247 = vunpack.c.l.b16 %v3233
        %v3248 = vunpack.c.l.b16 %v3234
        %v3249 = vunpack.c.l.b16 %v3235
        %v3250 = vunpack.c.l.b16 %v3236
        %v3251 = vunpack.c.l.b16 %v3237
        %v3252 = vunpack.c.l.b16 %v3238
        %v3253 = vunpack.c.l.b16 %v3239
        %v3254 = vpack.c.b16 %v3248, %v3247
        %v3255 = vpack.c.b16 %v3250, %v3249
        %v3256 = vpack.c.b16 %v3252, %v3251
        %v3257 = vpack.c.b16 %v3253, %v3253
        %v3262 = vsel %vm2885, %v3221, 0
        %v3265 = vsel %vm2885, %v3222, 0
        %v3268 = vsel %vm2885, %v3223, 0
        %v3271 = vsel %vm2885, %v3224, 0
        %v3274 = vsel %vm2885, %v3225, 0
        %v3277 = vsel %vm2885, %v3226, 0
        %v3280 = vsel %vm2885, %v3227, 0
        %v3283 = vsel %vm2885, %v3228, 0
        %v3286 = vsel %vm2885, %v3229, 0
        %v3289 = vsel %vm2885, %v3230, 0
        %v3292 = vsel %vm2885, %v3231, 0
        %v3295 = vsel %vm492, %v3257, 0
        %3297 = vmatprep.subr.bf16.mxu0 0
        %3298 = vmatpush1.bf16.msra.mxu0 %v3254
        %3299 = vmatprep.subr.bf16.mxu0 0
        %3300 = vmatpush1.bf16.msra.mxu0 %v3255
        %3301 = vmatprep.subr.bf16.mxu0 0
        %3302 = vmatpush1.bf16.msra.mxu0 %v3256
        %3303 = vmatprep.subr.bf16.mxu0 0
        %3304 = vmatpush1.bf16.msra.mxu0 %v3295
        %3305 = vmatprep.subr.bf16.mxu0 0
        %3306 = vmatpush1.bf16.msra.mxu0 0
        %3307 = vmatprep.subr.bf16.mxu0 0
        %3308 = vmatpush1.bf16.msra.mxu0 0
        %3309 = vmatprep.subr.bf16.mxu0 0
        %3310 = vmatpush1.bf16.msra.mxu0 0
        %3311 = vmatprep.subr.bf16.mxu0 0
        %3312 = vmatpush1.bf16.msra.mxu0 0
        %3313 = vmatprep.subr.bf16.mxu0 0
        %3314 = vmatpush1.bf16.msra.mxu0 0
        %3315 = vmatprep.subr.bf16.mxu0 0
        %3316 = vmatpush1.bf16.msra.mxu0 0
        %3317 = vmatprep.subr.bf16.mxu0 0
        %3318 = vmatpush1.bf16.msra.mxu0 0
        %3319 = vmatprep.subr.bf16.mxu0 0
        %3320 = vmatpush1.bf16.msra.mxu0 0
        %3321 = vmatprep.subr.bf16.mxu0 0
        %3322 = vmatpush1.bf16.msra.mxu0 0
        %3323 = vmatprep.subr.bf16.mxu0 0
        %3324 = vmatpush1.bf16.msra.mxu0 0
        %3325 = vmatprep.subr.bf16.mxu0 0
        %3326 = vmatpush1.bf16.msra.mxu0 0
        %3327 = vmatprep.subr.bf16.mxu0 0
        %3328 = vmatpush1.bf16.msra.mxu0 0
        %3329 = vmatprep.mubr.bf16.mxu0 0
        %3330 = vmatmul.mubr.bf16.gmra.mrb[0].mxu0 %v3262
        %v3331 = vpop.f32.mrb[0].mxu0
        %v3332 = vadd.f32 0.0, %v3331
        %v3333 = vpop.f32.mrb[0].mxu0
        %v3334 = vpop.f32.mrb[0].mxu0
        %v3335 = vadd.f32 0.0, %v3334
        %v3336 = vpop.f32.mrb[0].mxu0
        %3337 = vmatprep.mubr.bf16.mxu0 0
        %3338 = vmatmul.mubr.bf16.gmra.mrb[0].mxu0 %v3265
        %v3339 = vpop.f32.mrb[0].mxu0
        %v3340 = vadd.f32 0.0, %v3339
        %v3341 = vpop.f32.mrb[0].mxu0
        %v3342 = vpop.f32.mrb[0].mxu0
        %v3343 = vadd.f32 0.0, %v3342
        %v3344 = vpop.f32.mrb[0].mxu0
        %3345 = vmatprep.mubr.bf16.mxu0 0
        %3346 = vmatmul.mubr.bf16.gmra.mrb[0].mxu0 %v3268
        %v3347 = vpop.f32.mrb[0].mxu0
        %v3348 = vadd.f32 0.0, %v3347
        %v3349 = vpop.f32.mrb[0].mxu0
        %v3350 = vpop.f32.mrb[0].mxu0
        %v3351 = vadd.f32 0.0, %v3350
        %v3352 = vpop.f32.mrb[0].mxu0
        %3353 = vmatprep.mubr.bf16.mxu0 0
        %3354 = vmatmul.mubr.bf16.gmra.mrb[0].mxu0 %v3271
        %v3355 = vpop.f32.mrb[0].mxu0
        %v3356 = vadd.f32 0.0, %v3355
        %v3357 = vpop.f32.mrb[0].mxu0
        %v3358 = vpop.f32.mrb[0].mxu0
        %v3359 = vadd.f32 0.0, %v3358
        %v3360 = vpop.f32.mrb[0].mxu0
        %3361 = vmatprep.mubr.bf16.mxu0 0
        %3362 = vmatmul.mubr.bf16.gmra.mrb[0].mxu0 %v3274
        %v3363 = vpop.f32.mrb[0].mxu0
        %v3364 = vadd.f32 0.0, %v3363
        %v3365 = vpop.f32.mrb[0].mxu0
        %v3366 = vpop.f32.mrb[0].mxu0
        %v3367 = vadd.f32 0.0, %v3366
        %v3368 = vpop.f32.mrb[0].mxu0
        %3369 = vmatprep.mubr.bf16.mxu0 0
        %3370 = vmatmul.mubr.bf16.gmra.mrb[0].mxu0 %v3277
        %v3371 = vpop.f32.mrb[0].mxu0
        %v3372 = vadd.f32 0.0, %v3371
        %v3373 = vpop.f32.mrb[0].mxu0
        %v3374 = vpop.f32.mrb[0].mxu0
        %v3375 = vadd.f32 0.0, %v3374
        %v3376 = vpop.f32.mrb[0].mxu0
        %3377 = vmatprep.mubr.bf16.mxu0 0
        %3378 = vmatmul.mubr.bf16.gmra.mrb[0].mxu0 %v3280
        %v3379 = vpop.f32.mrb[0].mxu0
        %v3380 = vadd.f32 0.0, %v3379
        %v3381 = vpop.f32.mrb[0].mxu0
        %v3382 = vpop.f32.mrb[0].mxu0
        %v3383 = vadd.f32 0.0, %v3382
        %v3384 = vpop.f32.mrb[0].mxu0
        %3385 = vmatprep.mubr.bf16.mxu0 0
        %3386 = vmatmul.mubr.bf16.gmra.mrb[0].mxu0 %v3283
        %v3387 = vpop.f32.mrb[0].mxu0
        %v3388 = vadd.f32 0.0, %v3387
        %v3389 = vpop.f32.mrb[0].mxu0
        %v3390 = vpop.f32.mrb[0].mxu0
        %v3391 = vadd.f32 0.0, %v3390
        %v3392 = vpop.f32.mrb[0].mxu0
        %3393 = vmatprep.mubr.bf16.mxu0 0
        %3394 = vmatmul.mubr.bf16.gmra.mrb[0].mxu0 %v3286
        %v3395 = vpop.f32.mrb[0].mxu0
        %v3396 = vadd.f32 0.0, %v3395
        %v3397 = vpop.f32.mrb[0].mxu0
        %v3398 = vpop.f32.mrb[0].mxu0
        %v3399 = vadd.f32 0.0, %v3398
        %v3400 = vpop.f32.mrb[0].mxu0
        %3401 = vmatprep.mubr.bf16.mxu0 0
        %3402 = vmatmul.mubr.bf16.gmra.mrb[0].mxu0 %v3289
        %v3403 = vpop.f32.mrb[0].mxu0
        %v3404 = vadd.f32 0.0, %v3403
        %v3405 = vpop.f32.mrb[0].mxu0
        %v3406 = vpop.f32.mrb[0].mxu0
        %v3407 = vadd.f32 0.0, %v3406
        %v3408 = vpop.f32.mrb[0].mxu0
        %3409 = vmatprep.mubr.bf16.mxu0 0
        %3410 = vmatmul.mubr.bf16.gmra.mrb[0].mxu0 %v3292
        %v3411 = vpop.f32.mrb[0].mxu0
        %v3412 = vadd.f32 0.0, %v3411
        %v3413 = vpop.f32.mrb[0].mxu0
        %v3414 = vpop.f32.mrb[0].mxu0
        %v3415 = vadd.f32 0.0, %v3414
        %v3416 = vpop.f32.mrb[0].mxu0
        %3417 = vdwg.mxu0
        %v3418 = vadd.f32 %v3135, %v3332
        %v3419 = vadd.f32 %v3138, %v3335
        %v3420 = vadd.f32 %v3143, %v3340
        %v3421 = vadd.f32 %v3146, %v3343
        %v3422 = vadd.f32 %v3151, %v3348
        %v3423 = vadd.f32 %v3154, %v3351
        %v3424 = vadd.f32 %v3159, %v3356
        %v3425 = vadd.f32 %v3162, %v3359
        %v3426 = vadd.f32 %v3167, %v3364
        %v3427 = vadd.f32 %v3170, %v3367
        %v3428 = vadd.f32 %v3175, %v3372
        %v3429 = vadd.f32 %v3178, %v3375
        %v3430 = vadd.f32 %v3183, %v3380
        %v3431 = vadd.f32 %v3186, %v3383
        %v3432 = vadd.f32 %v3191, %v3388
        %v3433 = vadd.f32 %v3194, %v3391
        %v3434 = vadd.f32 %v3199, %v3396
        %v3435 = vadd.f32 %v3202, %v3399
        %v3436 = vadd.f32 %v3207, %v3404
        %v3437 = vadd.f32 %v3210, %v3407
        %v3438 = vadd.f32 %v3215, %v3412
        %v3439 = vadd.f32 %v3218, %v3415
        %s3440 = scalar_lea.vmem %s5, 84
        %v3441 = vld [vmem:[%s3440] sm:$0xf]
        %v3442 = vld [vmem:[%s3440 + $0x4] sm:$0xf]
        %v3443 = vld [vmem:[%s3440 + $0x8] sm:$0xf]
        %v3444 = vld [vmem:[%s3440 + $0xc] sm:$0xf]
        %v3445 = vld [vmem:[%s3440 + $0x10] sm:$0xf]
        %v3446 = vld [vmem:[%s3440 + $0x14] sm:$0xf]
        %v3447 = vld [vmem:[%s3440 + $0x18] sm:$0xf]
        %v3459 = vrot.slane %v3221, 2
        %v3460 = vrot.slane %v3222, 2
        %v3461 = vsel %vm1288, %v3459, %v3460
        %v3462 = vrot.slane %v3223, 2
        %v3463 = vsel %vm1288, %v3460, %v3462
        %v3464 = vrot.slane %v3224, 2
        %v3465 = vsel %vm1288, %v3462, %v3464
        %v3466 = vrot.slane %v3225, 2
        %v3467 = vsel %vm1288, %v3464, %v3466
        %v3468 = vrot.slane %v3226, 2
        %v3469 = vsel %vm1288, %v3466, %v3468
        %v3470 = vrot.slane %v3227, 2
        %v3471 = vsel %vm1288, %v3468, %v3470
        %v3472 = vrot.slane %v3228, 2
        %v3473 = vsel %vm1288, %v3470, %v3472
        %v3474 = vrot.slane %v3229, 2
        %v3475 = vsel %vm1288, %v3472, %v3474
        %v3476 = vrot.slane %v3230, 2
        %v3477 = vsel %vm1288, %v3474, %v3476
        %v3478 = vrot.slane %v3231, 2
        %v3479 = vsel %vm1288, %v3476, %v3478
        %v3487 = vunpack.c.l.b16 %v3441
        %v3488 = vunpack.c.l.b16 %v3442
        %v3489 = vunpack.c.l.b16 %v3443
        %v3490 = vunpack.c.l.b16 %v3444
        %v3491 = vunpack.c.l.b16 %v3445
        %v3492 = vunpack.c.l.b16 %v3446
        %v3493 = vunpack.c.l.b16 %v3447
        %v3494 = vpack.c.b16 %v3488, %v3487
        %v3495 = vpack.c.b16 %v3490, %v3489
        %v3496 = vpack.c.b16 %v3492, %v3491
        %v3497 = vpack.c.b16 %v3493, %v3493
        %v3502 = vsel %vm2885, %v3461, 0
        %v3505 = vsel %vm2885, %v3463, 0
        %v3508 = vsel %vm2885, %v3465, 0
        %v3511 = vsel %vm2885, %v3467, 0
        %v3514 = vsel %vm2885, %v3469, 0
        %v3517 = vsel %vm2885, %v3471, 0
        %v3520 = vsel %vm2885, %v3473, 0
        %v3523 = vsel %vm2885, %v3475, 0
        %v3526 = vsel %vm2885, %v3477, 0
        %v3529 = vsel %vm2885, %v3479, 0
        %v3532 = vsel %vm2885, %v3478, 0
        %v3535 = vsel %vm492, %v3497, 0
        %3537 = vmatprep.subr.bf16.mxu0 0
        %3538 = vmatpush1.bf16.msra.mxu0 %v3494
        %3539 = vmatprep.subr.bf16.mxu0 0
        %3540 = vmatpush1.bf16.msra.mxu0 %v3495
        %3541 = vmatprep.subr.bf16.mxu0 0
        %3542 = vmatpush1.bf16.msra.mxu0 %v3496
        %3543 = vmatprep.subr.bf16.mxu0 0
        %3544 = vmatpush1.bf16.msra.mxu0 %v3535
        %3545 = vmatprep.subr.bf16.mxu0 0
        %3546 = vmatpush1.bf16.msra.mxu0 0
        %3547 = vmatprep.subr.bf16.mxu0 0
        %3548 = vmatpush1.bf16.msra.mxu0 0
        %3549 = vmatprep.subr.bf16.mxu0 0
        %3550 = vmatpush1.bf16.msra.mxu0 0
        %3551 = vmatprep.subr.bf16.mxu0 0
        %3552 = vmatpush1.bf16.msra.mxu0 0
        %3553 = vmatprep.subr.bf16.mxu0 0
        %3554 = vmatpush1.bf16.msra.mxu0 0
        %3555 = vmatprep.subr.bf16.mxu0 0
        %3556 = vmatpush1.bf16.msra.mxu0 0
        %3557 = vmatprep.subr.bf16.mxu0 0
        %3558 = vmatpush1.bf16.msra.mxu0 0
        %3559 = vmatprep.subr.bf16.mxu0 0
        %3560 = vmatpush1.bf16.msra.mxu0 0
        %3561 = vmatprep.subr.bf16.mxu0 0
        %3562 = vmatpush1.bf16.msra.mxu0 0
        %3563 = vmatprep.subr.bf16.mxu0 0
        %3564 = vmatpush1.bf16.msra.mxu0 0
        %3565 = vmatprep.subr.bf16.mxu0 0
        %3566 = vmatpush1.bf16.msra.mxu0 0
        %3567 = vmatprep.subr.bf16.mxu0 0
        %3568 = vmatpush1.bf16.msra.mxu0 0
        %3569 = vmatprep.mubr.bf16.mxu0 0
        %3570 = vmatmul.mubr.bf16.gmra.mrb[0].mxu0 %v3502
        %v3571 = vpop.f32.mrb[0].mxu0
        %v3572 = vadd.f32 0.0, %v3571
        %v3573 = vpop.f32.mrb[0].mxu0
        %v3574 = vpop.f32.mrb[0].mxu0
        %v3575 = vadd.f32 0.0, %v3574
        %v3576 = vpop.f32.mrb[0].mxu0
        %3577 = vmatprep.mubr.bf16.mxu0 0
        %3578 = vmatmul.mubr.bf16.gmra.mrb[0].mxu0 %v3505
        %v3579 = vpop.f32.mrb[0].mxu0
        %v3580 = vadd.f32 0.0, %v3579
        %v3581 = vpop.f32.mrb[0].mxu0
        %v3582 = vpop.f32.mrb[0].mxu0
        %v3583 = vadd.f32 0.0, %v3582
        %v3584 = vpop.f32.mrb[0].mxu0
        %3585 = vmatprep.mubr.bf16.mxu0 0
        %3586 = vmatmul.mubr.bf16.gmra.mrb[0].mxu0 %v3508
        %v3587 = vpop.f32.mrb[0].mxu0
        %v3588 = vadd.f32 0.0, %v3587
        %v3589 = vpop.f32.mrb[0].mxu0
        %v3590 = vpop.f32.mrb[0].mxu0
        %v3591 = vadd.f32 0.0, %v3590
        %v3592 = vpop.f32.mrb[0].mxu0
        %3593 = vmatprep.mubr.bf16.mxu0 0
        %3594 = vmatmul.mubr.bf16.gmra.mrb[0].mxu0 %v3511
        %v3595 = vpop.f32.mrb[0].mxu0
        %v3596 = vadd.f32 0.0, %v3595
        %v3597 = vpop.f32.mrb[0].mxu0
        %v3598 = vpop.f32.mrb[0].mxu0
        %v3599 = vadd.f32 0.0, %v3598
        %v3600 = vpop.f32.mrb[0].mxu0
        %3601 = vmatprep.mubr.bf16.mxu0 0
        %3602 = vmatmul.mubr.bf16.gmra.mrb[0].mxu0 %v3514
        %v3603 = vpop.f32.mrb[0].mxu0
        %v3604 = vadd.f32 0.0, %v3603
        %v3605 = vpop.f32.mrb[0].mxu0
        %v3606 = vpop.f32.mrb[0].mxu0
        %v3607 = vadd.f32 0.0, %v3606
        %v3608 = vpop.f32.mrb[0].mxu0
        %3609 = vmatprep.mubr.bf16.mxu0 0
        %3610 = vmatmul.mubr.bf16.gmra.mrb[0].mxu0 %v3517
        %v3611 = vpop.f32.mrb[0].mxu0
        %v3612 = vadd.f32 0.0, %v3611
        %v3613 = vpop.f32.mrb[0].mxu0
        %v3614 = vpop.f32.mrb[0].mxu0
        %v3615 = vadd.f32 0.0, %v3614
        %v3616 = vpop.f32.mrb[0].mxu0
        %3617 = vmatprep.mubr.bf16.mxu0 0
        %3618 = vmatmul.mubr.bf16.gmra.mrb[0].mxu0 %v3520
        %v3619 = vpop.f32.mrb[0].mxu0
        %v3620 = vadd.f32 0.0, %v3619
        %v3621 = vpop.f32.mrb[0].mxu0
        %v3622 = vpop.f32.mrb[0].mxu0
        %v3623 = vadd.f32 0.0, %v3622
        %v3624 = vpop.f32.mrb[0].mxu0
        %3625 = vmatprep.mubr.bf16.mxu0 0
        %3626 = vmatmul.mubr.bf16.gmra.mrb[0].mxu0 %v3523
        %v3627 = vpop.f32.mrb[0].mxu0
        %v3628 = vadd.f32 0.0, %v3627
        %v3629 = vpop.f32.mrb[0].mxu0
        %v3630 = vpop.f32.mrb[0].mxu0
        %v3631 = vadd.f32 0.0, %v3630
        %v3632 = vpop.f32.mrb[0].mxu0
        %3633 = vmatprep.mubr.bf16.mxu0 0
        %3634 = vmatmul.mubr.bf16.gmra.mrb[0].mxu0 %v3526
        %v3635 = vpop.f32.mrb[0].mxu0
        %v3636 = vadd.f32 0.0, %v3635
        %v3637 = vpop.f32.mrb[0].mxu0
        %v3638 = vpop.f32.mrb[0].mxu0
        %v3639 = vadd.f32 0.0, %v3638
        %v3640 = vpop.f32.mrb[0].mxu0
        %3641 = vmatprep.mubr.bf16.mxu0 0
        %3642 = vmatmul.mubr.bf16.gmra.mrb[0].mxu0 %v3529
        %v3643 = vpop.f32.mrb[0].mxu0
        %v3644 = vadd.f32 0.0, %v3643
        %v3645 = vpop.f32.mrb[0].mxu0
        %v3646 = vpop.f32.mrb[0].mxu0
        %v3647 = vadd.f32 0.0, %v3646
        %v3648 = vpop.f32.mrb[0].mxu0
        %3649 = vmatprep.mubr.bf16.mxu0 0
        %3650 = vmatmul.mubr.bf16.gmra.mrb[0].mxu0 %v3532
        %v3651 = vpop.f32.mrb[0].mxu0
        %v3652 = vadd.f32 0.0, %v3651
        %v3653 = vpop.f32.mrb[0].mxu0
        %v3654 = vpop.f32.mrb[0].mxu0
        %v3655 = vadd.f32 0.0, %v3654
        %v3656 = vpop.f32.mrb[0].mxu0
        %3657 = vdwg.mxu0
        %v3658 = vadd.f32 %v3418, %v3572
        %v3659 = vadd.f32 %v3419, %v3575
        %v3660 = vadd.f32 %v3420, %v3580
        %v3661 = vadd.f32 %v3421, %v3583
        %v3662 = vadd.f32 %v3422, %v3588
        %v3663 = vadd.f32 %v3423, %v3591
        %v3664 = vadd.f32 %v3424, %v3596
        %v3665 = vadd.f32 %v3425, %v3599
        %v3666 = vadd.f32 %v3426, %v3604
        %v3667 = vadd.f32 %v3427, %v3607
        %v3668 = vadd.f32 %v3428, %v3612
        %v3669 = vadd.f32 %v3429, %v3615
        %v3670 = vadd.f32 %v3430, %v3620
        %v3671 = vadd.f32 %v3431, %v3623
        %v3672 = vadd.f32 %v3432, %v3628
        %v3673 = vadd.f32 %v3433, %v3631
        %v3674 = vadd.f32 %v3434, %v3636
        %v3675 = vadd.f32 %v3435, %v3639
        %v3676 = vadd.f32 %v3436, %v3644
        %v3677 = vadd.f32 %v3437, %v3647
        %v3678 = vadd.f32 %v3438, %v3652
        %v3679 = vadd.f32 %v3439, %v3655
        %v3680 = vld [vmem:[%s7] sm:$0xff]
        %v3681 = vld [vmem:[%s7 + $0x8] sm:$0xff]
        %v3682 = vld [vmem:[%s6] sm:$0x1]
        %v3684 = vlaneseq
        %v3685 = vshrl.u32 %v3684, 7
        %v3686 = vsub.s32 0, %v3685
        %v3687 = vrot.slane %v3682, %v3686
        %vm3689 = vcmask 334848
        %v3691 = vsel %vm3689, %v3681, 0
        %vm3693 = vcmask 1040384
        %v3695 = vsel %vm3693, %v3679, 0
        %3697 = vmatprep.subr.mxu0 0.0
        %3698 = vmatpush1.msra.mxu0 %v3658
        %3699 = vmatprep.subr.mxu0 0.0
        %3700 = vmatpush1.msra.mxu0 %v3659
        %3701 = vmatprep.subr.mxu0 0.0
        %3702 = vmatpush1.msra.mxu0 %v3660
        %3703 = vmatprep.subr.mxu0 0.0
        %3704 = vmatpush1.msra.mxu0 %v3661
        %3705 = vmatprep.subr.mxu0 0.0
        %3706 = vmatpush1.msra.mxu0 %v3662
        %3707 = vmatprep.subr.mxu0 0.0
        %3708 = vmatpush1.msra.mxu0 %v3663
        %3709 = vmatprep.subr.mxu0 0.0
        %3710 = vmatpush1.msra.mxu0 %v3664
        %3711 = vmatprep.subr.mxu0 0.0
        %3712 = vmatpush1.msra.mxu0 %v3665
        %3713 = vmatprep.subr.mxu0 0.0
        %3714 = vmatpush1.msra.mxu0 %v3666
        %3715 = vmatprep.subr.mxu0 0.0
        %3716 = vmatpush1.msra.mxu0 %v3667
        %3717 = vmatprep.subr.mxu0 0.0
        %3718 = vmatpush1.msra.mxu0 %v3668
        %3719 = vmatprep.subr.mxu0 0.0
        %3720 = vmatpush1.msra.mxu0 %v3669
        %3721 = vmatprep.subr.mxu0 0.0
        %3722 = vmatpush1.msra.mxu0 %v3670
        %3723 = vmatprep.subr.mxu0 0.0
        %3724 = vmatpush1.msra.mxu0 %v3671
        %3725 = vmatprep.subr.mxu0 0.0
        %3726 = vmatpush1.msra.mxu0 %v3672
        %3727 = vmatprep.subr.mxu0 0.0
        %3728 = vmatpush1.msra.mxu0 %v3673
        %3729 = vmatprep.subr.mxu0 0.0
        %3730 = vmatpush1.msra.mxu0 %v3674
        %3731 = vmatprep.subr.mxu0 0.0
        %3732 = vmatpush1.msra.mxu0 %v3675
        %3733 = vmatprep.subr.mxu0 0.0
        %3734 = vmatpush1.msra.mxu0 %v3676
        %3735 = vmatprep.subr.mxu0 0.0
        %3736 = vmatpush1.msra.mxu0 %v3677
        %3737 = vmatprep.subr.mxu0 0.0
        %3738 = vmatpush1.msra.mxu0 %v3678
        %3739 = vmatprep.subr.mxu0 0.0
        %3740 = vmatpush1.msra.mxu0 %v3695
        %3741 = vmatprep.subr.mxu0 0.0
        %3742 = vmatpush1.msra.mxu0 0.0
        %3743 = vmatprep.subr.mxu0 0.0
        %3744 = vmatpush1.msra.mxu0 0.0
        %3745 = vmatprep.subr.mxu0 0.0
        %3746 = vmatpush1.msra.mxu0 0.0
        %3747 = vmatprep.subr.mxu0 0.0
        %3748 = vmatpush1.msra.mxu0 0.0
        %3749 = vmatprep.subr.mxu0 0.0
        %3750 = vmatpush1.msra.mxu0 0.0
        %3751 = vmatprep.subr.mxu0 0.0
        %3752 = vmatpush1.msra.mxu0 0.0
        %3753 = vmatprep.subr.mxu0 0.0
        %3754 = vmatpush1.msra.mxu0 0.0
        %3755 = vmatprep.subr.mxu0 0.0
        %3756 = vmatpush1.msra.mxu0 0.0
        %3757 = vmatprep.subr.mxu0 0.0
        %3758 = vmatpush1.msra.mxu0 0.0
        %3759 = vmatprep.subr.mxu0 0.0
        %3760 = vmatpush1.msra.mxu0 0.0
        %3761 = vmatprep.mubr.f32.mxu0 %v3691
        %3762 = vmatmul.mubr.f32.gmra.mrb[0].mxu0 %v3680
        %v3763 = vpop.f32.mrb[0].mxu0
        %v3764 = vadd.f32 %v3687, %v3763
        %v3765 = vpop.f32.mrb[0].mxu0
        %3766 = vdwg.mxu0
        %vm3767 = vcmask 80896
        %3768 = vst.msk [vmem:[%s299] sm:$0xff] %vm3767, %v3764
        %s3769 = sand.u32 %s203, 1
        %s3770 = scalar_lea.sflag [#allocation3], %s3769
        %s3771 = sand.u32 %s203, 1
        %s3772 = smul.addr %s3771, 8
        %s3773 = scalar_lea.vmem [#allocation2], %s3772
        // Predicated region
        $region53: #{minimal_cnn_forward.1} parent=51 // pred_check
          %p3774 = pneg %p213
        $region54: #{minimal_cnn_forward.1} parent=51 // pred_check_branch
          %3776 = sbr.rel (%p3774) target = $region56
        $region55: #{minimal_cnn_forward.1} parent=51 // pred_region
          %s3778 = ssub.s32 128, 128
          %3779 = vsyncadd %s3770, %s3778
          %s3780 = smul.addr %s22, 128
          %s3781 = scalar_lea.hbm %s8, %s3780
          %s3783 = sshll.u32 %s3773, 4
          %s3784 = int_to_ptr.vmem [resolvable:$true] %s3783
          %3786 = dma.vmem_to_hbm [thread:$0]  %s3784, 128, %s3781, %s3770
        $region56: #{minimal_cnn_forward.1} parent=51 // pred_fallthru
          _
      $region52: #{minimal_cnn_forward.1} parent=5 // pred_fallthru
        _
      %p3787 = scmp.le.s32.totalorder 2, %s17
      // Predicated region
      $region57: #{minimal_cnn_forward.1} parent=5 // pred_check
        %p3788 = pneg %p3787
      $region58: #{minimal_cnn_forward.1} parent=5 // pred_check_branch
        %3790 = sbr.rel (%p3788) target = $region60
      $region59: #{minimal_cnn_forward.1} parent=5 // pred_region
        %s3791 = ssub.s32 %s17, 2
        // Predicated region
        $region61: #{minimal_cnn_forward.1} parent=59 // pred_check
          %p3792 = pneg %p219
        $region62: #{minimal_cnn_forward.1} parent=59 // pred_check_branch
          %3794 = sbr.rel (%p3792) target = $region64
        $region63: #{minimal_cnn_forward.1} parent=59 // pred_region
          %s3795 = sand.u32 %s204, 1
          %s3796 = scalar_lea.sflag [#allocation3], %s3795
          %s3797 = sand.u32 %s204, 1
          %s3798 = smul.addr %s3797, 8
          %s3799 = scalar_lea.vmem [#allocation2], %s3798
          %3800 = dma.done %s3796, 128
        $region64: #{minimal_cnn_forward.1} parent=59 // pred_fallthru
          _
      $region60: #{minimal_cnn_forward.1} parent=5 // pred_fallthru
        _
    $region6: #{minimal_cnn_forward.1} parent=1 // loop_footer
      %s21 = sadd.s32 1, %s17
    $region7: #{minimal_cnn_forward.1} parent=1 // loop_footer_branch
      %16 = sbr.rel target = $region3
    $region8: #{minimal_cnn_forward.1} parent=1 // loop_exit
      _
    %3801 = vsyncpa [#allocation3], 1
    %s3802 = scalar_lea.sflag [#allocation3], 1
    %3803 = vsyncpa %s3802, 1

</llo_original>
